<compile_context>
chip_gen: v7x
topology: tpu7x:2x2x1
jax: 0.10.0
libtpu: 0.0.40
codegen_flags: <defaults>
</compile_context>

<pallas_src>
import functools

import jax
import jax.numpy as jnp
from jax.experimental import pallas as pl
from jax.experimental.pallas import tpu as pltpu

BN_EPS = 1e-5


def _net_fwd_kernel(xt_ref, nbt_ref, vec_ref, w2_ref, wl_ref, bl_ref, out_ref,
                    *, hidden):
    """One block of B samples; lane axis carries the sample index.

    xt_ref : (L, B)    VMEM input features (transposed, padded)
    nbt_ref: (K, L, B) VMEM neighbor features
    vec_ref: (3, H)    SMEM rows = [w1_folded, b1_folded, b2_folded]
    w2_ref : (H, H)    SMEM BN-folded conv2 weight
    wl_ref : (Cpad, H*L) VMEM classifier weight (class-padded to lane width)
    bl_ref : (Cpad, 1)   VMEM classifier bias
    out_ref: (Cpad, B)   VMEM logits (lane-dense store)
    """
    xs = xt_ref[...]                                   # (L, B)
    s = jnp.sum(nbt_ref[...], axis=0)                  # (L, B) sum over K

    # ---- feature adjacency (un-normalized sgnroot form) --------------------
    # raw[a,b,n] = x[a,n]*s[b,n] + s[a,n]*x[b,n]
    raw = xs[:, None, :] * s[None, :, :] + s[:, None, :] * xs[None, :, :]
    root = jnp.sqrt(jnp.abs(raw))                      # (L, L, B)
    g = jnp.where(raw >= 0.0, root, -root)             # sign(raw)*sqrt(|raw|)

    # row_normalize (torch dim=1 == axis 0 here): |sgnroot| row-sum == root
    # row-sum, so reuse `root`. The normalization factor depends only on
    # (b, n) and is applied to the contraction results below instead of to
    # the full (L, L, B) adjacency.
    inv_den = pl.reciprocal(jnp.sum(root, axis=0) + 1e-7, approx=True)  # (L,B)

    # ---- layer 1: FeatBrd1d(1->H) with BN folded in, then Softsign ---------
    xa = inv_den * jnp.sum(xs[:, None, :] * g, axis=0)  # (L, B) == x @ fadj
    h = []
    for c in range(hidden):
        t = vec_ref[0, c] * xa + vec_ref[1, c]          # (L, B)
        h.append(t * pl.reciprocal(1.0 + jnp.abs(t), approx=True))

    # ---- layer 2: FeatBrd1d(H->H) with BN folded in, then Softsign ---------
    ha = [inv_den * jnp.sum(h[c][:, None, :] * g, axis=0) for c in range(hidden)]
    h2 = []
    for o in range(hidden):
        t = vec_ref[2, o] + w2_ref[o, 0] * ha[0]
        for c in range(1, hidden):
            t = t + w2_ref[o, c] * ha[c]
        h2.append(t * pl.reciprocal(1.0 + jnp.abs(t), approx=True))

    # ---- classifier: channel-major flatten + Linear (single MXU matmul) ----
    h2cat = jnp.concatenate(h2, axis=0)                 # (H*L, B), row = c*L+l
    out = jnp.dot(wl_ref[...], h2cat,
                  precision=jax.lax.Precision.HIGHEST,
                  preferred_element_type=jnp.float32)   # (Cpad, B)
    out_ref[...] = out + bl_ref[...]


def _net_forward(x, nb, params, *, block_n=128):
    """x: (N, 1, L), nb: (N, K, L) dense neighbor tensor -> logits (N, C)."""
    N, _, L = x.shape
    K = nb.shape[1]
    H = params['w1'].shape[0]
    C = params['bl'].shape[0]
    c_pad = ((C + 127) // 128) * 128
    n_pad = ((N + block_n - 1) // block_n) * block_n
    f32 = jnp.float32

    # ---- fold BatchNorm (running stats) into the conv weights --------------
    s1 = params['g1'] / jnp.sqrt(params['v1'] + BN_EPS)            # (H,)
    w1f = s1 * params['w1'][:, 0]
    b1f = s1 * (params['b1'] - params['m1']) + params['be1']
    s2 = params['g2'] / jnp.sqrt(params['v2'] + BN_EPS)
    w2f = (s2[:, None] * params['w2']).astype(f32)                 # (H, H)
    b2f = s2 * (params['b2'] - params['m2']) + params['be2']
    vecs = jnp.stack([w1f, b1f, b2f], axis=0).astype(f32)          # (3, H)

    # ---- classifier: torch Linear weight (C, H*L) is already channel-major;
    #      pad the class dim to the lane width for a dense output store. -----
    wl_pad = jnp.zeros((c_pad, H * L), f32).at[:C].set(params['wl'])
    bl_pad = jnp.zeros((c_pad, 1), f32).at[:C, 0].set(params['bl'])

    # ---- sample-last layout, padded batch -----------------------------------
    xt = jnp.zeros((L, n_pad), f32).at[:, :N].set(x[:, 0, :].T)
    nbt = jnp.zeros((K, L, n_pad), f32).at[:, :, :N].set(
        jnp.transpose(nb, (1, 2, 0)))

    kernel = functools.partial(_net_fwd_kernel, hidden=H)

    out_t = pl.pallas_call(
        kernel,
        out_shape=jax.ShapeDtypeStruct((c_pad, n_pad), f32),
        grid_spec=pltpu.PrefetchScalarGridSpec(
            num_scalar_prefetch=0,
            grid=(n_pad // block_n,),
            in_specs=[
                pl.BlockSpec((L, block_n), lambda i: (0, i)),         # xt
                pl.BlockSpec((K, L, block_n), lambda i: (0, 0, i)),   # nbt
                pl.BlockSpec(memory_space=pltpu.MemorySpace.SMEM),    # vecs
                pl.BlockSpec(memory_space=pltpu.MemorySpace.SMEM),    # w2f
                pl.BlockSpec((c_pad, H * L), lambda i: (0, 0)),       # wl_pad
                pl.BlockSpec((c_pad, 1), lambda i: (0, 0)),           # bl_pad
            ],
            out_specs=pl.BlockSpec((c_pad, block_n), lambda i: (0, i)),
        ),
        compiler_params=pltpu.CompilerParams(
            dimension_semantics=("parallel",)),
    )(xt, nbt, vecs, w2f, wl_pad, bl_pad)

    return out_t[:C, :N].T                                           # (N, C)


net_forward = jax.jit(_net_forward, static_argnames=("block_n",))


def net_forward_ref(x, nb, p):
    """Pure-JAX reference mirroring the PyTorch forward (f32, exact divides)."""
    HI = jax.lax.Precision.HIGHEST
    xs = x[:, 0, :]                                   # (N, L)
    s = nb.sum(axis=1)                                # (N, L)
    fadj = xs[:, :, None] * s[:, None, :]             # (N, L, L)
    fadj = fadj + jnp.swapaxes(fadj, 1, 2)
    fadj = jnp.sign(fadj) * jnp.sqrt(jnp.abs(fadj))
    fadj = fadj / (jnp.abs(fadj).sum(axis=1, keepdims=True) + 1e-7)
    fadj = jnp.where(jnp.isnan(fadj), 0.0, fadj)

    def bn(h, g, be, m, v):
        return ((h - m[None, :, None]) / jnp.sqrt(v[None, :, None] + BN_EPS)
                * g[None, :, None] + be[None, :, None])

    xa = jnp.einsum('nl,nlk->nk', xs, fadj, precision=HI)                 # (N, L)
    h = p['w1'][None, :, 0, None] * xa[:, None, :] + p['b1'][None, :, None]
    h = bn(h, p['g1'], p['be1'], p['m1'], p['v1'])
    h = h / (1.0 + jnp.abs(h))
    ha = jnp.einsum('nhl,nlk->nhk', h, fadj, precision=HI)
    h2 = jnp.einsum('oh,nhl->nol', p['w2'], ha, precision=HI) + p['b2'][None, :, None]
    h2 = bn(h2, p['g2'], p['be2'], p['m2'], p['v2'])
    h2 = h2 / (1.0 + jnp.abs(h2))
    flat = h2.reshape(h2.shape[0], -1)                                    # (N, H*L)
    return jnp.dot(flat, p['wl'].T, precision=HI) + p['bl'][None, :]


if __name__ == "__main__":
    # batch, neighbors-per-node, feat_len, hidden, num_class
    N, K, L, H, C = 200, 3, 16, 2, 7
    key = jax.random.PRNGKey(0)
    ks = jax.random.split(key, 16)

    x = jax.random.normal(ks[0], (N, 1, L), jnp.float32)
    nb = jax.random.normal(ks[1], (N, K, L), jnp.float32)

    params = {
        'w1':  0.5 * jax.random.normal(ks[2], (H, 1), jnp.float32),   # conv1 (out,in=1)
        'b1':  0.1 * jax.random.normal(ks[3], (H,), jnp.float32),
        'g1':  1.0 + 0.1 * jax.random.normal(ks[4], (H,), jnp.float32),
        'be1': 0.1 * jax.random.normal(ks[5], (H,), jnp.float32),
        'm1':  0.1 * jax.random.normal(ks[6], (H,), jnp.float32),
        'v1':  jax.random.uniform(ks[7], (H,), jnp.float32, 0.5, 1.5),
        'w2':  0.5 * jax.random.normal(ks[8], (H, H), jnp.float32),
        'b2':  0.1 * jax.random.normal(ks[9], (H,), jnp.float32),
        'g2':  1.0 + 0.1 * jax.random.normal(ks[10], (H,), jnp.float32),
        'be2': 0.1 * jax.random.normal(ks[11], (H,), jnp.float32),
        'm2':  0.1 * jax.random.normal(ks[12], (H,), jnp.float32),
        'v2':  jax.random.uniform(ks[13], (H,), jnp.float32, 0.5, 1.5),
        'wl':  0.2 * jax.random.normal(ks[14], (C, H * L), jnp.float32),  # torch Linear weight
        'bl':  0.1 * jax.random.normal(ks[15], (C,), jnp.float32),
    }

    out = jax.block_until_ready(net_forward(x, nb, params))
    ref = net_forward_ref(x, nb, params)

    assert out.shape == (N, C)
    err = float(jnp.max(jnp.abs(out - ref)))
    # Tolerance covers the EUP approximate reciprocals and BN folding.
    assert err < 2e-3, f"max abs error {err}"
    print("KERNEL_OK")
</pallas_src>

<mosaic_0001>
module attributes {stable_mosaic.version = 11 : i64} {
  func.func @_net_fwd_kernel(%arg0: i32, %arg1: memref<16x128xf32, #tpu.memory_space<vmem>>, %arg2: memref<3x16x128xf32, #tpu.memory_space<vmem>>, %arg3: memref<3x2xf32, #tpu.memory_space<smem>>, %arg4: memref<2x2xf32, #tpu.memory_space<smem>>, %arg5: memref<128x32xf32, #tpu.memory_space<vmem>>, %arg6: memref<128x1xf32, #tpu.memory_space<vmem>>, %arg7: memref<128x128xf32, #tpu.memory_space<vmem>>) attributes {dimension_semantics = [#tpu.dimension_semantics<parallel>], iteration_bounds = array<i64: 2>, scalar_prefetch = 0 : i64, scratch_operands = 0 : i64, tpu.core_type = #tpu.core_type<tc>, window_params = [{transform_indices = @transform_0, window_bounds = array<i64: 16, 128>}, {transform_indices = @transform_1, window_bounds = array<i64: 3, 16, 128>}, {transform_indices = @transform_2, window_bounds = array<i64: 3, 2>}, {transform_indices = @transform_3, window_bounds = array<i64: 2, 2>}, {pipeline_mode = #tpu.pipeline_mode<synchronous>, transform_indices = @transform_4, window_bounds = array<i64: 128, 32>}, {pipeline_mode = #tpu.pipeline_mode<synchronous>, transform_indices = @transform_5, window_bounds = array<i64: 128, 1>}, {transform_indices = @transform_6, window_bounds = array<i64: 128, 128>}]} {
    %c0 = arith.constant 0 : index
    %c0_0 = arith.constant 0 : index
    %0 = vector.load %arg1[%c0, %c0_0] : memref<16x128xf32, #tpu.memory_space<vmem>>, vector<16x128xf32>
    %c0_1 = arith.constant 0 : index
    %c0_2 = arith.constant 0 : index
    %c0_3 = arith.constant 0 : index
    %1 = vector.load %arg2[%c0_1, %c0_2, %c0_3] : memref<3x16x128xf32, #tpu.memory_space<vmem>>, vector<3x16x128xf32>
    %cst = arith.constant dense<0.000000e+00> : vector<16x128xf32>
    %2 = vector.multi_reduction <add>, %1, %cst [0] : vector<3x16x128xf32> to vector<16x128xf32>
    %3 = vector.shape_cast %0 : vector<16x128xf32> to vector<16x1x128xf32>
    %4 = vector.shape_cast %2 : vector<16x128xf32> to vector<1x16x128xf32>
    %5 = vector.broadcast %3 : vector<16x1x128xf32> to vector<16x16x128xf32>
    %6 = vector.broadcast %4 : vector<1x16x128xf32> to vector<16x16x128xf32>
    %7 = arith.mulf %5, %6 : vector<16x16x128xf32>
    %8 = vector.shape_cast %2 : vector<16x128xf32> to vector<16x1x128xf32>
    %9 = vector.shape_cast %0 : vector<16x128xf32> to vector<1x16x128xf32>
    %10 = vector.broadcast %8 : vector<16x1x128xf32> to vector<16x16x128xf32>
    %11 = vector.broadcast %9 : vector<1x16x128xf32> to vector<16x16x128xf32>
    %12 = arith.mulf %10, %11 : vector<16x16x128xf32>
    %13 = arith.addf %7, %12 : vector<16x16x128xf32>
    %14 = math.absf %13 : vector<16x16x128xf32>
    %15 = math.sqrt %14 : vector<16x16x128xf32>
    %cst_4 = arith.constant 0.000000e+00 : f32
    %16 = vector.broadcast %cst_4 : f32 to vector<16x16x128xf32>
    %17 = arith.cmpf oge, %13, %16 : vector<16x16x128xf32>
    %cst_5 = arith.constant 0.000000e+00 : f32
    %18 = vector.broadcast %cst_5 : f32 to vector<16x16x128xf32>
    %19 = arith.subf %18, %15 : vector<16x16x128xf32>
    %20 = arith.select %17, %15, %19 : vector<16x16x128xi1>, vector<16x16x128xf32>
    %cst_6 = arith.constant dense<0.000000e+00> : vector<16x128xf32>
    %21 = vector.multi_reduction <add>, %15, %cst_6 [0] : vector<16x16x128xf32> to vector<16x128xf32>
    %cst_7 = arith.constant 1.000000e-07 : f32
    %22 = vector.broadcast %cst_7 : f32 to vector<16x128xf32>
    %23 = arith.addf %21, %22 : vector<16x128xf32>
    %24 = tpu.reciprocal %23 {approx = true} : vector<16x128xf32> -> vector<16x128xf32>
    %25 = vector.shape_cast %0 : vector<16x128xf32> to vector<16x1x128xf32>
    %26 = vector.broadcast %25 : vector<16x1x128xf32> to vector<16x16x128xf32>
    %27 = arith.mulf %26, %20 : vector<16x16x128xf32>
    %cst_8 = arith.constant dense<0.000000e+00> : vector<16x128xf32>
    %28 = vector.multi_reduction <add>, %27, %cst_8 [0] : vector<16x16x128xf32> to vector<16x128xf32>
    %29 = arith.mulf %24, %28 : vector<16x128xf32>
    %c0_9 = arith.constant 0 : index
    %c0_10 = arith.constant 0 : index
    %30 = memref.load %arg3[%c0_9, %c0_10] : memref<3x2xf32, #tpu.memory_space<smem>>
    %31 = vector.broadcast %30 : f32 to vector<16x128xf32>
    %32 = arith.mulf %31, %29 : vector<16x128xf32>
    %c1 = arith.constant 1 : index
    %c0_11 = arith.constant 0 : index
    %33 = memref.load %arg3[%c1, %c0_11] : memref<3x2xf32, #tpu.memory_space<smem>>
    %34 = vector.broadcast %33 : f32 to vector<16x128xf32>
    %35 = arith.addf %32, %34 : vector<16x128xf32>
    %36 = math.absf %35 : vector<16x128xf32>
    %cst_12 = arith.constant 1.000000e+00 : f32
    %37 = vector.broadcast %cst_12 : f32 to vector<16x128xf32>
    %38 = arith.addf %37, %36 : vector<16x128xf32>
    %39 = tpu.reciprocal %38 {approx = true} : vector<16x128xf32> -> vector<16x128xf32>
    %40 = arith.mulf %35, %39 : vector<16x128xf32>
    %c0_13 = arith.constant 0 : index
    %c1_14 = arith.constant 1 : index
    %41 = memref.load %arg3[%c0_13, %c1_14] : memref<3x2xf32, #tpu.memory_space<smem>>
    %42 = vector.broadcast %41 : f32 to vector<16x128xf32>
    %43 = arith.mulf %42, %29 : vector<16x128xf32>
    %c1_15 = arith.constant 1 : index
    %c1_16 = arith.constant 1 : index
    %44 = memref.load %arg3[%c1_15, %c1_16] : memref<3x2xf32, #tpu.memory_space<smem>>
    %45 = vector.broadcast %44 : f32 to vector<16x128xf32>
    %46 = arith.addf %43, %45 : vector<16x128xf32>
    %47 = math.absf %46 : vector<16x128xf32>
    %cst_17 = arith.constant 1.000000e+00 : f32
    %48 = vector.broadcast %cst_17 : f32 to vector<16x128xf32>
    %49 = arith.addf %48, %47 : vector<16x128xf32>
    %50 = tpu.reciprocal %49 {approx = true} : vector<16x128xf32> -> vector<16x128xf32>
    %51 = arith.mulf %46, %50 : vector<16x128xf32>
    %52 = vector.shape_cast %40 : vector<16x128xf32> to vector<16x1x128xf32>
    %53 = vector.broadcast %52 : vector<16x1x128xf32> to vector<16x16x128xf32>
    %54 = arith.mulf %53, %20 : vector<16x16x128xf32>
    %cst_18 = arith.constant dense<0.000000e+00> : vector<16x128xf32>
    %55 = vector.multi_reduction <add>, %54, %cst_18 [0] : vector<16x16x128xf32> to vector<16x128xf32>
    %56 = arith.mulf %24, %55 : vector<16x128xf32>
    %57 = vector.shape_cast %51 : vector<16x128xf32> to vector<16x1x128xf32>
    %58 = vector.broadcast %57 : vector<16x1x128xf32> to vector<16x16x128xf32>
    %59 = arith.mulf %58, %20 : vector<16x16x128xf32>
    %cst_19 = arith.constant dense<0.000000e+00> : vector<16x128xf32>
    %60 = vector.multi_reduction <add>, %59, %cst_19 [0] : vector<16x16x128xf32> to vector<16x128xf32>
    %61 = arith.mulf %24, %60 : vector<16x128xf32>
    %c2 = arith.constant 2 : index
    %c0_20 = arith.constant 0 : index
    %62 = memref.load %arg3[%c2, %c0_20] : memref<3x2xf32, #tpu.memory_space<smem>>
    %c0_21 = arith.constant 0 : index
    %c0_22 = arith.constant 0 : index
    %63 = memref.load %arg4[%c0_21, %c0_22] : memref<2x2xf32, #tpu.memory_space<smem>>
    %64 = vector.broadcast %63 : f32 to vector<16x128xf32>
    %65 = arith.mulf %64, %56 : vector<16x128xf32>
    %66 = vector.broadcast %62 : f32 to vector<16x128xf32>
    %67 = arith.addf %66, %65 : vector<16x128xf32>
    %c0_23 = arith.constant 0 : index
    %c1_24 = arith.constant 1 : index
    %68 = memref.load %arg4[%c0_23, %c1_24] : memref<2x2xf32, #tpu.memory_space<smem>>
    %69 = vector.broadcast %68 : f32 to vector<16x128xf32>
    %70 = arith.mulf %69, %61 : vector<16x128xf32>
    %71 = arith.addf %67, %70 : vector<16x128xf32>
    %72 = math.absf %71 : vector<16x128xf32>
    %cst_25 = arith.constant 1.000000e+00 : f32
    %73 = vector.broadcast %cst_25 : f32 to vector<16x128xf32>
    %74 = arith.addf %73, %72 : vector<16x128xf32>
    %75 = tpu.reciprocal %74 {approx = true} : vector<16x128xf32> -> vector<16x128xf32>
    %76 = arith.mulf %71, %75 : vector<16x128xf32>
    %c2_26 = arith.constant 2 : index
    %c1_27 = arith.constant 1 : index
    %77 = memref.load %arg3[%c2_26, %c1_27] : memref<3x2xf32, #tpu.memory_space<smem>>
    %c1_28 = arith.constant 1 : index
    %c0_29 = arith.constant 0 : index
    %78 = memref.load %arg4[%c1_28, %c0_29] : memref<2x2xf32, #tpu.memory_space<smem>>
    %79 = vector.broadcast %78 : f32 to vector<16x128xf32>
    %80 = arith.mulf %79, %56 : vector<16x128xf32>
    %81 = vector.broadcast %77 : f32 to vector<16x128xf32>
    %82 = arith.addf %81, %80 : vector<16x128xf32>
    %c1_30 = arith.constant 1 : index
    %c1_31 = arith.constant 1 : index
    %83 = memref.load %arg4[%c1_30, %c1_31] : memref<2x2xf32, #tpu.memory_space<smem>>
    %84 = vector.broadcast %83 : f32 to vector<16x128xf32>
    %85 = arith.mulf %84, %61 : vector<16x128xf32>
    %86 = arith.addf %82, %85 : vector<16x128xf32>
    %87 = math.absf %86 : vector<16x128xf32>
    %cst_32 = arith.constant 1.000000e+00 : f32
    %88 = vector.broadcast %cst_32 : f32 to vector<16x128xf32>
    %89 = arith.addf %88, %87 : vector<16x128xf32>
    %90 = tpu.reciprocal %89 {approx = true} : vector<16x128xf32> -> vector<16x128xf32>
    %91 = arith.mulf %86, %90 : vector<16x128xf32>
    %92 = tpu.concatenate %76, %91 in 0 : vector<16x128xf32>, vector<16x128xf32> -> vector<32x128xf32>
    %c0_33 = arith.constant 0 : index
    %c0_34 = arith.constant 0 : index
    %93 = vector.load %arg5[%c0_33, %c0_34] : memref<128x32xf32, #tpu.memory_space<vmem>>, vector<128x32xf32>
    %cst_35 = arith.constant dense<0.000000e+00> : vector<128x128xf32>
    %94 = tpu.matmul %93, %92, %cst_35 {dimension_numbers = #tpu.dot_dimension_numbers<[1], [0], [0], [1], [0, 0, 1, 1], [], []>, precision = #tpu.contract_precision<fp32>} : vector<128x32xf32>, vector<32x128xf32>, vector<128x128xf32> -> vector<128x128xf32>
    %c0_36 = arith.constant 0 : index
    %c0_37 = arith.constant 0 : index
    %95 = vector.load %arg6[%c0_36, %c0_37] : memref<128x1xf32, #tpu.memory_space<vmem>>, vector<128x1xf32>
    %96 = vector.broadcast %95 : vector<128x1xf32> to vector<128x128xf32>
    %97 = arith.addf %94, %96 : vector<128x128xf32>
    %c0_38 = arith.constant 0 : index
    %c0_39 = arith.constant 0 : index
    %98 = vector.load %arg7[%c0_38, %c0_39] : memref<128x128xf32, #tpu.memory_space<vmem>>, vector<128x128xf32>
    tpu.vector_store %arg7[%c0_38, %c0_39], %97 {strides = array<i32>} : memref<128x128xf32, #tpu.memory_space<vmem>>, vector<128x128xf32>,
    return
  }
  func.func @transform_0(%arg0: i32) -> (i32, i32) {
    %c0_i32 = arith.constant 0 : i32
    %c0_i32_0 = arith.constant 0 : i32
    return %c0_i32, %arg0 : i32, i32
  }
  func.func @transform_1(%arg0: i32) -> (i32, i32, i32) {
    %c0_i32 = arith.constant 0 : i32
    %c0_i32_0 = arith.constant 0 : i32
    %c0_i32_1 = arith.constant 0 : i32
    return %c0_i32, %c0_i32_0, %arg0 : i32, i32, i32
  }
  func.func @transform_2(%arg0: i32) -> (i32, i32) {
    %c0_i32 = arith.constant 0 : i32
    %c0_i32_0 = arith.constant 0 : i32
    %c0_i32_1 = arith.constant 0 : i32
    return %c0_i32, %c0_i32_0 : i32, i32
  }
  func.func @transform_3(%arg0: i32) -> (i32, i32) {
    %c0_i32 = arith.constant 0 : i32
    %c0_i32_0 = arith.constant 0 : i32
    %c0_i32_1 = arith.constant 0 : i32
    return %c0_i32, %c0_i32_0 : i32, i32
  }
  func.func @transform_4(%arg0: i32) -> (i32, i32) {
    %c0_i32 = arith.constant 0 : i32
    %c0_i32_0 = arith.constant 0 : i32
    %c0_i32_1 = arith.constant 0 : i32
    return %c0_i32, %c0_i32_0 : i32, i32
  }
  func.func @transform_5(%arg0: i32) -> (i32, i32) {
    %c0_i32 = arith.constant 0 : i32
    %c0_i32_0 = arith.constant 0 : i32
    %c0_i32_1 = arith.constant 0 : i32
    return %c0_i32, %c0_i32_0 : i32, i32
  }
  func.func @transform_6(%arg0: i32) -> (i32, i32) {
    %c0_i32 = arith.constant 0 : i32
    %c0_i32_0 = arith.constant 0 : i32
    return %c0_i32, %arg0 : i32, i32
  }
}

</mosaic_0001>

<llo_original>
// kernel: _net_forward.1
$region0: #{_net_forward.1}
  #allocation0 [shape = 'u32[]', space=smem, size = 0x4, offset = 0x4, fixed_abs, tag = 'smem constant byte address 0x4 - core index']
  #allocation1 [shape = 'u32[144,128]{1,0:T(1,128)}', space=vmem, size = 0x12000, scoped, tag = 'internal scratch']
  %s0 = inlined_call_operand.vmem [shape: f32[16,256], index: 0, kind: input, shape index: {}]
  %s1 = inlined_call_operand.vmem [shape: f32[3,16,256], index: 1, kind: input, shape index: {}]
  %s2 = inlined_call_operand.vmem [shape: f32[3,2], index: 2, kind: input, shape index: {}]
  %s3 = inlined_call_operand.vmem [shape: f32[2,2], index: 3, kind: input, shape index: {}]
  %s4 = inlined_call_operand.vmem [shape: f32[128,32], index: 4, kind: input, shape index: {}]
  %s5 = inlined_call_operand.vmem [shape: f32[128,1], index: 5, kind: input, shape index: {}]
  %s6 = inlined_call_operand.vmem [shape: f32[128,256], index: 6, kind: output, shape index: {}]
  %s7 = sld [smem:[#allocation0]]
  $region175: #{_net_forward.1} parent=0
    _
  %s9 = ssub.s32 1, %s7
  %s10 = scalar_select 0, %s9, %s7
  $region1: #{_net_forward.1} parent=0
    #allocation2 [shape = 'u8[16384]{0}', space=vmem, size = 0x4000, scoped, tag = 'input window, operand 0']
    #allocation3 [shape = 'u8[49152]{0}', space=vmem, size = 0xc000, scoped, tag = 'input window, operand 1']
    #allocation4 [shape = 'u8[2048]{0}', space=smem, size = 0x800, scoped, tag = 'input window, operand 2, single buffered']
    #allocation5 [shape = 's32[2]{0}', space=sflag, size = 0x8, scoped, tag = 'scoped memory for _net_forward.1']
    #allocation6 [shape = 'u8[1024]{0}', space=smem, size = 0x400, scoped, tag = 'input window, operand 3, single buffered']
    #allocation7 [shape = 's32[1]{0}', space=sflag, size = 0x4, scoped, tag = 'scoped memory for _net_forward.1']
    #allocation8 [shape = 'u8[131072]{0}', space=vmem, size = 0x20000, scoped, tag = 'output window, operand 0']
    %11 = vsyncpa [#allocation5], 0
    %12 = vsyncpa [#allocation7], 0
    loop: start=0, step=1, limit=4
    $region2: #{_net_forward.1} parent=1 // loop_pre_header
      _
    $region3: #{_net_forward.1} parent=1 // loop_header
      %s14 = sphi 0, %s18
      %p15 = scmp.ge.s32.totalorder %s14, 4
      %s24 = sphi 0, %s26
      %s27 = sphi 0, %s24
      %s28 = sphi 0, %s27
      %s44 = sphi 0, %s28
      %s50 = sphi 0, %s52
      %s53 = sphi 0, %s50
      %s54 = sphi 0, %s53
      %s70 = sphi 0, %s54
      %s74 = sphi 0, %s74
      %s76 = sphi 0, %s74
      %s77 = sphi 0, %s76
      %s91 = sphi 0, %s77
      %s95 = sphi 0, %s95
      %s97 = sphi 0, %s95
      %s98 = sphi 0, %s97
      %s112 = sphi 0, %s98
      %s116 = sphi 0, %s116
      %s118 = sphi 0, %s116
      %s119 = sphi 0, %s118
      %s133 = sphi 0, %s119
      %s137 = sphi 0, %s137
      %s139 = sphi 0, %s137
      %s140 = sphi 0, %s139
      %s154 = sphi 0, %s140
      %s160 = sphi 0, %s162
      %s163 = sphi 0, %s160
      %s164 = sphi 0, %s163
      %s180 = sphi 0, %s164
    $region4: #{_net_forward.1} parent=1 // loop_header_branch
      %17 = sbr.rel (%p15) target = $region8
    $region5: #{_net_forward.1} parent=1 // loop_body
      %s19 = ssub.s32 %s14, 1
      %s20 = ssub.s32 %s14, 2
      %s21 = sadd.s32 %s14, 1
      %s22 = ssub.s32 %s14, %s21
      %p23 = scmp.eq.s32.totalorder %s22, 0
      %s25 = sadd.s32 %s24, 1
      %s26 = scalar_select %p23, %s24, %s25
      %p29 = pneg %p23
      %p30 = scmp.eq.s32.totalorder %s14, 1
      %p31 = por %p29, %p30
      %p32 = scmp.ne.s32.totalorder %s24, %s27
      %p33 = scmp.eq.s32.totalorder %s14, 0
      %p34 = por %p32, %p33
      %p35 = scmp.ne.s32.totalorder %s24, %s27
      %p36 = scmp.eq.s32.totalorder %s19, 1
      %p37 = por %p35, %p36
      %p38 = scmp.ne.s32.totalorder %s27, %s28
      %p39 = scmp.eq.s32.totalorder %s19, 0
      %p40 = por %p38, %p39
      %p41 = scmp.ne.s32.totalorder %s27, %s28
      %p42 = scmp.eq.s32.totalorder %s20, 1
      %p43 = por %p41, %p42
      %p45 = scmp.ne.s32.totalorder %s28, %s44
      %p46 = scmp.eq.s32.totalorder %s20, 0
      %p47 = por %p45, %p46
      %s48 = ssub.s32 %s14, %s21
      %p49 = scmp.eq.s32.totalorder %s48, 0
      %s51 = sadd.s32 %s50, 1
      %s52 = scalar_select %p49, %s50, %s51
      %p55 = pneg %p49
      %p56 = scmp.eq.s32.totalorder %s14, 1
      %p57 = por %p55, %p56
      %p58 = scmp.ne.s32.totalorder %s50, %s53
      %p59 = scmp.eq.s32.totalorder %s14, 0
      %p60 = por %p58, %p59
      %p61 = scmp.ne.s32.totalorder %s50, %s53
      %p62 = scmp.eq.s32.totalorder %s19, 1
      %p63 = por %p61, %p62
      %p64 = scmp.ne.s32.totalorder %s53, %s54
      %p65 = scmp.eq.s32.totalorder %s19, 0
      %p66 = por %p64, %p65
      %p67 = scmp.ne.s32.totalorder %s53, %s54
      %p68 = scmp.eq.s32.totalorder %s20, 1
      %p69 = por %p67, %p68
      %p71 = scmp.ne.s32.totalorder %s54, %s70
      %p72 = scmp.eq.s32.totalorder %s20, 0
      %p73 = por %p71, %p72
      %s75 = sadd.s32 %s74, 1
      %p78 = scmp.eq.s32.totalorder %s14, 1
      %p79 = scmp.ne.s32.totalorder %s74, %s76
      %p80 = scmp.eq.s32.totalorder %s14, 0
      %p81 = por %p79, %p80
      %p82 = scmp.ne.s32.totalorder %s74, %s76
      %p83 = scmp.eq.s32.totalorder %s19, 1
      %p84 = por %p82, %p83
      %p85 = scmp.ne.s32.totalorder %s76, %s77
      %p86 = scmp.eq.s32.totalorder %s19, 0
      %p87 = por %p85, %p86
      %p88 = scmp.ne.s32.totalorder %s76, %s77
      %p89 = scmp.eq.s32.totalorder %s20, 1
      %p90 = por %p88, %p89
      %p92 = scmp.ne.s32.totalorder %s77, %s91
      %p93 = scmp.eq.s32.totalorder %s20, 0
      %p94 = por %p92, %p93
      %s96 = sadd.s32 %s95, 1
      %p99 = scmp.eq.s32.totalorder %s14, 1
      %p100 = scmp.ne.s32.totalorder %s95, %s97
      %p101 = scmp.eq.s32.totalorder %s14, 0
      %p102 = por %p100, %p101
      %p103 = scmp.ne.s32.totalorder %s95, %s97
      %p104 = scmp.eq.s32.totalorder %s19, 1
      %p105 = por %p103, %p104
      %p106 = scmp.ne.s32.totalorder %s97, %s98
      %p107 = scmp.eq.s32.totalorder %s19, 0
      %p108 = por %p106, %p107
      %p109 = scmp.ne.s32.totalorder %s97, %s98
      %p110 = scmp.eq.s32.totalorder %s20, 1
      %p111 = por %p109, %p110
      %p113 = scmp.ne.s32.totalorder %s98, %s112
      %p114 = scmp.eq.s32.totalorder %s20, 0
      %p115 = por %p113, %p114
      %s117 = sadd.s32 %s116, 1
      %p120 = scmp.eq.s32.totalorder %s14, 1
      %p121 = scmp.ne.s32.totalorder %s116, %s118
      %p122 = scmp.eq.s32.totalorder %s14, 0
      %p123 = por %p121, %p122
      %p124 = scmp.ne.s32.totalorder %s116, %s118
      %p125 = scmp.eq.s32.totalorder %s19, 1
      %p126 = por %p124, %p125
      %p127 = scmp.ne.s32.totalorder %s118, %s119
      %p128 = scmp.eq.s32.totalorder %s19, 0
      %p129 = por %p127, %p128
      %p130 = scmp.ne.s32.totalorder %s118, %s119
      %p131 = scmp.eq.s32.totalorder %s20, 1
      %p132 = por %p130, %p131
      %p134 = scmp.ne.s32.totalorder %s119, %s133
      %p135 = scmp.eq.s32.totalorder %s20, 0
      %p136 = por %p134, %p135
      %s138 = sadd.s32 %s137, 1
      %p141 = scmp.eq.s32.totalorder %s14, 1
      %p142 = scmp.ne.s32.totalorder %s137, %s139
      %p143 = scmp.eq.s32.totalorder %s14, 0
      %p144 = por %p142, %p143
      %p145 = scmp.ne.s32.totalorder %s137, %s139
      %p146 = scmp.eq.s32.totalorder %s19, 1
      %p147 = por %p145, %p146
      %p148 = scmp.ne.s32.totalorder %s139, %s140
      %p149 = scmp.eq.s32.totalorder %s19, 0
      %p150 = por %p148, %p149
      %p151 = scmp.ne.s32.totalorder %s139, %s140
      %p152 = scmp.eq.s32.totalorder %s20, 1
      %p153 = por %p151, %p152
      %p155 = scmp.ne.s32.totalorder %s140, %s154
      %p156 = scmp.eq.s32.totalorder %s20, 0
      %p157 = por %p155, %p156
      %s158 = ssub.s32 %s14, %s21
      %p159 = scmp.eq.s32.totalorder %s158, 0
      %s161 = sadd.s32 %s160, 1
      %s162 = scalar_select %p159, %s160, %s161
      %p165 = pneg %p159
      %p166 = scmp.eq.s32.totalorder %s14, 1
      %p167 = por %p165, %p166
      %p168 = scmp.ne.s32.totalorder %s160, %s163
      %p169 = scmp.eq.s32.totalorder %s14, 0
      %p170 = por %p168, %p169
      %p171 = scmp.ne.s32.totalorder %s160, %s163
      %p172 = scmp.eq.s32.totalorder %s19, 1
      %p173 = por %p171, %p172
      %p174 = scmp.ne.s32.totalorder %s163, %s164
      %p175 = scmp.eq.s32.totalorder %s19, 0
      %p176 = por %p174, %p175
      %p177 = scmp.ne.s32.totalorder %s163, %s164
      %p178 = scmp.eq.s32.totalorder %s20, 1
      %p179 = por %p177, %p178
      %p181 = scmp.ne.s32.totalorder %s164, %s180
      %p182 = scmp.eq.s32.totalorder %s20, 0
      %p183 = por %p181, %p182
      %p184 = scmp.le.s32.totalorder 1, %s14
      %p185 = scmp.lt.s32.totalorder %s14, 3
      %p186 = pnand %p184, %p185
      %p187 = pneg %p186
      // Predicated region
      $region9: #{_net_forward.1} parent=5 // pred_check
        _
      $region10: #{_net_forward.1} parent=5 // pred_check_branch
        %189 = sbr.rel (%p186) target = $region12
      $region11: #{_net_forward.1} parent=5 // pred_region
        %s190 = ssub.s32 %s14, 1
        // Predicated region
        $region13: #{_net_forward.1} parent=11 // pred_check
          %p191 = pneg %p87
        $region14: #{_net_forward.1} parent=11 // pred_check_branch
          %193 = sbr.rel (%p191) target = $region16
        $region15: #{_net_forward.1} parent=11 // pred_region
          %s195 = ssub.s32 64, 64
          %196 = vsyncadd [#allocation5], %s195
          %s198 = sshll.u32 %s2, 4
          %s199 = int_to_ptr.vmem [resolvable:$true] %s198
          %201 = dma.vmem_to_smem %s199, 64, [#allocation4], [#allocation5]
        $region16: #{_net_forward.1} parent=11 // pred_fallthru
          _
        // Predicated region
        $region17: #{_net_forward.1} parent=11 // pred_check
          %p202 = pneg %p108
        $region18: #{_net_forward.1} parent=11 // pred_check_branch
          %204 = sbr.rel (%p202) target = $region20
        $region19: #{_net_forward.1} parent=11 // pred_region
          %s206 = ssub.s32 32, 32
          %207 = vsyncadd [#allocation7], %s206
          %s209 = sshll.u32 %s3, 4
          %s210 = int_to_ptr.vmem [resolvable:$true] %s209
          %212 = dma.vmem_to_smem %s210, 32, [#allocation6], [#allocation7]
        $region20: #{_net_forward.1} parent=11 // pred_fallthru
          _
        // Predicated region
        $region21: #{_net_forward.1} parent=11 // pred_check
          %p213 = pneg %p129
        $region22: #{_net_forward.1} parent=11 // pred_check_branch
          %215 = sbr.rel (%p213) target = $region24
        $region23: #{_net_forward.1} parent=11 // pred_region
          _
        $region24: #{_net_forward.1} parent=11 // pred_fallthru
          _
        // Predicated region
        $region25: #{_net_forward.1} parent=11 // pred_check
          %p216 = pneg %p150
        $region26: #{_net_forward.1} parent=11 // pred_check_branch
          %218 = sbr.rel (%p216) target = $region28
        $region27: #{_net_forward.1} parent=11 // pred_region
          _
        $region28: #{_net_forward.1} parent=11 // pred_fallthru
          _
      $region12: #{_net_forward.1} parent=5 // pred_fallthru
        _
      %p219 = scmp.lt.s32.totalorder %s14, 2
      // Predicated region
      $region29: #{_net_forward.1} parent=5 // pred_check
        %p220 = pneg %p219
      $region30: #{_net_forward.1} parent=5 // pred_check_branch
        %222 = sbr.rel (%p220) target = $region32
      $region31: #{_net_forward.1} parent=5 // pred_region
        // Predicated region
        $region33: #{_net_forward.1} parent=31 // pred_check
          %p223 = pneg %p34
        $region34: #{_net_forward.1} parent=31 // pred_check_branch
          %225 = sbr.rel (%p223) target = $region36
        $region35: #{_net_forward.1} parent=31 // pred_region
          %s226 = sand.u32 %s24, 1
          %s227 = sand.u32 %s24, 1
          %s228 = smul.addr %s227, 16
          %s229 = scalar_lea.vmem [#allocation2], %s228
          %s230 = smul.addr %s14, 8
          %s231 = scalar_lea.vmem %s0, %s230
          // Predicated region
          $region37: #{_net_forward.1} parent=35 // pred_check
            _
          $region38: #{_net_forward.1} parent=35 // pred_check_branch
            %233 = sbr.rel (0) target = $region40
          $region39: #{_net_forward.1} parent=35 // pred_region
            // Predicated region
            $region41: #{_net_forward.1} parent=39 // pred_check
              _
            $region42: #{_net_forward.1} parent=39 // pred_check_branch
              %235 = sbr.rel (0) target = $region44
            $region43: #{_net_forward.1} parent=39 // pred_region
              // Predicated region
              $region56: #{_net_forward.1} parent=43 // pred_check
                _
              $region57: #{_net_forward.1} parent=43 // pred_check_branch
                %252 = sbr.rel (0) target = $region59
              $region58: #{_net_forward.1} parent=43 // pred_region
                loop: start=0, step=1, limit=1
                $region60: #{_net_forward.1} parent=58 // loop_pre_header
                  _
                $region61: #{_net_forward.1} parent=58 // loop_header
                  %s254 = sphi 0, %s258
                  %p255 = scmp.ge.s32.totalorder %s254, 1
                  %s259 = sphi %s231, %s231
                  %s260 = sphi %s229, %s229
                $region62: #{_net_forward.1} parent=58 // loop_header_branch
                  %257 = sbr.rel (%p255) target = $region66
                $region63: #{_net_forward.1} parent=58 // loop_body
                  %v261 = vld [vmem:[%s259] sm:$0xff]
                  %262 = vst [vmem:[%s260] sm:$0xff] %v261
                  %v263 = vld [vmem:[%s259 + $0x10] sm:$0xff]
                  %264 = vst [vmem:[%s260 + $0x8] sm:$0xff] %v263
                $region64: #{_net_forward.1} parent=58 // loop_footer
                  %s258 = sadd.s32 1, %s254
                $region65: #{_net_forward.1} parent=58 // loop_footer_branch
                  %253 = sbr.rel target = $region61
                $region66: #{_net_forward.1} parent=58 // loop_exit
                  _
              $region59: #{_net_forward.1} parent=43 // pred_fallthru
                _
              // Predicated region
              $region67: #{_net_forward.1} parent=43 // pred_check
                _
              $region68: #{_net_forward.1} parent=43 // pred_check_branch
                %266 = sbr.rel target = $region70
              $region69: #{_net_forward.1} parent=43 // pred_region
                _
              $region70: #{_net_forward.1} parent=43 // pred_fallthru
                _
            $region44: #{_net_forward.1} parent=39 // pred_fallthru
              _
            // Predicated region
            $region45: #{_net_forward.1} parent=39 // pred_check
              _
            $region46: #{_net_forward.1} parent=39 // pred_check_branch
              %237 = sbr.rel target = $region48
            $region47: #{_net_forward.1} parent=39 // pred_region
              loop: start=0, step=1, limit=1
              $region49: #{_net_forward.1} parent=47 // loop_pre_header
                _
              $region50: #{_net_forward.1} parent=47 // loop_header
                %s240 = sphi 0, %s244
                %p241 = scmp.ge.s32.totalorder %s240, 1
                %s245 = sphi %s231, %s231
                %s246 = sphi %s229, %s229
              $region51: #{_net_forward.1} parent=47 // loop_header_branch
                %243 = sbr.rel (%p241) target = $region55
              $region52: #{_net_forward.1} parent=47 // loop_body
                %v247 = vld [vmem:[%s245] sm:$0xff]
                %248 = vst [vmem:[%s246] sm:$0xff] %v247
                %v249 = vld [vmem:[%s245 + $0x10] sm:$0xff]
                %250 = vst [vmem:[%s246 + $0x8] sm:$0xff] %v249
              $region53: #{_net_forward.1} parent=47 // loop_footer
                %s244 = sadd.s32 1, %s240
              $region54: #{_net_forward.1} parent=47 // loop_footer_branch
                %239 = sbr.rel target = $region50
              $region55: #{_net_forward.1} parent=47 // loop_exit
                _
            $region48: #{_net_forward.1} parent=39 // pred_fallthru
              _
          $region40: #{_net_forward.1} parent=35 // pred_fallthru
            _
          %267 = vnop
        $region36: #{_net_forward.1} parent=31 // pred_fallthru
          _
        // Predicated region
        $region71: #{_net_forward.1} parent=31 // pred_check
          %p268 = pneg %p60
        $region72: #{_net_forward.1} parent=31 // pred_check_branch
          %270 = sbr.rel (%p268) target = $region74
        $region73: #{_net_forward.1} parent=31 // pred_region
          %s271 = sand.u32 %s50, 1
          %s272 = sand.u32 %s50, 1
          %s273 = smul.addr %s272, 48
          %s274 = scalar_lea.vmem [#allocation3], %s273
          %s275 = smul.addr %s14, 8
          %s276 = scalar_lea.vmem %s1, %s275
          // Predicated region
          $region75: #{_net_forward.1} parent=73 // pred_check
            _
          $region76: #{_net_forward.1} parent=73 // pred_check_branch
            %278 = sbr.rel (0) target = $region78
          $region77: #{_net_forward.1} parent=73 // pred_region
            // Predicated region
            $region79: #{_net_forward.1} parent=77 // pred_check
              _
            $region80: #{_net_forward.1} parent=77 // pred_check_branch
              %280 = sbr.rel (0) target = $region82
            $region81: #{_net_forward.1} parent=77 // pred_region
              // Predicated region
              $region94: #{_net_forward.1} parent=81 // pred_check
                _
              $region95: #{_net_forward.1} parent=81 // pred_check_branch
                %305 = sbr.rel (0) target = $region97
              $region96: #{_net_forward.1} parent=81 // pred_region
                loop: start=0, step=1, limit=1
                $region98: #{_net_forward.1} parent=96 // loop_pre_header
                  _
                $region99: #{_net_forward.1} parent=96 // loop_header
                  %s307 = sphi 0, %s311
                  %p308 = scmp.ge.s32.totalorder %s307, 1
                  %s312 = sphi %s276, %s276
                  %s313 = sphi %s274, %s274
                $region100: #{_net_forward.1} parent=96 // loop_header_branch
                  %310 = sbr.rel (%p308) target = $region104
                $region101: #{_net_forward.1} parent=96 // loop_body
                  %v314 = vld [vmem:[%s312] sm:$0xff]
                  %315 = vst [vmem:[%s313] sm:$0xff] %v314
                  %v316 = vld [vmem:[%s312 + $0x10] sm:$0xff]
                  %317 = vst [vmem:[%s313 + $0x8] sm:$0xff] %v316
                  %v318 = vld [vmem:[%s312 + $0x20] sm:$0xff]
                  %319 = vst [vmem:[%s313 + $0x10] sm:$0xff] %v318
                  %v320 = vld [vmem:[%s312 + $0x30] sm:$0xff]
                  %321 = vst [vmem:[%s313 + $0x18] sm:$0xff] %v320
                  %v322 = vld [vmem:[%s312 + $0x40] sm:$0xff]
                  %323 = vst [vmem:[%s313 + $0x20] sm:$0xff] %v322
                  %v324 = vld [vmem:[%s312 + $0x50] sm:$0xff]
                  %325 = vst [vmem:[%s313 + $0x28] sm:$0xff] %v324
                $region102: #{_net_forward.1} parent=96 // loop_footer
                  %s311 = sadd.s32 1, %s307
                $region103: #{_net_forward.1} parent=96 // loop_footer_branch
                  %306 = sbr.rel target = $region99
                $region104: #{_net_forward.1} parent=96 // loop_exit
                  _
              $region97: #{_net_forward.1} parent=81 // pred_fallthru
                _
              // Predicated region
              $region105: #{_net_forward.1} parent=81 // pred_check
                _
              $region106: #{_net_forward.1} parent=81 // pred_check_branch
                %327 = sbr.rel target = $region108
              $region107: #{_net_forward.1} parent=81 // pred_region
                _
              $region108: #{_net_forward.1} parent=81 // pred_fallthru
                _
            $region82: #{_net_forward.1} parent=77 // pred_fallthru
              _
            // Predicated region
            $region83: #{_net_forward.1} parent=77 // pred_check
              _
            $region84: #{_net_forward.1} parent=77 // pred_check_branch
              %282 = sbr.rel target = $region86
            $region85: #{_net_forward.1} parent=77 // pred_region
              loop: start=0, step=1, limit=1
              $region87: #{_net_forward.1} parent=85 // loop_pre_header
                _
              $region88: #{_net_forward.1} parent=85 // loop_header
                %s285 = sphi 0, %s289
                %p286 = scmp.ge.s32.totalorder %s285, 1
                %s290 = sphi %s276, %s276
                %s291 = sphi %s274, %s274
              $region89: #{_net_forward.1} parent=85 // loop_header_branch
                %288 = sbr.rel (%p286) target = $region93
              $region90: #{_net_forward.1} parent=85 // loop_body
                %v292 = vld [vmem:[%s290] sm:$0xff]
                %293 = vst [vmem:[%s291] sm:$0xff] %v292
                %v294 = vld [vmem:[%s290 + $0x10] sm:$0xff]
                %295 = vst [vmem:[%s291 + $0x8] sm:$0xff] %v294
                %v296 = vld [vmem:[%s290 + $0x20] sm:$0xff]
                %297 = vst [vmem:[%s291 + $0x10] sm:$0xff] %v296
                %v298 = vld [vmem:[%s290 + $0x30] sm:$0xff]
                %299 = vst [vmem:[%s291 + $0x18] sm:$0xff] %v298
                %v300 = vld [vmem:[%s290 + $0x40] sm:$0xff]
                %301 = vst [vmem:[%s291 + $0x20] sm:$0xff] %v300
                %v302 = vld [vmem:[%s290 + $0x50] sm:$0xff]
                %303 = vst [vmem:[%s291 + $0x28] sm:$0xff] %v302
              $region91: #{_net_forward.1} parent=85 // loop_footer
                %s289 = sadd.s32 1, %s285
              $region92: #{_net_forward.1} parent=85 // loop_footer_branch
                %284 = sbr.rel target = $region88
              $region93: #{_net_forward.1} parent=85 // loop_exit
                _
            $region86: #{_net_forward.1} parent=77 // pred_fallthru
              _
          $region78: #{_net_forward.1} parent=73 // pred_fallthru
            _
          %328 = vnop
        $region74: #{_net_forward.1} parent=31 // pred_fallthru
          _
      $region32: #{_net_forward.1} parent=5 // pred_fallthru
        _
      %p329 = scmp.le.s32.totalorder 1, %s14
      %p330 = scmp.lt.s32.totalorder %s14, 3
      %p331 = pnand %p329, %p330
      %p332 = pneg %p331
      // Predicated region
      $region109: #{_net_forward.1} parent=5 // pred_check
        _
      $region110: #{_net_forward.1} parent=5 // pred_check_branch
        %334 = sbr.rel (%p331) target = $region112
      $region111: #{_net_forward.1} parent=5 // pred_region
        %s335 = ssub.s32 %s14, 1
        %s336 = sand.u32 %s27, 1
        %s337 = sand.u32 %s27, 1
        %s338 = smul.addr %s337, 16
        %s339 = scalar_lea.vmem [#allocation2], %s338
        // Predicated region
        $region113: #{_net_forward.1} parent=111 // pred_check
          %p340 = pneg %p40
        $region114: #{_net_forward.1} parent=111 // pred_check_branch
          %342 = sbr.rel (%p340) target = $region116
        $region115: #{_net_forward.1} parent=111 // pred_region
          _
        $region116: #{_net_forward.1} parent=111 // pred_fallthru
          _
        %s343 = sand.u32 %s53, 1
        %s344 = sand.u32 %s53, 1
        %s345 = smul.addr %s344, 48
        %s346 = scalar_lea.vmem [#allocation3], %s345
        // Predicated region
        $region117: #{_net_forward.1} parent=111 // pred_check
          %p347 = pneg %p66
        $region118: #{_net_forward.1} parent=111 // pred_check_branch
          %349 = sbr.rel (%p347) target = $region120
        $region119: #{_net_forward.1} parent=111 // pred_region
          _
        $region120: #{_net_forward.1} parent=111 // pred_fallthru
          _
        // Predicated region
        $region121: #{_net_forward.1} parent=111 // pred_check
          %p350 = pneg %p87
        $region122: #{_net_forward.1} parent=111 // pred_check_branch
          %352 = sbr.rel (%p350) target = $region124
        $region123: #{_net_forward.1} parent=111 // pred_region
          %353 = dma.done [#allocation5], 64
        $region124: #{_net_forward.1} parent=111 // pred_fallthru
          _
        // Predicated region
        $region125: #{_net_forward.1} parent=111 // pred_check
          %p354 = pneg %p108
        $region126: #{_net_forward.1} parent=111 // pred_check_branch
          %356 = sbr.rel (%p354) target = $region128
        $region127: #{_net_forward.1} parent=111 // pred_region
          %357 = dma.done [#allocation7], 32
        $region128: #{_net_forward.1} parent=111 // pred_fallthru
          _
        %358 = sfence
        %s359 = sand.u32 %s27, 1
        %s360 = sand.u32 %s27, 1
        %s361 = smul.addr %s360, 16
        %s362 = scalar_lea.vmem [#allocation2], %s361
        %p363 = pneg %p40
        %p364 = pneg %p37
        %s365 = sand.u32 %s53, 1
        %s366 = sand.u32 %s53, 1
        %s367 = smul.addr %s366, 48
        %s368 = scalar_lea.vmem [#allocation3], %s367
        %p369 = pneg %p66
        %p370 = pneg %p63
        %p371 = pneg %p87
        %p372 = pneg %p84
        %p373 = pneg %p108
        %p374 = pneg %p105
        %p375 = pneg %p129
        %p376 = pneg %p126
        %p377 = pneg %p150
        %p378 = pneg %p147
        %p379 = pneg %p176
        %p380 = pneg %p173
        %s381 = sand.u32 %s163, 1
        %s382 = sand.u32 %s163, 1
        %s383 = smul.addr %s382, 128
        %s384 = scalar_lea.vmem [#allocation8], %s383
        %v385 = vld [vmem:[%s339] sm:$0xff]
        %v386 = vld [vmem:[%s339 + $0x8] sm:$0xff]
        %v387 = vld [vmem:[%s346] sm:$0xff]
        %v388 = vld [vmem:[%s346 + $0x8] sm:$0xff]
        %v389 = vld [vmem:[%s346 + $0x10] sm:$0xff]
        %v390 = vld [vmem:[%s346 + $0x18] sm:$0xff]
        %v391 = vld [vmem:[%s346 + $0x20] sm:$0xff]
        %v392 = vld [vmem:[%s346 + $0x28] sm:$0xff]
        %v393 = vadd.f32 %v387, %v389
        %v394 = vadd.f32 %v393, %v391
        %v395 = vadd.f32 %v388, %v390
        %v396 = vadd.f32 %v395, %v392
        %v399 = vcombine.high %v385, %v385
        %v401 = vunpack.c.l.s4 1966171168
        %v402 = vunpack.c.0.s8 %v401
        %v403 = vlaneseq
        %v404 = vshrl.u32 %v403, 7
        %v405 = vsub.s32 %v402, %v404
        %v406 = vrot.slane %v385, %v405
        %v408 = vunpack.c.l.s4 1966171168
        %v409 = vunpack.c.0.s8 %v408
        %v410 = vlaneseq
        %v411 = vshrl.u32 %v410, 7
        %v412 = vsub.s32 %v409, %v411
        %v413 = vrot.slane %v399, %v412
        %v414 = vcombine.high %v406, %v406
        %v415 = vcombine.high %v413, %v413
        %v417 = vunpack.c.l.s4 1966171168
        %v418 = vunpack.c.0.s8 %v417
        %v419 = vlaneseq
        %v420 = vshrl.u32 %v419, 7
        %v421 = vsub.s32 %v418, %v420
        %v422 = vrot.slane %v406, %v421
        %v424 = vunpack.c.l.s4 1966171168
        %v425 = vunpack.c.0.s8 %v424
        %v426 = vlaneseq
        %v427 = vshrl.u32 %v426, 7
        %v428 = vsub.s32 %v425, %v427
        %v429 = vrot.slane %v413, %v428
        %v431 = vunpack.c.l.s4 1966171168
        %v432 = vunpack.c.0.s8 %v431
        %v433 = vlaneseq
        %v434 = vshrl.u32 %v433, 7
        %v435 = vsub.s32 %v432, %v434
        %v436 = vrot.slane %v414, %v435
        %v438 = vunpack.c.l.s4 1966171168
        %v439 = vunpack.c.0.s8 %v438
        %v440 = vlaneseq
        %v441 = vshrl.u32 %v440, 7
        %v442 = vsub.s32 %v439, %v441
        %v443 = vrot.slane %v415, %v442
        %v444 = vcombine.high %v422, %v422
        %v445 = vcombine.high %v429, %v429
        %v446 = vcombine.high %v436, %v436
        %v447 = vcombine.high %v443, %v443
        %v448 = vcombine.high %v386, %v386
        %v450 = vunpack.c.l.s4 1966171168
        %v451 = vunpack.c.0.s8 %v450
        %v452 = vlaneseq
        %v453 = vshrl.u32 %v452, 7
        %v454 = vsub.s32 %v451, %v453
        %v455 = vrot.slane %v386, %v454
        %v457 = vunpack.c.l.s4 1966171168
        %v458 = vunpack.c.0.s8 %v457
        %v459 = vlaneseq
        %v460 = vshrl.u32 %v459, 7
        %v461 = vsub.s32 %v458, %v460
        %v462 = vrot.slane %v448, %v461
        %v463 = vcombine.high %v455, %v455
        %v464 = vcombine.high %v462, %v462
        %v466 = vunpack.c.l.s4 1966171168
        %v467 = vunpack.c.0.s8 %v466
        %v468 = vlaneseq
        %v469 = vshrl.u32 %v468, 7
        %v470 = vsub.s32 %v467, %v469
        %v471 = vrot.slane %v455, %v470
        %v473 = vunpack.c.l.s4 1966171168
        %v474 = vunpack.c.0.s8 %v473
        %v475 = vlaneseq
        %v476 = vshrl.u32 %v475, 7
        %v477 = vsub.s32 %v474, %v476
        %v478 = vrot.slane %v462, %v477
        %v480 = vunpack.c.l.s4 1966171168
        %v481 = vunpack.c.0.s8 %v480
        %v482 = vlaneseq
        %v483 = vshrl.u32 %v482, 7
        %v484 = vsub.s32 %v481, %v483
        %v485 = vrot.slane %v463, %v484
        %v487 = vunpack.c.l.s4 1966171168
        %v488 = vunpack.c.0.s8 %v487
        %v489 = vlaneseq
        %v490 = vshrl.u32 %v489, 7
        %v491 = vsub.s32 %v488, %v490
        %v492 = vrot.slane %v464, %v491
        %v493 = vcombine.high %v471, %v471
        %v494 = vcombine.high %v478, %v478
        %v495 = vcombine.high %v485, %v485
        %v496 = vcombine.high %v492, %v492
        %v497 = vlaneseq
        %v498 = vshrl.u32 %v497, 7
        %v499 = vsub.s32 0, %v498
        %v500 = vrot.slane %v422, %v499
        %v501 = vlaneseq
        %v502 = vshrl.u32 %v501, 7
        %v503 = vsub.s32 0, %v502
        %v504 = vrot.slane %v436, %v503
        %v505 = vlaneseq
        %v506 = vshrl.u32 %v505, 7
        %v507 = vsub.s32 0, %v506
        %v508 = vrot.slane %v444, %v507
        %v509 = vlaneseq
        %v510 = vshrl.u32 %v509, 7
        %v511 = vsub.s32 0, %v510
        %v512 = vrot.slane %v446, %v511
        %v513 = vlaneseq
        %v514 = vshrl.u32 %v513, 7
        %v515 = vsub.s32 0, %v514
        %v516 = vrot.slane %v429, %v515
        %v517 = vlaneseq
        %v518 = vshrl.u32 %v517, 7
        %v519 = vsub.s32 0, %v518
        %v520 = vrot.slane %v443, %v519
        %v521 = vlaneseq
        %v522 = vshrl.u32 %v521, 7
        %v523 = vsub.s32 0, %v522
        %v524 = vrot.slane %v445, %v523
        %v525 = vlaneseq
        %v526 = vshrl.u32 %v525, 7
        %v527 = vsub.s32 0, %v526
        %v528 = vrot.slane %v447, %v527
        %v529 = vlaneseq
        %v530 = vshrl.u32 %v529, 7
        %v531 = vsub.s32 0, %v530
        %v532 = vrot.slane %v471, %v531
        %v533 = vlaneseq
        %v534 = vshrl.u32 %v533, 7
        %v535 = vsub.s32 0, %v534
        %v536 = vrot.slane %v485, %v535
        %v537 = vlaneseq
        %v538 = vshrl.u32 %v537, 7
        %v539 = vsub.s32 0, %v538
        %v540 = vrot.slane %v493, %v539
        %v541 = vlaneseq
        %v542 = vshrl.u32 %v541, 7
        %v543 = vsub.s32 0, %v542
        %v544 = vrot.slane %v495, %v543
        %v545 = vlaneseq
        %v546 = vshrl.u32 %v545, 7
        %v547 = vsub.s32 0, %v546
        %v548 = vrot.slane %v478, %v547
        %v549 = vlaneseq
        %v550 = vshrl.u32 %v549, 7
        %v551 = vsub.s32 0, %v550
        %v552 = vrot.slane %v492, %v551
        %v553 = vlaneseq
        %v554 = vshrl.u32 %v553, 7
        %v555 = vsub.s32 0, %v554
        %v556 = vrot.slane %v494, %v555
        %v557 = vlaneseq
        %v558 = vshrl.u32 %v557, 7
        %v559 = vsub.s32 0, %v558
        %v560 = vrot.slane %v496, %v559
        %v577 = vmul.f32 %v500, %v394
        %v578 = vmul.f32 %v500, %v396
        %v579 = vmul.f32 %v504, %v394
        %v580 = vmul.f32 %v504, %v396
        %v581 = vmul.f32 %v508, %v394
        %v582 = vmul.f32 %v508, %v396
        %v583 = vmul.f32 %v512, %v394
        %v584 = vmul.f32 %v512, %v396
        %v585 = vmul.f32 %v516, %v394
        %v586 = vmul.f32 %v516, %v396
        %v587 = vmul.f32 %v520, %v394
        %v588 = vmul.f32 %v520, %v396
        %v589 = vmul.f32 %v524, %v394
        %v590 = vmul.f32 %v524, %v396
        %v591 = vmul.f32 %v528, %v394
        %v592 = vmul.f32 %v528, %v396
        %v593 = vmul.f32 %v532, %v394
        %v594 = vmul.f32 %v532, %v396
        %v595 = vmul.f32 %v536, %v394
        %v596 = vmul.f32 %v536, %v396
        %v597 = vmul.f32 %v540, %v394
        %v598 = vmul.f32 %v540, %v396
        %v599 = vmul.f32 %v544, %v394
        %v600 = vmul.f32 %v544, %v396
        %v601 = vmul.f32 %v548, %v394
        %v602 = vmul.f32 %v548, %v396
        %v603 = vmul.f32 %v552, %v394
        %v604 = vmul.f32 %v552, %v396
        %v605 = vmul.f32 %v556, %v394
        %v606 = vmul.f32 %v556, %v396
        %v607 = vmul.f32 %v560, %v394
        %v608 = vmul.f32 %v560, %v396
        %v611 = vcombine.high %v394, %v394
        %v613 = vunpack.c.l.s4 1966171168
        %v614 = vunpack.c.0.s8 %v613
        %v615 = vlaneseq
        %v616 = vshrl.u32 %v615, 7
        %v617 = vsub.s32 %v614, %v616
        %v618 = vrot.slane %v394, %v617
        %v620 = vunpack.c.l.s4 1966171168
        %v621 = vunpack.c.0.s8 %v620
        %v622 = vlaneseq
        %v623 = vshrl.u32 %v622, 7
        %v624 = vsub.s32 %v621, %v623
        %v625 = vrot.slane %v611, %v624
        %v626 = vcombine.high %v618, %v618
        %v627 = vcombine.high %v625, %v625
        %v629 = vunpack.c.l.s4 1966171168
        %v630 = vunpack.c.0.s8 %v629
        %v631 = vlaneseq
        %v632 = vshrl.u32 %v631, 7
        %v633 = vsub.s32 %v630, %v632
        %v634 = vrot.slane %v618, %v633
        %v636 = vunpack.c.l.s4 1966171168
        %v637 = vunpack.c.0.s8 %v636
        %v638 = vlaneseq
        %v639 = vshrl.u32 %v638, 7
        %v640 = vsub.s32 %v637, %v639
        %v641 = vrot.slane %v625, %v640
        %v643 = vunpack.c.l.s4 1966171168
        %v644 = vunpack.c.0.s8 %v643
        %v645 = vlaneseq
        %v646 = vshrl.u32 %v645, 7
        %v647 = vsub.s32 %v644, %v646
        %v648 = vrot.slane %v626, %v647
        %v650 = vunpack.c.l.s4 1966171168
        %v651 = vunpack.c.0.s8 %v650
        %v652 = vlaneseq
        %v653 = vshrl.u32 %v652, 7
        %v654 = vsub.s32 %v651, %v653
        %v655 = vrot.slane %v627, %v654
        %v656 = vcombine.high %v634, %v634
        %v657 = vcombine.high %v641, %v641
        %v658 = vcombine.high %v648, %v648
        %v659 = vcombine.high %v655, %v655
        %v660 = vcombine.high %v396, %v396
        %v662 = vunpack.c.l.s4 1966171168
        %v663 = vunpack.c.0.s8 %v662
        %v664 = vlaneseq
        %v665 = vshrl.u32 %v664, 7
        %v666 = vsub.s32 %v663, %v665
        %v667 = vrot.slane %v396, %v666
        %v669 = vunpack.c.l.s4 1966171168
        %v670 = vunpack.c.0.s8 %v669
        %v671 = vlaneseq
        %v672 = vshrl.u32 %v671, 7
        %v673 = vsub.s32 %v670, %v672
        %v674 = vrot.slane %v660, %v673
        %v675 = vcombine.high %v667, %v667
        %v676 = vcombine.high %v674, %v674
        %v678 = vunpack.c.l.s4 1966171168
        %v679 = vunpack.c.0.s8 %v678
        %v680 = vlaneseq
        %v681 = vshrl.u32 %v680, 7
        %v682 = vsub.s32 %v679, %v681
        %v683 = vrot.slane %v667, %v682
        %v685 = vunpack.c.l.s4 1966171168
        %v686 = vunpack.c.0.s8 %v685
        %v687 = vlaneseq
        %v688 = vshrl.u32 %v687, 7
        %v689 = vsub.s32 %v686, %v688
        %v690 = vrot.slane %v674, %v689
        %v692 = vunpack.c.l.s4 1966171168
        %v693 = vunpack.c.0.s8 %v692
        %v694 = vlaneseq
        %v695 = vshrl.u32 %v694, 7
        %v696 = vsub.s32 %v693, %v695
        %v697 = vrot.slane %v675, %v696
        %v699 = vunpack.c.l.s4 1966171168
        %v700 = vunpack.c.0.s8 %v699
        %v701 = vlaneseq
        %v702 = vshrl.u32 %v701, 7
        %v703 = vsub.s32 %v700, %v702
        %v704 = vrot.slane %v676, %v703
        %v705 = vcombine.high %v683, %v683
        %v706 = vcombine.high %v690, %v690
        %v707 = vcombine.high %v697, %v697
        %v708 = vcombine.high %v704, %v704
        %v709 = vlaneseq
        %v710 = vshrl.u32 %v709, 7
        %v711 = vsub.s32 0, %v710
        %v712 = vrot.slane %v634, %v711
        %v713 = vlaneseq
        %v714 = vshrl.u32 %v713, 7
        %v715 = vsub.s32 0, %v714
        %v716 = vrot.slane %v648, %v715
        %v717 = vlaneseq
        %v718 = vshrl.u32 %v717, 7
        %v719 = vsub.s32 0, %v718
        %v720 = vrot.slane %v656, %v719
        %v721 = vlaneseq
        %v722 = vshrl.u32 %v721, 7
        %v723 = vsub.s32 0, %v722
        %v724 = vrot.slane %v658, %v723
        %v725 = vlaneseq
        %v726 = vshrl.u32 %v725, 7
        %v727 = vsub.s32 0, %v726
        %v728 = vrot.slane %v641, %v727
        %v729 = vlaneseq
        %v730 = vshrl.u32 %v729, 7
        %v731 = vsub.s32 0, %v730
        %v732 = vrot.slane %v655, %v731
        %v733 = vlaneseq
        %v734 = vshrl.u32 %v733, 7
        %v735 = vsub.s32 0, %v734
        %v736 = vrot.slane %v657, %v735
        %v737 = vlaneseq
        %v738 = vshrl.u32 %v737, 7
        %v739 = vsub.s32 0, %v738
        %v740 = vrot.slane %v659, %v739
        %v741 = vlaneseq
        %v742 = vshrl.u32 %v741, 7
        %v743 = vsub.s32 0, %v742
        %v744 = vrot.slane %v683, %v743
        %v745 = vlaneseq
        %v746 = vshrl.u32 %v745, 7
        %v747 = vsub.s32 0, %v746
        %v748 = vrot.slane %v697, %v747
        %v749 = vlaneseq
        %v750 = vshrl.u32 %v749, 7
        %v751 = vsub.s32 0, %v750
        %v752 = vrot.slane %v705, %v751
        %v753 = vlaneseq
        %v754 = vshrl.u32 %v753, 7
        %v755 = vsub.s32 0, %v754
        %v756 = vrot.slane %v707, %v755
        %v757 = vlaneseq
        %v758 = vshrl.u32 %v757, 7
        %v759 = vsub.s32 0, %v758
        %v760 = vrot.slane %v690, %v759
        %v761 = vlaneseq
        %v762 = vshrl.u32 %v761, 7
        %v763 = vsub.s32 0, %v762
        %v764 = vrot.slane %v704, %v763
        %v765 = vlaneseq
        %v766 = vshrl.u32 %v765, 7
        %v767 = vsub.s32 0, %v766
        %v768 = vrot.slane %v706, %v767
        %v769 = vlaneseq
        %v770 = vshrl.u32 %v769, 7
        %v771 = vsub.s32 0, %v770
        %v772 = vrot.slane %v708, %v771
        %v789 = vmul.f32 %v712, %v385
        %v790 = vmul.f32 %v712, %v386
        %v791 = vmul.f32 %v716, %v385
        %v792 = vmul.f32 %v716, %v386
        %v793 = vmul.f32 %v720, %v385
        %v794 = vmul.f32 %v720, %v386
        %v795 = vmul.f32 %v724, %v385
        %v796 = vmul.f32 %v724, %v386
        %v797 = vmul.f32 %v728, %v385
        %v798 = vmul.f32 %v728, %v386
        %v799 = vmul.f32 %v732, %v385
        %v800 = vmul.f32 %v732, %v386
        %v801 = vmul.f32 %v736, %v385
        %v802 = vmul.f32 %v736, %v386
        %v803 = vmul.f32 %v740, %v385
        %v804 = vmul.f32 %v740, %v386
        %v805 = vmul.f32 %v744, %v385
        %v806 = vmul.f32 %v744, %v386
        %v807 = vmul.f32 %v748, %v385
        %v808 = vmul.f32 %v748, %v386
        %v809 = vmul.f32 %v752, %v385
        %v810 = vmul.f32 %v752, %v386
        %v811 = vmul.f32 %v756, %v385
        %v812 = vmul.f32 %v756, %v386
        %v813 = vmul.f32 %v760, %v385
        %v814 = vmul.f32 %v760, %v386
        %v815 = vmul.f32 %v764, %v385
        %v816 = vmul.f32 %v764, %v386
        %v817 = vmul.f32 %v768, %v385
        %v818 = vmul.f32 %v768, %v386
        %v819 = vmul.f32 %v772, %v385
        %v820 = vmul.f32 %v772, %v386
        %v821 = vadd.f32 %v577, %v789
        %v822 = vadd.f32 %v578, %v790
        %v823 = vadd.f32 %v579, %v791
        %v824 = vadd.f32 %v580, %v792
        %v825 = vadd.f32 %v581, %v793
        %v826 = vadd.f32 %v582, %v794
        %v827 = vadd.f32 %v583, %v795
        %v828 = vadd.f32 %v584, %v796
        %v829 = vadd.f32 %v585, %v797
        %v830 = vadd.f32 %v586, %v798
        %v831 = vadd.f32 %v587, %v799
        %v832 = vadd.f32 %v588, %v800
        %v833 = vadd.f32 %v589, %v801
        %v834 = vadd.f32 %v590, %v802
        %v835 = vadd.f32 %v591, %v803
        %v836 = vadd.f32 %v592, %v804
        %v837 = vadd.f32 %v593, %v805
        %v838 = vadd.f32 %v594, %v806
        %v839 = vadd.f32 %v595, %v807
        %v840 = vadd.f32 %v596, %v808
        %v841 = vadd.f32 %v597, %v809
        %v842 = vadd.f32 %v598, %v810
        %v843 = vadd.f32 %v599, %v811
        %v844 = vadd.f32 %v600, %v812
        %v845 = vadd.f32 %v601, %v813
        %v846 = vadd.f32 %v602, %v814
        %v847 = vadd.f32 %v603, %v815
        %v848 = vadd.f32 %v604, %v816
        %v849 = vadd.f32 %v605, %v817
        %v850 = vadd.f32 %v606, %v818
        %v851 = vadd.f32 %v607, %v819
        %v852 = vadd.f32 %v608, %v820
        %v853 = vand.u32 2147483647, %v821
        %v854 = vand.u32 2147483647, %v822
        %v855 = vand.u32 2147483647, %v823
        %v856 = vand.u32 2147483647, %v824
        %v857 = vand.u32 2147483647, %v825
        %v858 = vand.u32 2147483647, %v826
        %v859 = vand.u32 2147483647, %v827
        %v860 = vand.u32 2147483647, %v828
        %v861 = vand.u32 2147483647, %v829
        %v862 = vand.u32 2147483647, %v830
        %v863 = vand.u32 2147483647, %v831
        %v864 = vand.u32 2147483647, %v832
        %v865 = vand.u32 2147483647, %v833
        %v866 = vand.u32 2147483647, %v834
        %v867 = vand.u32 2147483647, %v835
        %v868 = vand.u32 2147483647, %v836
        %v869 = vand.u32 2147483647, %v837
        %v870 = vand.u32 2147483647, %v838
        %v871 = vand.u32 2147483647, %v839
        %v872 = vand.u32 2147483647, %v840
        %v873 = vand.u32 2147483647, %v841
        %v874 = vand.u32 2147483647, %v842
        %v875 = vand.u32 2147483647, %v843
        %v876 = vand.u32 2147483647, %v844
        %v877 = vand.u32 2147483647, %v845
        %v878 = vand.u32 2147483647, %v846
        %v879 = vand.u32 2147483647, %v847
        %v880 = vand.u32 2147483647, %v848
        %v881 = vand.u32 2147483647, %v849
        %v882 = vand.u32 2147483647, %v850
        %v883 = vand.u32 2147483647, %v851
        %v884 = vand.u32 2147483647, %v852
        %v885 = vrsqrt.pop %v853
        %v886 = vmul.f32 %v853, %v885
        %vm887 = vcmp.eq.f32.partialorder %v853, inf
        %v888 = vsel %vm887, %v853, %v886
        %vm889 = vcmp.eq.f32.partialorder %v853, 0.0
        %v890 = vand.u32 %v853, 2147483648
        %v891 = vsel %vm889, %v890, %v888
        %v892 = vrsqrt.pop %v854
        %v893 = vmul.f32 %v854, %v892
        %vm894 = vcmp.eq.f32.partialorder %v854, inf
        %v895 = vsel %vm894, %v854, %v893
        %vm896 = vcmp.eq.f32.partialorder %v854, 0.0
        %v897 = vand.u32 %v854, 2147483648
        %v898 = vsel %vm896, %v897, %v895
        %v899 = vrsqrt.pop %v855
        %v900 = vmul.f32 %v855, %v899
        %vm901 = vcmp.eq.f32.partialorder %v855, inf
        %v902 = vsel %vm901, %v855, %v900
        %vm903 = vcmp.eq.f32.partialorder %v855, 0.0
        %v904 = vand.u32 %v855, 2147483648
        %v905 = vsel %vm903, %v904, %v902
        %v906 = vrsqrt.pop %v856
        %v907 = vmul.f32 %v856, %v906
        %vm908 = vcmp.eq.f32.partialorder %v856, inf
        %v909 = vsel %vm908, %v856, %v907
        %vm910 = vcmp.eq.f32.partialorder %v856, 0.0
        %v911 = vand.u32 %v856, 2147483648
        %v912 = vsel %vm910, %v911, %v909
        %v913 = vrsqrt.pop %v857
        %v914 = vmul.f32 %v857, %v913
        %vm915 = vcmp.eq.f32.partialorder %v857, inf
        %v916 = vsel %vm915, %v857, %v914
        %vm917 = vcmp.eq.f32.partialorder %v857, 0.0
        %v918 = vand.u32 %v857, 2147483648
        %v919 = vsel %vm917, %v918, %v916
        %v920 = vrsqrt.pop %v858
        %v921 = vmul.f32 %v858, %v920
        %vm922 = vcmp.eq.f32.partialorder %v858, inf
        %v923 = vsel %vm922, %v858, %v921
        %vm924 = vcmp.eq.f32.partialorder %v858, 0.0
        %v925 = vand.u32 %v858, 2147483648
        %v926 = vsel %vm924, %v925, %v923
        %v927 = vrsqrt.pop %v859
        %v928 = vmul.f32 %v859, %v927
        %vm929 = vcmp.eq.f32.partialorder %v859, inf
        %v930 = vsel %vm929, %v859, %v928
        %vm931 = vcmp.eq.f32.partialorder %v859, 0.0
        %v932 = vand.u32 %v859, 2147483648
        %v933 = vsel %vm931, %v932, %v930
        %v934 = vrsqrt.pop %v860
        %v935 = vmul.f32 %v860, %v934
        %vm936 = vcmp.eq.f32.partialorder %v860, inf
        %v937 = vsel %vm936, %v860, %v935
        %vm938 = vcmp.eq.f32.partialorder %v860, 0.0
        %v939 = vand.u32 %v860, 2147483648
        %v940 = vsel %vm938, %v939, %v937
        %v941 = vrsqrt.pop %v861
        %v942 = vmul.f32 %v861, %v941
        %vm943 = vcmp.eq.f32.partialorder %v861, inf
        %v944 = vsel %vm943, %v861, %v942
        %vm945 = vcmp.eq.f32.partialorder %v861, 0.0
        %v946 = vand.u32 %v861, 2147483648
        %v947 = vsel %vm945, %v946, %v944
        %v948 = vrsqrt.pop %v862
        %v949 = vmul.f32 %v862, %v948
        %vm950 = vcmp.eq.f32.partialorder %v862, inf
        %v951 = vsel %vm950, %v862, %v949
        %vm952 = vcmp.eq.f32.partialorder %v862, 0.0
        %v953 = vand.u32 %v862, 2147483648
        %v954 = vsel %vm952, %v953, %v951
        %v955 = vrsqrt.pop %v863
        %v956 = vmul.f32 %v863, %v955
        %vm957 = vcmp.eq.f32.partialorder %v863, inf
        %v958 = vsel %vm957, %v863, %v956
        %vm959 = vcmp.eq.f32.partialorder %v863, 0.0
        %v960 = vand.u32 %v863, 2147483648
        %v961 = vsel %vm959, %v960, %v958
        %v962 = vrsqrt.pop %v864
        %v963 = vmul.f32 %v864, %v962
        %vm964 = vcmp.eq.f32.partialorder %v864, inf
        %v965 = vsel %vm964, %v864, %v963
        %vm966 = vcmp.eq.f32.partialorder %v864, 0.0
        %v967 = vand.u32 %v864, 2147483648
        %v968 = vsel %vm966, %v967, %v965
        %v969 = vrsqrt.pop %v865
        %v970 = vmul.f32 %v865, %v969
        %vm971 = vcmp.eq.f32.partialorder %v865, inf
        %v972 = vsel %vm971, %v865, %v970
        %vm973 = vcmp.eq.f32.partialorder %v865, 0.0
        %v974 = vand.u32 %v865, 2147483648
        %v975 = vsel %vm973, %v974, %v972
        %v976 = vrsqrt.pop %v866
        %v977 = vmul.f32 %v866, %v976
        %vm978 = vcmp.eq.f32.partialorder %v866, inf
        %v979 = vsel %vm978, %v866, %v977
        %vm980 = vcmp.eq.f32.partialorder %v866, 0.0
        %v981 = vand.u32 %v866, 2147483648
        %v982 = vsel %vm980, %v981, %v979
        %v983 = vrsqrt.pop %v867
        %v984 = vmul.f32 %v867, %v983
        %vm985 = vcmp.eq.f32.partialorder %v867, inf
        %v986 = vsel %vm985, %v867, %v984
        %vm987 = vcmp.eq.f32.partialorder %v867, 0.0
        %v988 = vand.u32 %v867, 2147483648
        %v989 = vsel %vm987, %v988, %v986
        %v990 = vrsqrt.pop %v868
        %v991 = vmul.f32 %v868, %v990
        %vm992 = vcmp.eq.f32.partialorder %v868, inf
        %v993 = vsel %vm992, %v868, %v991
        %vm994 = vcmp.eq.f32.partialorder %v868, 0.0
        %v995 = vand.u32 %v868, 2147483648
        %v996 = vsel %vm994, %v995, %v993
        %v997 = vrsqrt.pop %v869
        %v998 = vmul.f32 %v869, %v997
        %vm999 = vcmp.eq.f32.partialorder %v869, inf
        %v1000 = vsel %vm999, %v869, %v998
        %vm1001 = vcmp.eq.f32.partialorder %v869, 0.0
        %v1002 = vand.u32 %v869, 2147483648
        %v1003 = vsel %vm1001, %v1002, %v1000
        %v1004 = vrsqrt.pop %v870
        %v1005 = vmul.f32 %v870, %v1004
        %vm1006 = vcmp.eq.f32.partialorder %v870, inf
        %v1007 = vsel %vm1006, %v870, %v1005
        %vm1008 = vcmp.eq.f32.partialorder %v870, 0.0
        %v1009 = vand.u32 %v870, 2147483648
        %v1010 = vsel %vm1008, %v1009, %v1007
        %v1011 = vrsqrt.pop %v871
        %v1012 = vmul.f32 %v871, %v1011
        %vm1013 = vcmp.eq.f32.partialorder %v871, inf
        %v1014 = vsel %vm1013, %v871, %v1012
        %vm1015 = vcmp.eq.f32.partialorder %v871, 0.0
        %v1016 = vand.u32 %v871, 2147483648
        %v1017 = vsel %vm1015, %v1016, %v1014
        %v1018 = vrsqrt.pop %v872
        %v1019 = vmul.f32 %v872, %v1018
        %vm1020 = vcmp.eq.f32.partialorder %v872, inf
        %v1021 = vsel %vm1020, %v872, %v1019
        %vm1022 = vcmp.eq.f32.partialorder %v872, 0.0
        %v1023 = vand.u32 %v872, 2147483648
        %v1024 = vsel %vm1022, %v1023, %v1021
        %v1025 = vrsqrt.pop %v873
        %v1026 = vmul.f32 %v873, %v1025
        %vm1027 = vcmp.eq.f32.partialorder %v873, inf
        %v1028 = vsel %vm1027, %v873, %v1026
        %vm1029 = vcmp.eq.f32.partialorder %v873, 0.0
        %v1030 = vand.u32 %v873, 2147483648
        %v1031 = vsel %vm1029, %v1030, %v1028
        %v1032 = vrsqrt.pop %v874
        %v1033 = vmul.f32 %v874, %v1032
        %vm1034 = vcmp.eq.f32.partialorder %v874, inf
        %v1035 = vsel %vm1034, %v874, %v1033
        %vm1036 = vcmp.eq.f32.partialorder %v874, 0.0
        %v1037 = vand.u32 %v874, 2147483648
        %v1038 = vsel %vm1036, %v1037, %v1035
        %v1039 = vrsqrt.pop %v875
        %v1040 = vmul.f32 %v875, %v1039
        %vm1041 = vcmp.eq.f32.partialorder %v875, inf
        %v1042 = vsel %vm1041, %v875, %v1040
        %vm1043 = vcmp.eq.f32.partialorder %v875, 0.0
        %v1044 = vand.u32 %v875, 2147483648
        %v1045 = vsel %vm1043, %v1044, %v1042
        %v1046 = vrsqrt.pop %v876
        %v1047 = vmul.f32 %v876, %v1046
        %vm1048 = vcmp.eq.f32.partialorder %v876, inf
        %v1049 = vsel %vm1048, %v876, %v1047
        %vm1050 = vcmp.eq.f32.partialorder %v876, 0.0
        %v1051 = vand.u32 %v876, 2147483648
        %v1052 = vsel %vm1050, %v1051, %v1049
        %v1053 = vrsqrt.pop %v877
        %v1054 = vmul.f32 %v877, %v1053
        %vm1055 = vcmp.eq.f32.partialorder %v877, inf
        %v1056 = vsel %vm1055, %v877, %v1054
        %vm1057 = vcmp.eq.f32.partialorder %v877, 0.0
        %v1058 = vand.u32 %v877, 2147483648
        %v1059 = vsel %vm1057, %v1058, %v1056
        %v1060 = vrsqrt.pop %v878
        %v1061 = vmul.f32 %v878, %v1060
        %vm1062 = vcmp.eq.f32.partialorder %v878, inf
        %v1063 = vsel %vm1062, %v878, %v1061
        %vm1064 = vcmp.eq.f32.partialorder %v878, 0.0
        %v1065 = vand.u32 %v878, 2147483648
        %v1066 = vsel %vm1064, %v1065, %v1063
        %v1067 = vrsqrt.pop %v879
        %v1068 = vmul.f32 %v879, %v1067
        %vm1069 = vcmp.eq.f32.partialorder %v879, inf
        %v1070 = vsel %vm1069, %v879, %v1068
        %vm1071 = vcmp.eq.f32.partialorder %v879, 0.0
        %v1072 = vand.u32 %v879, 2147483648
        %v1073 = vsel %vm1071, %v1072, %v1070
        %v1074 = vrsqrt.pop %v880
        %v1075 = vmul.f32 %v880, %v1074
        %vm1076 = vcmp.eq.f32.partialorder %v880, inf
        %v1077 = vsel %vm1076, %v880, %v1075
        %vm1078 = vcmp.eq.f32.partialorder %v880, 0.0
        %v1079 = vand.u32 %v880, 2147483648
        %v1080 = vsel %vm1078, %v1079, %v1077
        %v1081 = vrsqrt.pop %v881
        %v1082 = vmul.f32 %v881, %v1081
        %vm1083 = vcmp.eq.f32.partialorder %v881, inf
        %v1084 = vsel %vm1083, %v881, %v1082
        %vm1085 = vcmp.eq.f32.partialorder %v881, 0.0
        %v1086 = vand.u32 %v881, 2147483648
        %v1087 = vsel %vm1085, %v1086, %v1084
        %v1088 = vrsqrt.pop %v882
        %v1089 = vmul.f32 %v882, %v1088
        %vm1090 = vcmp.eq.f32.partialorder %v882, inf
        %v1091 = vsel %vm1090, %v882, %v1089
        %vm1092 = vcmp.eq.f32.partialorder %v882, 0.0
        %v1093 = vand.u32 %v882, 2147483648
        %v1094 = vsel %vm1092, %v1093, %v1091
        %v1095 = vrsqrt.pop %v883
        %v1096 = vmul.f32 %v883, %v1095
        %vm1097 = vcmp.eq.f32.partialorder %v883, inf
        %v1098 = vsel %vm1097, %v883, %v1096
        %vm1099 = vcmp.eq.f32.partialorder %v883, 0.0
        %v1100 = vand.u32 %v883, 2147483648
        %v1101 = vsel %vm1099, %v1100, %v1098
        %v1102 = vrsqrt.pop %v884
        %v1103 = vmul.f32 %v884, %v1102
        %vm1104 = vcmp.eq.f32.partialorder %v884, inf
        %v1105 = vsel %vm1104, %v884, %v1103
        %vm1106 = vcmp.eq.f32.partialorder %v884, 0.0
        %v1107 = vand.u32 %v884, 2147483648
        %v1108 = vsel %vm1106, %v1107, %v1105
        %vm1109 = vcmp.ge.f32.partialorder %v821, 0.0
        %vm1110 = vcmp.ge.f32.partialorder %v822, 0.0
        %vm1111 = vcmp.ge.f32.partialorder %v823, 0.0
        %vm1112 = vcmp.ge.f32.partialorder %v824, 0.0
        %vm1113 = vcmp.ge.f32.partialorder %v825, 0.0
        %vm1114 = vcmp.ge.f32.partialorder %v826, 0.0
        %vm1115 = vcmp.ge.f32.partialorder %v827, 0.0
        %vm1116 = vcmp.ge.f32.partialorder %v828, 0.0
        %vm1117 = vcmp.ge.f32.partialorder %v829, 0.0
        %vm1118 = vcmp.ge.f32.partialorder %v830, 0.0
        %vm1119 = vcmp.ge.f32.partialorder %v831, 0.0
        %vm1120 = vcmp.ge.f32.partialorder %v832, 0.0
        %vm1121 = vcmp.ge.f32.partialorder %v833, 0.0
        %vm1122 = vcmp.ge.f32.partialorder %v834, 0.0
        %vm1123 = vcmp.ge.f32.partialorder %v835, 0.0
        %vm1124 = vcmp.ge.f32.partialorder %v836, 0.0
        %vm1125 = vcmp.ge.f32.partialorder %v837, 0.0
        %vm1126 = vcmp.ge.f32.partialorder %v838, 0.0
        %vm1127 = vcmp.ge.f32.partialorder %v839, 0.0
        %vm1128 = vcmp.ge.f32.partialorder %v840, 0.0
        %vm1129 = vcmp.ge.f32.partialorder %v841, 0.0
        %vm1130 = vcmp.ge.f32.partialorder %v842, 0.0
        %vm1131 = vcmp.ge.f32.partialorder %v843, 0.0
        %vm1132 = vcmp.ge.f32.partialorder %v844, 0.0
        %vm1133 = vcmp.ge.f32.partialorder %v845, 0.0
        %vm1134 = vcmp.ge.f32.partialorder %v846, 0.0
        %vm1135 = vcmp.ge.f32.partialorder %v847, 0.0
        %vm1136 = vcmp.ge.f32.partialorder %v848, 0.0
        %vm1137 = vcmp.ge.f32.partialorder %v849, 0.0
        %vm1138 = vcmp.ge.f32.partialorder %v850, 0.0
        %vm1139 = vcmp.ge.f32.partialorder %v851, 0.0
        %vm1140 = vcmp.ge.f32.partialorder %v852, 0.0
        %v1141 = vsub.f32 0.0, %v891
        %v1142 = vsub.f32 0.0, %v898
        %v1143 = vsub.f32 0.0, %v905
        %v1144 = vsub.f32 0.0, %v912
        %v1145 = vsub.f32 0.0, %v919
        %v1146 = vsub.f32 0.0, %v926
        %v1147 = vsub.f32 0.0, %v933
        %v1148 = vsub.f32 0.0, %v940
        %v1149 = vsub.f32 0.0, %v947
        %v1150 = vsub.f32 0.0, %v954
        %v1151 = vsub.f32 0.0, %v961
        %v1152 = vsub.f32 0.0, %v968
        %v1153 = vsub.f32 0.0, %v975
        %v1154 = vsub.f32 0.0, %v982
        %v1155 = vsub.f32 0.0, %v989
        %v1156 = vsub.f32 0.0, %v996
        %v1157 = vsub.f32 0.0, %v1003
        %v1158 = vsub.f32 0.0, %v1010
        %v1159 = vsub.f32 0.0, %v1017
        %v1160 = vsub.f32 0.0, %v1024
        %v1161 = vsub.f32 0.0, %v1031
        %v1162 = vsub.f32 0.0, %v1038
        %v1163 = vsub.f32 0.0, %v1045
        %v1164 = vsub.f32 0.0, %v1052
        %v1165 = vsub.f32 0.0, %v1059
        %v1166 = vsub.f32 0.0, %v1066
        %v1167 = vsub.f32 0.0, %v1073
        %v1168 = vsub.f32 0.0, %v1080
        %v1169 = vsub.f32 0.0, %v1087
        %v1170 = vsub.f32 0.0, %v1094
        %v1171 = vsub.f32 0.0, %v1101
        %v1172 = vsub.f32 0.0, %v1108
        %v1173 = vsel %vm1109, %v891, %v1141
        %v1174 = vsel %vm1110, %v898, %v1142
        %v1175 = vsel %vm1111, %v905, %v1143
        %v1176 = vsel %vm1112, %v912, %v1144
        %v1177 = vsel %vm1113, %v919, %v1145
        %v1178 = vsel %vm1114, %v926, %v1146
        %v1179 = vsel %vm1115, %v933, %v1147
        %v1180 = vsel %vm1116, %v940, %v1148
        %v1181 = vsel %vm1117, %v947, %v1149
        %v1182 = vsel %vm1118, %v954, %v1150
        %v1183 = vsel %vm1119, %v961, %v1151
        %v1184 = vsel %vm1120, %v968, %v1152
        %v1185 = vsel %vm1121, %v975, %v1153
        %v1186 = vsel %vm1122, %v982, %v1154
        %v1187 = vsel %vm1123, %v989, %v1155
        %v1188 = vsel %vm1124, %v996, %v1156
        %v1189 = vsel %vm1125, %v1003, %v1157
        %v1190 = vsel %vm1126, %v1010, %v1158
        %v1191 = vsel %vm1127, %v1017, %v1159
        %v1192 = vsel %vm1128, %v1024, %v1160
        %v1193 = vsel %vm1129, %v1031, %v1161
        %v1194 = vsel %vm1130, %v1038, %v1162
        %v1195 = vsel %vm1131, %v1045, %v1163
        %v1196 = vsel %vm1132, %v1052, %v1164
        %v1197 = vsel %vm1133, %v1059, %v1165
        %v1198 = vsel %vm1134, %v1066, %v1166
        %v1199 = vsel %vm1135, %v1073, %v1167
        %v1200 = vsel %vm1136, %v1080, %v1168
        %v1201 = vsel %vm1137, %v1087, %v1169
        %v1202 = vsel %vm1138, %v1094, %v1170
        %v1203 = vsel %vm1139, %v1101, %v1171
        %v1204 = vsel %vm1140, %v1108, %v1172
        %v1205 = vadd.f32 %v891, %v905
        %v1206 = vadd.f32 %v1205, %v919
        %v1207 = vadd.f32 %v1206, %v933
        %v1208 = vadd.f32 %v1207, %v947
        %v1209 = vadd.f32 %v1208, %v961
        %v1210 = vadd.f32 %v1209, %v975
        %v1211 = vadd.f32 %v1210, %v989
        %v1212 = vadd.f32 %v1211, %v1003
        %v1213 = vadd.f32 %v1212, %v1017
        %v1214 = vadd.f32 %v1213, %v1031
        %v1215 = vadd.f32 %v1214, %v1045
        %v1216 = vadd.f32 %v1215, %v1059
        %v1217 = vadd.f32 %v1216, %v1073
        %v1218 = vadd.f32 %v1217, %v1087
        %v1219 = vadd.f32 %v1218, %v1101
        %v1220 = vadd.f32 %v898, %v912
        %v1221 = vadd.f32 %v1220, %v926
        %v1222 = vadd.f32 %v1221, %v940
        %v1223 = vadd.f32 %v1222, %v954
        %v1224 = vadd.f32 %v1223, %v968
        %v1225 = vadd.f32 %v1224, %v982
        %v1226 = vadd.f32 %v1225, %v996
        %v1227 = vadd.f32 %v1226, %v1010
        %v1228 = vadd.f32 %v1227, %v1024
        %v1229 = vadd.f32 %v1228, %v1038
        %v1230 = vadd.f32 %v1229, %v1052
        %v1231 = vadd.f32 %v1230, %v1066
        %v1232 = vadd.f32 %v1231, %v1080
        %v1233 = vadd.f32 %v1232, %v1094
        %v1234 = vadd.f32 %v1233, %v1108
        %v1235 = vadd.f32 %v1219, 1e-07
        %v1236 = vadd.f32 %v1234, 1e-07
        %v1237 = vrcp.pop %v1235
        %v1238 = vrcp.pop %v1236
        %v1239 = vmul.f32 %v500, %v1173
        %v1240 = vmul.f32 %v500, %v1174
        %v1241 = vmul.f32 %v504, %v1175
        %v1242 = vmul.f32 %v504, %v1176
        %v1243 = vmul.f32 %v508, %v1177
        %v1244 = vmul.f32 %v508, %v1178
        %v1245 = vmul.f32 %v512, %v1179
        %v1246 = vmul.f32 %v512, %v1180
        %v1247 = vmul.f32 %v516, %v1181
        %v1248 = vmul.f32 %v516, %v1182
        %v1249 = vmul.f32 %v520, %v1183
        %v1250 = vmul.f32 %v520, %v1184
        %v1251 = vmul.f32 %v524, %v1185
        %v1252 = vmul.f32 %v524, %v1186
        %v1253 = vmul.f32 %v528, %v1187
        %v1254 = vmul.f32 %v528, %v1188
        %v1255 = vmul.f32 %v532, %v1189
        %v1256 = vmul.f32 %v532, %v1190
        %v1257 = vmul.f32 %v536, %v1191
        %v1258 = vmul.f32 %v536, %v1192
        %v1259 = vmul.f32 %v540, %v1193
        %v1260 = vmul.f32 %v540, %v1194
        %v1261 = vmul.f32 %v544, %v1195
        %v1262 = vmul.f32 %v544, %v1196
        %v1263 = vmul.f32 %v548, %v1197
        %v1264 = vmul.f32 %v548, %v1198
        %v1265 = vmul.f32 %v552, %v1199
        %v1266 = vmul.f32 %v552, %v1200
        %v1267 = vmul.f32 %v556, %v1201
        %v1268 = vmul.f32 %v556, %v1202
        %v1269 = vmul.f32 %v560, %v1203
        %v1270 = vmul.f32 %v560, %v1204
        %v1271 = vadd.f32 %v1239, %v1241
        %v1272 = vadd.f32 %v1271, %v1243
        %v1273 = vadd.f32 %v1272, %v1245
        %v1274 = vadd.f32 %v1273, %v1247
        %v1275 = vadd.f32 %v1274, %v1249
        %v1276 = vadd.f32 %v1275, %v1251
        %v1277 = vadd.f32 %v1276, %v1253
        %v1278 = vadd.f32 %v1277, %v1255
        %v1279 = vadd.f32 %v1278, %v1257
        %v1280 = vadd.f32 %v1279, %v1259
        %v1281 = vadd.f32 %v1280, %v1261
        %v1282 = vadd.f32 %v1281, %v1263
        %v1283 = vadd.f32 %v1282, %v1265
        %v1284 = vadd.f32 %v1283, %v1267
        %v1285 = vadd.f32 %v1284, %v1269
        %v1286 = vadd.f32 %v1240, %v1242
        %v1287 = vadd.f32 %v1286, %v1244
        %v1288 = vadd.f32 %v1287, %v1246
        %v1289 = vadd.f32 %v1288, %v1248
        %v1290 = vadd.f32 %v1289, %v1250
        %v1291 = vadd.f32 %v1290, %v1252
        %v1292 = vadd.f32 %v1291, %v1254
        %v1293 = vadd.f32 %v1292, %v1256
        %v1294 = vadd.f32 %v1293, %v1258
        %v1295 = vadd.f32 %v1294, %v1260
        %v1296 = vadd.f32 %v1295, %v1262
        %v1297 = vadd.f32 %v1296, %v1264
        %v1298 = vadd.f32 %v1297, %v1266
        %v1299 = vadd.f32 %v1298, %v1268
        %v1300 = vadd.f32 %v1299, %v1270
        %v1301 = vmul.f32 %v1237, %v1285
        %v1302 = vmul.f32 %v1238, %v1300
        %s1303 = sld [smem:[#allocation4]]
        %v1304 = vstv %s1303
        %v1305 = vmul.f32 %v1304, %v1301
        %v1306 = vmul.f32 %v1304, %v1302
        %s1307 = sld [smem:[#allocation4 + $0x80]]
        %v1308 = vstv %s1307
        %v1309 = vadd.f32 %v1305, %v1308
        %v1310 = vadd.f32 %v1306, %v1308
        %v1311 = vand.u32 2147483647, %v1309
        %v1312 = vand.u32 2147483647, %v1310
        %v1313 = vadd.f32 %v1311, 1.0
        %v1314 = vadd.f32 %v1312, 1.0
        %v1315 = vrcp.pop %v1313
        %v1316 = vrcp.pop %v1314
        %v1317 = vmul.f32 %v1309, %v1315
        %v1318 = vmul.f32 %v1310, %v1316
        %s1319 = sld [smem:[#allocation4 + $0x1]]
        %v1320 = vstv %s1319
        %v1321 = vmul.f32 %v1320, %v1301
        %v1322 = vmul.f32 %v1320, %v1302
        %s1323 = sld [smem:[#allocation4 + $0x81]]
        %v1324 = vstv %s1323
        %v1325 = vadd.f32 %v1321, %v1324
        %v1326 = vadd.f32 %v1322, %v1324
        %v1327 = vand.u32 2147483647, %v1325
        %v1328 = vand.u32 2147483647, %v1326
        %v1329 = vadd.f32 %v1327, 1.0
        %v1330 = vadd.f32 %v1328, 1.0
        %v1331 = vrcp.pop %v1329
        %v1332 = vrcp.pop %v1330
        %v1333 = vmul.f32 %v1325, %v1331
        %v1334 = vmul.f32 %v1326, %v1332
        %v1337 = vcombine.high %v1317, %v1317
        %v1339 = vunpack.c.l.s4 1966171168
        %v1340 = vunpack.c.0.s8 %v1339
        %v1341 = vlaneseq
        %v1342 = vshrl.u32 %v1341, 7
        %v1343 = vsub.s32 %v1340, %v1342
        %v1344 = vrot.slane %v1317, %v1343
        %v1346 = vunpack.c.l.s4 1966171168
        %v1347 = vunpack.c.0.s8 %v1346
        %v1348 = vlaneseq
        %v1349 = vshrl.u32 %v1348, 7
        %v1350 = vsub.s32 %v1347, %v1349
        %v1351 = vrot.slane %v1337, %v1350
        %v1352 = vcombine.high %v1344, %v1344
        %v1353 = vcombine.high %v1351, %v1351
        %v1355 = vunpack.c.l.s4 1966171168
        %v1356 = vunpack.c.0.s8 %v1355
        %v1357 = vlaneseq
        %v1358 = vshrl.u32 %v1357, 7
        %v1359 = vsub.s32 %v1356, %v1358
        %v1360 = vrot.slane %v1344, %v1359
        %v1362 = vunpack.c.l.s4 1966171168
        %v1363 = vunpack.c.0.s8 %v1362
        %v1364 = vlaneseq
        %v1365 = vshrl.u32 %v1364, 7
        %v1366 = vsub.s32 %v1363, %v1365
        %v1367 = vrot.slane %v1351, %v1366
        %v1369 = vunpack.c.l.s4 1966171168
        %v1370 = vunpack.c.0.s8 %v1369
        %v1371 = vlaneseq
        %v1372 = vshrl.u32 %v1371, 7
        %v1373 = vsub.s32 %v1370, %v1372
        %v1374 = vrot.slane %v1352, %v1373
        %v1376 = vunpack.c.l.s4 1966171168
        %v1377 = vunpack.c.0.s8 %v1376
        %v1378 = vlaneseq
        %v1379 = vshrl.u32 %v1378, 7
        %v1380 = vsub.s32 %v1377, %v1379
        %v1381 = vrot.slane %v1353, %v1380
        %v1382 = vcombine.high %v1360, %v1360
        %v1383 = vcombine.high %v1367, %v1367
        %v1384 = vcombine.high %v1374, %v1374
        %v1385 = vcombine.high %v1381, %v1381
        %v1386 = vcombine.high %v1318, %v1318
        %v1388 = vunpack.c.l.s4 1966171168
        %v1389 = vunpack.c.0.s8 %v1388
        %v1390 = vlaneseq
        %v1391 = vshrl.u32 %v1390, 7
        %v1392 = vsub.s32 %v1389, %v1391
        %v1393 = vrot.slane %v1318, %v1392
        %v1395 = vunpack.c.l.s4 1966171168
        %v1396 = vunpack.c.0.s8 %v1395
        %v1397 = vlaneseq
        %v1398 = vshrl.u32 %v1397, 7
        %v1399 = vsub.s32 %v1396, %v1398
        %v1400 = vrot.slane %v1386, %v1399
        %v1401 = vcombine.high %v1393, %v1393
        %v1402 = vcombine.high %v1400, %v1400
        %v1404 = vunpack.c.l.s4 1966171168
        %v1405 = vunpack.c.0.s8 %v1404
        %v1406 = vlaneseq
        %v1407 = vshrl.u32 %v1406, 7
        %v1408 = vsub.s32 %v1405, %v1407
        %v1409 = vrot.slane %v1393, %v1408
        %v1411 = vunpack.c.l.s4 1966171168
        %v1412 = vunpack.c.0.s8 %v1411
        %v1413 = vlaneseq
        %v1414 = vshrl.u32 %v1413, 7
        %v1415 = vsub.s32 %v1412, %v1414
        %v1416 = vrot.slane %v1400, %v1415
        %v1418 = vunpack.c.l.s4 1966171168
        %v1419 = vunpack.c.0.s8 %v1418
        %v1420 = vlaneseq
        %v1421 = vshrl.u32 %v1420, 7
        %v1422 = vsub.s32 %v1419, %v1421
        %v1423 = vrot.slane %v1401, %v1422
        %v1425 = vunpack.c.l.s4 1966171168
        %v1426 = vunpack.c.0.s8 %v1425
        %v1427 = vlaneseq
        %v1428 = vshrl.u32 %v1427, 7
        %v1429 = vsub.s32 %v1426, %v1428
        %v1430 = vrot.slane %v1402, %v1429
        %v1431 = vcombine.high %v1409, %v1409
        %v1432 = vcombine.high %v1416, %v1416
        %v1433 = vcombine.high %v1423, %v1423
        %v1434 = vcombine.high %v1430, %v1430
        %v1435 = vlaneseq
        %v1436 = vshrl.u32 %v1435, 7
        %v1437 = vsub.s32 0, %v1436
        %v1438 = vrot.slane %v1360, %v1437
        %v1439 = vlaneseq
        %v1440 = vshrl.u32 %v1439, 7
        %v1441 = vsub.s32 0, %v1440
        %v1442 = vrot.slane %v1374, %v1441
        %v1443 = vlaneseq
        %v1444 = vshrl.u32 %v1443, 7
        %v1445 = vsub.s32 0, %v1444
        %v1446 = vrot.slane %v1382, %v1445
        %v1447 = vlaneseq
        %v1448 = vshrl.u32 %v1447, 7
        %v1449 = vsub.s32 0, %v1448
        %v1450 = vrot.slane %v1384, %v1449
        %v1451 = vlaneseq
        %v1452 = vshrl.u32 %v1451, 7
        %v1453 = vsub.s32 0, %v1452
        %v1454 = vrot.slane %v1367, %v1453
        %v1455 = vlaneseq
        %v1456 = vshrl.u32 %v1455, 7
        %v1457 = vsub.s32 0, %v1456
        %v1458 = vrot.slane %v1381, %v1457
        %v1459 = vlaneseq
        %v1460 = vshrl.u32 %v1459, 7
        %v1461 = vsub.s32 0, %v1460
        %v1462 = vrot.slane %v1383, %v1461
        %v1463 = vlaneseq
        %v1464 = vshrl.u32 %v1463, 7
        %v1465 = vsub.s32 0, %v1464
        %v1466 = vrot.slane %v1385, %v1465
        %v1467 = vlaneseq
        %v1468 = vshrl.u32 %v1467, 7
        %v1469 = vsub.s32 0, %v1468
        %v1470 = vrot.slane %v1409, %v1469
        %v1471 = vlaneseq
        %v1472 = vshrl.u32 %v1471, 7
        %v1473 = vsub.s32 0, %v1472
        %v1474 = vrot.slane %v1423, %v1473
        %v1475 = vlaneseq
        %v1476 = vshrl.u32 %v1475, 7
        %v1477 = vsub.s32 0, %v1476
        %v1478 = vrot.slane %v1431, %v1477
        %v1479 = vlaneseq
        %v1480 = vshrl.u32 %v1479, 7
        %v1481 = vsub.s32 0, %v1480
        %v1482 = vrot.slane %v1433, %v1481
        %v1483 = vlaneseq
        %v1484 = vshrl.u32 %v1483, 7
        %v1485 = vsub.s32 0, %v1484
        %v1486 = vrot.slane %v1416, %v1485
        %v1487 = vlaneseq
        %v1488 = vshrl.u32 %v1487, 7
        %v1489 = vsub.s32 0, %v1488
        %v1490 = vrot.slane %v1430, %v1489
        %v1491 = vlaneseq
        %v1492 = vshrl.u32 %v1491, 7
        %v1493 = vsub.s32 0, %v1492
        %v1494 = vrot.slane %v1432, %v1493
        %v1495 = vlaneseq
        %v1496 = vshrl.u32 %v1495, 7
        %v1497 = vsub.s32 0, %v1496
        %v1498 = vrot.slane %v1434, %v1497
        %v1515 = vmul.f32 %v1438, %v1173
        %v1516 = vmul.f32 %v1438, %v1174
        %v1517 = vmul.f32 %v1442, %v1175
        %v1518 = vmul.f32 %v1442, %v1176
        %v1519 = vmul.f32 %v1446, %v1177
        %v1520 = vmul.f32 %v1446, %v1178
        %v1521 = vmul.f32 %v1450, %v1179
        %v1522 = vmul.f32 %v1450, %v1180
        %v1523 = vmul.f32 %v1454, %v1181
        %v1524 = vmul.f32 %v1454, %v1182
        %v1525 = vmul.f32 %v1458, %v1183
        %v1526 = vmul.f32 %v1458, %v1184
        %v1527 = vmul.f32 %v1462, %v1185
        %v1528 = vmul.f32 %v1462, %v1186
        %v1529 = vmul.f32 %v1466, %v1187
        %v1530 = vmul.f32 %v1466, %v1188
        %v1531 = vmul.f32 %v1470, %v1189
        %v1532 = vmul.f32 %v1470, %v1190
        %v1533 = vmul.f32 %v1474, %v1191
        %v1534 = vmul.f32 %v1474, %v1192
        %v1535 = vmul.f32 %v1478, %v1193
        %v1536 = vmul.f32 %v1478, %v1194
        %v1537 = vmul.f32 %v1482, %v1195
        %v1538 = vmul.f32 %v1482, %v1196
        %v1539 = vmul.f32 %v1486, %v1197
        %v1540 = vmul.f32 %v1486, %v1198
        %v1541 = vmul.f32 %v1490, %v1199
        %v1542 = vmul.f32 %v1490, %v1200
        %v1543 = vmul.f32 %v1494, %v1201
        %v1544 = vmul.f32 %v1494, %v1202
        %v1545 = vmul.f32 %v1498, %v1203
        %v1546 = vmul.f32 %v1498, %v1204
        %v1547 = vadd.f32 %v1515, %v1517
        %v1548 = vadd.f32 %v1547, %v1519
        %v1549 = vadd.f32 %v1548, %v1521
        %v1550 = vadd.f32 %v1549, %v1523
        %v1551 = vadd.f32 %v1550, %v1525
        %v1552 = vadd.f32 %v1551, %v1527
        %v1553 = vadd.f32 %v1552, %v1529
        %v1554 = vadd.f32 %v1553, %v1531
        %v1555 = vadd.f32 %v1554, %v1533
        %v1556 = vadd.f32 %v1555, %v1535
        %v1557 = vadd.f32 %v1556, %v1537
        %v1558 = vadd.f32 %v1557, %v1539
        %v1559 = vadd.f32 %v1558, %v1541
        %v1560 = vadd.f32 %v1559, %v1543
        %v1561 = vadd.f32 %v1560, %v1545
        %v1562 = vadd.f32 %v1516, %v1518
        %v1563 = vadd.f32 %v1562, %v1520
        %v1564 = vadd.f32 %v1563, %v1522
        %v1565 = vadd.f32 %v1564, %v1524
        %v1566 = vadd.f32 %v1565, %v1526
        %v1567 = vadd.f32 %v1566, %v1528
        %v1568 = vadd.f32 %v1567, %v1530
        %v1569 = vadd.f32 %v1568, %v1532
        %v1570 = vadd.f32 %v1569, %v1534
        %v1571 = vadd.f32 %v1570, %v1536
        %v1572 = vadd.f32 %v1571, %v1538
        %v1573 = vadd.f32 %v1572, %v1540
        %v1574 = vadd.f32 %v1573, %v1542
        %v1575 = vadd.f32 %v1574, %v1544
        %v1576 = vadd.f32 %v1575, %v1546
        %v1577 = vmul.f32 %v1237, %v1561
        %v1578 = vmul.f32 %v1238, %v1576
        %v1581 = vcombine.high %v1333, %v1333
        %v1583 = vunpack.c.l.s4 1966171168
        %v1584 = vunpack.c.0.s8 %v1583
        %v1585 = vlaneseq
        %v1586 = vshrl.u32 %v1585, 7
        %v1587 = vsub.s32 %v1584, %v1586
        %v1588 = vrot.slane %v1333, %v1587
        %v1590 = vunpack.c.l.s4 1966171168
        %v1591 = vunpack.c.0.s8 %v1590
        %v1592 = vlaneseq
        %v1593 = vshrl.u32 %v1592, 7
        %v1594 = vsub.s32 %v1591, %v1593
        %v1595 = vrot.slane %v1581, %v1594
        %v1596 = vcombine.high %v1588, %v1588
        %v1597 = vcombine.high %v1595, %v1595
        %v1599 = vunpack.c.l.s4 1966171168
        %v1600 = vunpack.c.0.s8 %v1599
        %v1601 = vlaneseq
        %v1602 = vshrl.u32 %v1601, 7
        %v1603 = vsub.s32 %v1600, %v1602
        %v1604 = vrot.slane %v1588, %v1603
        %v1606 = vunpack.c.l.s4 1966171168
        %v1607 = vunpack.c.0.s8 %v1606
        %v1608 = vlaneseq
        %v1609 = vshrl.u32 %v1608, 7
        %v1610 = vsub.s32 %v1607, %v1609
        %v1611 = vrot.slane %v1595, %v1610
        %v1613 = vunpack.c.l.s4 1966171168
        %v1614 = vunpack.c.0.s8 %v1613
        %v1615 = vlaneseq
        %v1616 = vshrl.u32 %v1615, 7
        %v1617 = vsub.s32 %v1614, %v1616
        %v1618 = vrot.slane %v1596, %v1617
        %v1620 = vunpack.c.l.s4 1966171168
        %v1621 = vunpack.c.0.s8 %v1620
        %v1622 = vlaneseq
        %v1623 = vshrl.u32 %v1622, 7
        %v1624 = vsub.s32 %v1621, %v1623
        %v1625 = vrot.slane %v1597, %v1624
        %v1626 = vcombine.high %v1604, %v1604
        %v1627 = vcombine.high %v1611, %v1611
        %v1628 = vcombine.high %v1618, %v1618
        %v1629 = vcombine.high %v1625, %v1625
        %v1630 = vcombine.high %v1334, %v1334
        %v1632 = vunpack.c.l.s4 1966171168
        %v1633 = vunpack.c.0.s8 %v1632
        %v1634 = vlaneseq
        %v1635 = vshrl.u32 %v1634, 7
        %v1636 = vsub.s32 %v1633, %v1635
        %v1637 = vrot.slane %v1334, %v1636
        %v1639 = vunpack.c.l.s4 1966171168
        %v1640 = vunpack.c.0.s8 %v1639
        %v1641 = vlaneseq
        %v1642 = vshrl.u32 %v1641, 7
        %v1643 = vsub.s32 %v1640, %v1642
        %v1644 = vrot.slane %v1630, %v1643
        %v1645 = vcombine.high %v1637, %v1637
        %v1646 = vcombine.high %v1644, %v1644
        %v1648 = vunpack.c.l.s4 1966171168
        %v1649 = vunpack.c.0.s8 %v1648
        %v1650 = vlaneseq
        %v1651 = vshrl.u32 %v1650, 7
        %v1652 = vsub.s32 %v1649, %v1651
        %v1653 = vrot.slane %v1637, %v1652
        %v1655 = vunpack.c.l.s4 1966171168
        %v1656 = vunpack.c.0.s8 %v1655
        %v1657 = vlaneseq
        %v1658 = vshrl.u32 %v1657, 7
        %v1659 = vsub.s32 %v1656, %v1658
        %v1660 = vrot.slane %v1644, %v1659
        %v1662 = vunpack.c.l.s4 1966171168
        %v1663 = vunpack.c.0.s8 %v1662
        %v1664 = vlaneseq
        %v1665 = vshrl.u32 %v1664, 7
        %v1666 = vsub.s32 %v1663, %v1665
        %v1667 = vrot.slane %v1645, %v1666
        %v1669 = vunpack.c.l.s4 1966171168
        %v1670 = vunpack.c.0.s8 %v1669
        %v1671 = vlaneseq
        %v1672 = vshrl.u32 %v1671, 7
        %v1673 = vsub.s32 %v1670, %v1672
        %v1674 = vrot.slane %v1646, %v1673
        %v1675 = vcombine.high %v1653, %v1653
        %v1676 = vcombine.high %v1660, %v1660
        %v1677 = vcombine.high %v1667, %v1667
        %v1678 = vcombine.high %v1674, %v1674
        %v1679 = vlaneseq
        %v1680 = vshrl.u32 %v1679, 7
        %v1681 = vsub.s32 0, %v1680
        %v1682 = vrot.slane %v1604, %v1681
        %v1683 = vlaneseq
        %v1684 = vshrl.u32 %v1683, 7
        %v1685 = vsub.s32 0, %v1684
        %v1686 = vrot.slane %v1618, %v1685
        %v1687 = vlaneseq
        %v1688 = vshrl.u32 %v1687, 7
        %v1689 = vsub.s32 0, %v1688
        %v1690 = vrot.slane %v1626, %v1689
        %v1691 = vlaneseq
        %v1692 = vshrl.u32 %v1691, 7
        %v1693 = vsub.s32 0, %v1692
        %v1694 = vrot.slane %v1628, %v1693
        %v1695 = vlaneseq
        %v1696 = vshrl.u32 %v1695, 7
        %v1697 = vsub.s32 0, %v1696
        %v1698 = vrot.slane %v1611, %v1697
        %v1699 = vlaneseq
        %v1700 = vshrl.u32 %v1699, 7
        %v1701 = vsub.s32 0, %v1700
        %v1702 = vrot.slane %v1625, %v1701
        %v1703 = vlaneseq
        %v1704 = vshrl.u32 %v1703, 7
        %v1705 = vsub.s32 0, %v1704
        %v1706 = vrot.slane %v1627, %v1705
        %v1707 = vlaneseq
        %v1708 = vshrl.u32 %v1707, 7
        %v1709 = vsub.s32 0, %v1708
        %v1710 = vrot.slane %v1629, %v1709
        %v1711 = vlaneseq
        %v1712 = vshrl.u32 %v1711, 7
        %v1713 = vsub.s32 0, %v1712
        %v1714 = vrot.slane %v1653, %v1713
        %v1715 = vlaneseq
        %v1716 = vshrl.u32 %v1715, 7
        %v1717 = vsub.s32 0, %v1716
        %v1718 = vrot.slane %v1667, %v1717
        %v1719 = vlaneseq
        %v1720 = vshrl.u32 %v1719, 7
        %v1721 = vsub.s32 0, %v1720
        %v1722 = vrot.slane %v1675, %v1721
        %v1723 = vlaneseq
        %v1724 = vshrl.u32 %v1723, 7
        %v1725 = vsub.s32 0, %v1724
        %v1726 = vrot.slane %v1677, %v1725
        %v1727 = vlaneseq
        %v1728 = vshrl.u32 %v1727, 7
        %v1729 = vsub.s32 0, %v1728
        %v1730 = vrot.slane %v1660, %v1729
        %v1731 = vlaneseq
        %v1732 = vshrl.u32 %v1731, 7
        %v1733 = vsub.s32 0, %v1732
        %v1734 = vrot.slane %v1674, %v1733
        %v1735 = vlaneseq
        %v1736 = vshrl.u32 %v1735, 7
        %v1737 = vsub.s32 0, %v1736
        %v1738 = vrot.slane %v1676, %v1737
        %v1739 = vlaneseq
        %v1740 = vshrl.u32 %v1739, 7
        %v1741 = vsub.s32 0, %v1740
        %v1742 = vrot.slane %v1678, %v1741
        %v1759 = vmul.f32 %v1682, %v1173
        %v1760 = vmul.f32 %v1682, %v1174
        %v1761 = vmul.f32 %v1686, %v1175
        %v1762 = vmul.f32 %v1686, %v1176
        %v1763 = vmul.f32 %v1690, %v1177
        %v1764 = vmul.f32 %v1690, %v1178
        %v1765 = vmul.f32 %v1694, %v1179
        %v1766 = vmul.f32 %v1694, %v1180
        %v1767 = vmul.f32 %v1698, %v1181
        %v1768 = vmul.f32 %v1698, %v1182
        %v1769 = vmul.f32 %v1702, %v1183
        %v1770 = vmul.f32 %v1702, %v1184
        %v1771 = vmul.f32 %v1706, %v1185
        %v1772 = vmul.f32 %v1706, %v1186
        %v1773 = vmul.f32 %v1710, %v1187
        %v1774 = vmul.f32 %v1710, %v1188
        %v1775 = vmul.f32 %v1714, %v1189
        %v1776 = vmul.f32 %v1714, %v1190
        %v1777 = vmul.f32 %v1718, %v1191
        %v1778 = vmul.f32 %v1718, %v1192
        %v1779 = vmul.f32 %v1722, %v1193
        %v1780 = vmul.f32 %v1722, %v1194
        %v1781 = vmul.f32 %v1726, %v1195
        %v1782 = vmul.f32 %v1726, %v1196
        %v1783 = vmul.f32 %v1730, %v1197
        %v1784 = vmul.f32 %v1730, %v1198
        %v1785 = vmul.f32 %v1734, %v1199
        %v1786 = vmul.f32 %v1734, %v1200
        %v1787 = vmul.f32 %v1738, %v1201
        %v1788 = vmul.f32 %v1738, %v1202
        %v1789 = vmul.f32 %v1742, %v1203
        %v1790 = vmul.f32 %v1742, %v1204
        %v1791 = vadd.f32 %v1759, %v1761
        %v1792 = vadd.f32 %v1791, %v1763
        %v1793 = vadd.f32 %v1792, %v1765
        %v1794 = vadd.f32 %v1793, %v1767
        %v1795 = vadd.f32 %v1794, %v1769
        %v1796 = vadd.f32 %v1795, %v1771
        %v1797 = vadd.f32 %v1796, %v1773
        %v1798 = vadd.f32 %v1797, %v1775
        %v1799 = vadd.f32 %v1798, %v1777
        %v1800 = vadd.f32 %v1799, %v1779
        %v1801 = vadd.f32 %v1800, %v1781
        %v1802 = vadd.f32 %v1801, %v1783
        %v1803 = vadd.f32 %v1802, %v1785
        %v1804 = vadd.f32 %v1803, %v1787
        %v1805 = vadd.f32 %v1804, %v1789
        %v1806 = vadd.f32 %v1760, %v1762
        %v1807 = vadd.f32 %v1806, %v1764
        %v1808 = vadd.f32 %v1807, %v1766
        %v1809 = vadd.f32 %v1808, %v1768
        %v1810 = vadd.f32 %v1809, %v1770
        %v1811 = vadd.f32 %v1810, %v1772
        %v1812 = vadd.f32 %v1811, %v1774
        %v1813 = vadd.f32 %v1812, %v1776
        %v1814 = vadd.f32 %v1813, %v1778
        %v1815 = vadd.f32 %v1814, %v1780
        %v1816 = vadd.f32 %v1815, %v1782
        %v1817 = vadd.f32 %v1816, %v1784
        %v1818 = vadd.f32 %v1817, %v1786
        %v1819 = vadd.f32 %v1818, %v1788
        %v1820 = vadd.f32 %v1819, %v1790
        %v1821 = vmul.f32 %v1237, %v1805
        %v1822 = vmul.f32 %v1238, %v1820
        %s1823 = sld [smem:[#allocation4 + $0x100]]
        %s1824 = sld [smem:[#allocation6]]
        %v1825 = vstv %s1824
        %v1826 = vmul.f32 %v1825, %v1577
        %v1827 = vmul.f32 %v1825, %v1578
        %v1828 = vstv %s1823
        %v1829 = vadd.f32 %v1828, %v1826
        %v1830 = vadd.f32 %v1828, %v1827
        %s1831 = sld [smem:[#allocation6 + $0x1]]
        %v1832 = vstv %s1831
        %v1833 = vmul.f32 %v1832, %v1821
        %v1834 = vmul.f32 %v1832, %v1822
        %v1835 = vadd.f32 %v1829, %v1833
        %v1836 = vadd.f32 %v1830, %v1834
        %v1837 = vand.u32 2147483647, %v1835
        %v1838 = vand.u32 2147483647, %v1836
        %v1839 = vadd.f32 %v1837, 1.0
        %v1840 = vadd.f32 %v1838, 1.0
        %v1841 = vrcp.pop %v1839
        %v1842 = vrcp.pop %v1840
        %v1843 = vmul.f32 %v1835, %v1841
        %v1844 = vmul.f32 %v1836, %v1842
        %s1845 = sld [smem:[#allocation4 + $0x101]]
        %s1846 = sld [smem:[#allocation6 + $0x80]]
        %v1847 = vstv %s1846
        %v1848 = vmul.f32 %v1847, %v1577
        %v1849 = vmul.f32 %v1847, %v1578
        %v1850 = vstv %s1845
        %v1851 = vadd.f32 %v1850, %v1848
        %v1852 = vadd.f32 %v1850, %v1849
        %s1853 = sld [smem:[#allocation6 + $0x81]]
        %v1854 = vstv %s1853
        %v1855 = vmul.f32 %v1854, %v1821
        %v1856 = vmul.f32 %v1854, %v1822
        %v1857 = vadd.f32 %v1851, %v1855
        %v1858 = vadd.f32 %v1852, %v1856
        %v1859 = vand.u32 2147483647, %v1857
        %v1860 = vand.u32 2147483647, %v1858
        %v1861 = vadd.f32 %v1859, 1.0
        %v1862 = vadd.f32 %v1860, 1.0
        %v1863 = vrcp.pop %v1861
        %v1864 = vrcp.pop %v1862
        %v1865 = vmul.f32 %v1857, %v1863
        %v1866 = vmul.f32 %v1858, %v1864
        %v1867 = vld [vmem:[%s4] sm:$0xff]
        %v1868 = vld [vmem:[%s4 + $0x8] sm:$0xff]
        %v1869 = vld [vmem:[%s4 + $0x10] sm:$0xff]
        %v1870 = vld [vmem:[%s4 + $0x18] sm:$0xff]
        %v1871 = vld [vmem:[%s4 + $0x20] sm:$0xff]
        %v1872 = vld [vmem:[%s4 + $0x28] sm:$0xff]
        %v1873 = vld [vmem:[%s4 + $0x30] sm:$0xff]
        %v1874 = vld [vmem:[%s4 + $0x38] sm:$0xff]
        %v1875 = vld [vmem:[%s4 + $0x40] sm:$0xff]
        %v1876 = vld [vmem:[%s4 + $0x48] sm:$0xff]
        %v1877 = vld [vmem:[%s4 + $0x50] sm:$0xff]
        %v1878 = vld [vmem:[%s4 + $0x58] sm:$0xff]
        %v1879 = vld [vmem:[%s4 + $0x60] sm:$0xff]
        %v1880 = vld [vmem:[%s4 + $0x68] sm:$0xff]
        %v1881 = vld [vmem:[%s4 + $0x70] sm:$0xff]
        %v1882 = vld [vmem:[%s4 + $0x78] sm:$0xff]
        %v1883 = vld [vmem:[%s5] sm:$0xff]
        %v1884 = vld [vmem:[%s5 + $0x8] sm:$0xff]
        %v1885 = vld [vmem:[%s5 + $0x10] sm:$0xff]
        %v1886 = vld [vmem:[%s5 + $0x18] sm:$0xff]
        %v1887 = vld [vmem:[%s5 + $0x20] sm:$0xff]
        %v1888 = vld [vmem:[%s5 + $0x28] sm:$0xff]
        %v1889 = vld [vmem:[%s5 + $0x30] sm:$0xff]
        %v1890 = vld [vmem:[%s5 + $0x38] sm:$0xff]
        %v1891 = vld [vmem:[%s5 + $0x40] sm:$0xff]
        %v1892 = vld [vmem:[%s5 + $0x48] sm:$0xff]
        %v1893 = vld [vmem:[%s5 + $0x50] sm:$0xff]
        %v1894 = vld [vmem:[%s5 + $0x58] sm:$0xff]
        %v1895 = vld [vmem:[%s5 + $0x60] sm:$0xff]
        %v1896 = vld [vmem:[%s5 + $0x68] sm:$0xff]
        %v1897 = vld [vmem:[%s5 + $0x70] sm:$0xff]
        %v1898 = vld [vmem:[%s5 + $0x78] sm:$0xff]
        %1900 = vset.pattern.permute.xlu0 0
        %1901 = vperm.xlu0 %1900, %v1883
        %v1902 = vpop.permute.xlu0 %1901
        %1905 = vset.pattern.permute.xlu0 0
        %1906 = vperm.xlu0 %1905, %v1884
        %v1907 = vpop.permute.xlu0 %1906
        %1910 = vset.pattern.permute.xlu0 0
        %1911 = vperm.xlu0 %1910, %v1885
        %v1912 = vpop.permute.xlu0 %1911
        %1915 = vset.pattern.permute.xlu0 0
        %1916 = vperm.xlu0 %1915, %v1886
        %v1917 = vpop.permute.xlu0 %1916
        %1920 = vset.pattern.permute.xlu0 0
        %1921 = vperm.xlu0 %1920, %v1887
        %v1922 = vpop.permute.xlu0 %1921
        %1925 = vset.pattern.permute.xlu0 0
        %1926 = vperm.xlu0 %1925, %v1888
        %v1927 = vpop.permute.xlu0 %1926
        %1930 = vset.pattern.permute.xlu0 0
        %1931 = vperm.xlu0 %1930, %v1889
        %v1932 = vpop.permute.xlu0 %1931
        %1935 = vset.pattern.permute.xlu0 0
        %1936 = vperm.xlu0 %1935, %v1890
        %v1937 = vpop.permute.xlu0 %1936
        %1940 = vset.pattern.permute.xlu0 0
        %1941 = vperm.xlu0 %1940, %v1891
        %v1942 = vpop.permute.xlu0 %1941
        %1945 = vset.pattern.permute.xlu0 0
        %1946 = vperm.xlu0 %1945, %v1892
        %v1947 = vpop.permute.xlu0 %1946
        %1950 = vset.pattern.permute.xlu0 0
        %1951 = vperm.xlu0 %1950, %v1893
        %v1952 = vpop.permute.xlu0 %1951
        %1955 = vset.pattern.permute.xlu0 0
        %1956 = vperm.xlu0 %1955, %v1894
        %v1957 = vpop.permute.xlu0 %1956
        %1960 = vset.pattern.permute.xlu0 0
        %1961 = vperm.xlu0 %1960, %v1895
        %v1962 = vpop.permute.xlu0 %1961
        %1965 = vset.pattern.permute.xlu0 0
        %1966 = vperm.xlu0 %1965, %v1896
        %v1967 = vpop.permute.xlu0 %1966
        %1970 = vset.pattern.permute.xlu0 0
        %1971 = vperm.xlu0 %1970, %v1897
        %v1972 = vpop.permute.xlu0 %1971
        %1975 = vset.pattern.permute.xlu0 0
        %1976 = vperm.xlu0 %1975, %v1898
        %v1977 = vpop.permute.xlu0 %1976
        %vm1979 = vcmask 261120
        %v1981 = vsel %vm1979, %v1867, 0
        %v1984 = vsel %vm1979, %v1868, 0
        %v1987 = vsel %vm1979, %v1869, 0
        %v1990 = vsel %vm1979, %v1870, 0
        %v1993 = vsel %vm1979, %v1871, 0
        %v1996 = vsel %vm1979, %v1872, 0
        %v1999 = vsel %vm1979, %v1873, 0
        %v2002 = vsel %vm1979, %v1874, 0
        %v2005 = vsel %vm1979, %v1875, 0
        %v2008 = vsel %vm1979, %v1876, 0
        %v2011 = vsel %vm1979, %v1877, 0
        %v2014 = vsel %vm1979, %v1878, 0
        %v2017 = vsel %vm1979, %v1879, 0
        %v2020 = vsel %vm1979, %v1880, 0
        %v2023 = vsel %vm1979, %v1881, 0
        %v2026 = vsel %vm1979, %v1882, 0
        %2028 = vmatprep.subr.mxu0 0.0
        %v2029 = vand.u32 %v1843, 4294901760
        %2030 = vmatpush1.msra.mxu0 %v2029
        %2031 = vmatprep.subr.mxu0 0.0
        %v2032 = vand.u32 %v1844, 4294901760
        %2033 = vmatpush1.msra.mxu0 %v2032
        %2034 = vmatprep.subr.mxu0 0.0
        %v2035 = vand.u32 %v1865, 4294901760
        %2036 = vmatpush1.msra.mxu0 %v2035
        %2037 = vmatprep.subr.mxu0 0.0
        %v2038 = vand.u32 %v1866, 4294901760
        %2039 = vmatpush1.msra.mxu0 %v2038
        %2040 = vmatprep.subr.mxu0 0.0
        %2041 = vmatpush1.msra.mxu0 0.0
        %2042 = vmatprep.subr.mxu0 0.0
        %2043 = vmatpush1.msra.mxu0 0.0
        %2044 = vmatprep.subr.mxu0 0.0
        %2045 = vmatpush1.msra.mxu0 0.0
        %2046 = vmatprep.subr.mxu0 0.0
        %2047 = vmatpush1.msra.mxu0 0.0
        %2048 = vmatprep.subr.mxu0 0.0
        %2049 = vmatpush1.msra.mxu0 0.0
        %2050 = vmatprep.subr.mxu0 0.0
        %2051 = vmatpush1.msra.mxu0 0.0
        %2052 = vmatprep.subr.mxu0 0.0
        %2053 = vmatpush1.msra.mxu0 0.0
        %2054 = vmatprep.subr.mxu0 0.0
        %2055 = vmatpush1.msra.mxu0 0.0
        %2056 = vmatprep.subr.mxu0 0.0
        %2057 = vmatpush1.msra.mxu0 0.0
        %2058 = vmatprep.subr.mxu0 0.0
        %2059 = vmatpush1.msra.mxu0 0.0
        %2060 = vmatprep.subr.mxu0 0.0
        %2061 = vmatpush1.msra.mxu0 0.0
        %2062 = vmatprep.subr.mxu0 0.0
        %2063 = vmatpush1.msra.mxu0 0.0
        %2064 = vmatprep.subr.mxu0 0.0
        %2065 = vmatpush1.msra.mxu0 0.0
        %2066 = vmatprep.subr.mxu0 0.0
        %2067 = vmatpush1.msra.mxu0 0.0
        %2068 = vmatprep.subr.mxu0 0.0
        %2069 = vmatpush1.msra.mxu0 0.0
        %2070 = vmatprep.subr.mxu0 0.0
        %2071 = vmatpush1.msra.mxu0 0.0
        %2072 = vmatprep.subr.mxu0 0.0
        %2073 = vmatpush1.msra.mxu0 0.0
        %2074 = vmatprep.subr.mxu0 0.0
        %2075 = vmatpush1.msra.mxu0 0.0
        %2076 = vmatprep.subr.mxu0 0.0
        %2077 = vmatpush1.msra.mxu0 0.0
        %2078 = vmatprep.subr.mxu0 0.0
        %2079 = vmatpush1.msra.mxu0 0.0
        %2080 = vmatprep.subr.mxu0 0.0
        %2081 = vmatpush1.msra.mxu0 0.0
        %2082 = vmatprep.subr.mxu0 0.0
        %2083 = vmatpush1.msra.mxu0 0.0
        %2084 = vmatprep.subr.mxu0 0.0
        %2085 = vmatpush1.msra.mxu0 0.0
        %2086 = vmatprep.subr.mxu0 0.0
        %2087 = vmatpush1.msra.mxu0 0.0
        %2088 = vmatprep.subr.mxu0 0.0
        %2089 = vmatpush1.msra.mxu0 0.0
        %2090 = vmatprep.subr.mxu0 0.0
        %2091 = vmatpush1.msra.mxu0 0.0
        %2092 = vmatprep.subr.mxu0 0.0
        %2093 = vmatpush1.msra.mxu0 0.0
        %2094 = vmatprep.subr.mxu0 0.0
        %2095 = vmatpush1.msra.mxu0 0.0
        %2096 = vmatprep.mubr.f32.mxu0 0.0
        %v2097 = vand.u32 %v1981, 4294901760
        %v2098 = vsub.f32 %v1981, %v2097
        %v2099 = vand.u32 %v2098, 4294901760
        %v2100 = vsub.f32 %v2098, %v2099
        %v2101 = vand.u32 %v2100, 4294901760
        %2102 = vmatmul.mubr.f32.gmra.mrb[0].mxu0 %v2101
        %v2103 = vpop.f32.mrb[0].mxu0
        %v2104 = vadd.f32 %v1902, %v2103
        %v2105 = vpop.f32.mrb[0].mxu0
        %2106 = vmatprep.mubr.f32.mxu0 0.0
        %v2107 = vand.u32 %v1984, 4294901760
        %v2108 = vsub.f32 %v1984, %v2107
        %v2109 = vand.u32 %v2108, 4294901760
        %v2110 = vsub.f32 %v2108, %v2109
        %v2111 = vand.u32 %v2110, 4294901760
        %2112 = vmatmul.mubr.f32.gmra.mrb[0].mxu0 %v2111
        %v2113 = vpop.f32.mrb[0].mxu0
        %v2114 = vadd.f32 %v1907, %v2113
        %v2115 = vpop.f32.mrb[0].mxu0
        %2116 = vmatprep.mubr.f32.mxu0 0.0
        %v2117 = vand.u32 %v1987, 4294901760
        %v2118 = vsub.f32 %v1987, %v2117
        %v2119 = vand.u32 %v2118, 4294901760
        %v2120 = vsub.f32 %v2118, %v2119
        %v2121 = vand.u32 %v2120, 4294901760
        %2122 = vmatmul.mubr.f32.gmra.mrb[0].mxu0 %v2121
        %v2123 = vpop.f32.mrb[0].mxu0
        %v2124 = vadd.f32 %v1912, %v2123
        %v2125 = vpop.f32.mrb[0].mxu0
        %2126 = vmatprep.mubr.f32.mxu0 0.0
        %v2127 = vand.u32 %v1990, 4294901760
        %v2128 = vsub.f32 %v1990, %v2127
        %v2129 = vand.u32 %v2128, 4294901760
        %v2130 = vsub.f32 %v2128, %v2129
        %v2131 = vand.u32 %v2130, 4294901760
        %2132 = vmatmul.mubr.f32.gmra.mrb[0].mxu0 %v2131
        %v2133 = vpop.f32.mrb[0].mxu0
        %v2134 = vadd.f32 %v1917, %v2133
        %v2135 = vpop.f32.mrb[0].mxu0
        %2136 = vmatprep.mubr.f32.mxu0 0.0
        %v2137 = vand.u32 %v1993, 4294901760
        %v2138 = vsub.f32 %v1993, %v2137
        %v2139 = vand.u32 %v2138, 4294901760
        %v2140 = vsub.f32 %v2138, %v2139
        %v2141 = vand.u32 %v2140, 4294901760
        %2142 = vmatmul.mubr.f32.gmra.mrb[0].mxu0 %v2141
        %v2143 = vpop.f32.mrb[0].mxu0
        %v2144 = vadd.f32 %v1922, %v2143
        %v2145 = vpop.f32.mrb[0].mxu0
        %2146 = vmatprep.mubr.f32.mxu0 0.0
        %v2147 = vand.u32 %v1996, 4294901760
        %v2148 = vsub.f32 %v1996, %v2147
        %v2149 = vand.u32 %v2148, 4294901760
        %v2150 = vsub.f32 %v2148, %v2149
        %v2151 = vand.u32 %v2150, 4294901760
        %2152 = vmatmul.mubr.f32.gmra.mrb[0].mxu0 %v2151
        %v2153 = vpop.f32.mrb[0].mxu0
        %v2154 = vadd.f32 %v1927, %v2153
        %v2155 = vpop.f32.mrb[0].mxu0
        %2156 = vmatprep.mubr.f32.mxu0 0.0
        %v2157 = vand.u32 %v1999, 4294901760
        %v2158 = vsub.f32 %v1999, %v2157
        %v2159 = vand.u32 %v2158, 4294901760
        %v2160 = vsub.f32 %v2158, %v2159
        %v2161 = vand.u32 %v2160, 4294901760
        %2162 = vmatmul.mubr.f32.gmra.mrb[0].mxu0 %v2161
        %v2163 = vpop.f32.mrb[0].mxu0
        %v2164 = vadd.f32 %v1932, %v2163
        %v2165 = vpop.f32.mrb[0].mxu0
        %2166 = vmatprep.mubr.f32.mxu0 0.0
        %v2167 = vand.u32 %v2002, 4294901760
        %v2168 = vsub.f32 %v2002, %v2167
        %v2169 = vand.u32 %v2168, 4294901760
        %v2170 = vsub.f32 %v2168, %v2169
        %v2171 = vand.u32 %v2170, 4294901760
        %2172 = vmatmul.mubr.f32.gmra.mrb[0].mxu0 %v2171
        %v2173 = vpop.f32.mrb[0].mxu0
        %v2174 = vadd.f32 %v1937, %v2173
        %v2175 = vpop.f32.mrb[0].mxu0
        %2176 = vmatprep.mubr.f32.mxu0 0.0
        %v2177 = vand.u32 %v2005, 4294901760
        %v2178 = vsub.f32 %v2005, %v2177
        %v2179 = vand.u32 %v2178, 4294901760
        %v2180 = vsub.f32 %v2178, %v2179
        %v2181 = vand.u32 %v2180, 4294901760
        %2182 = vmatmul.mubr.f32.gmra.mrb[0].mxu0 %v2181
        %v2183 = vpop.f32.mrb[0].mxu0
        %v2184 = vadd.f32 %v1942, %v2183
        %v2185 = vpop.f32.mrb[0].mxu0
        %2186 = vmatprep.mubr.f32.mxu0 0.0
        %v2187 = vand.u32 %v2008, 4294901760
        %v2188 = vsub.f32 %v2008, %v2187
        %v2189 = vand.u32 %v2188, 4294901760
        %v2190 = vsub.f32 %v2188, %v2189
        %v2191 = vand.u32 %v2190, 4294901760
        %2192 = vmatmul.mubr.f32.gmra.mrb[0].mxu0 %v2191
        %v2193 = vpop.f32.mrb[0].mxu0
        %v2194 = vadd.f32 %v1947, %v2193
        %v2195 = vpop.f32.mrb[0].mxu0
        %2196 = vmatprep.mubr.f32.mxu0 0.0
        %v2197 = vand.u32 %v2011, 4294901760
        %v2198 = vsub.f32 %v2011, %v2197
        %v2199 = vand.u32 %v2198, 4294901760
        %v2200 = vsub.f32 %v2198, %v2199
        %v2201 = vand.u32 %v2200, 4294901760
        %2202 = vmatmul.mubr.f32.gmra.mrb[0].mxu0 %v2201
        %v2203 = vpop.f32.mrb[0].mxu0
        %v2204 = vadd.f32 %v1952, %v2203
        %v2205 = vpop.f32.mrb[0].mxu0
        %2206 = vmatprep.mubr.f32.mxu0 0.0
        %v2207 = vand.u32 %v2014, 4294901760
        %v2208 = vsub.f32 %v2014, %v2207
        %v2209 = vand.u32 %v2208, 4294901760
        %v2210 = vsub.f32 %v2208, %v2209
        %v2211 = vand.u32 %v2210, 4294901760
        %2212 = vmatmul.mubr.f32.gmra.mrb[0].mxu0 %v2211
        %v2213 = vpop.f32.mrb[0].mxu0
        %v2214 = vadd.f32 %v1957, %v2213
        %v2215 = vpop.f32.mrb[0].mxu0
        %2216 = vmatprep.mubr.f32.mxu0 0.0
        %v2217 = vand.u32 %v2017, 4294901760
        %v2218 = vsub.f32 %v2017, %v2217
        %v2219 = vand.u32 %v2218, 4294901760
        %v2220 = vsub.f32 %v2218, %v2219
        %v2221 = vand.u32 %v2220, 4294901760
        %2222 = vmatmul.mubr.f32.gmra.mrb[0].mxu0 %v2221
        %v2223 = vpop.f32.mrb[0].mxu0
        %v2224 = vadd.f32 %v1962, %v2223
        %v2225 = vpop.f32.mrb[0].mxu0
        %2226 = vmatprep.mubr.f32.mxu0 0.0
        %v2227 = vand.u32 %v2020, 4294901760
        %v2228 = vsub.f32 %v2020, %v2227
        %v2229 = vand.u32 %v2228, 4294901760
        %v2230 = vsub.f32 %v2228, %v2229
        %v2231 = vand.u32 %v2230, 4294901760
        %2232 = vmatmul.mubr.f32.gmra.mrb[0].mxu0 %v2231
        %v2233 = vpop.f32.mrb[0].mxu0
        %v2234 = vadd.f32 %v1967, %v2233
        %v2235 = vpop.f32.mrb[0].mxu0
        %2236 = vmatprep.mubr.f32.mxu0 0.0
        %v2237 = vand.u32 %v2023, 4294901760
        %v2238 = vsub.f32 %v2023, %v2237
        %v2239 = vand.u32 %v2238, 4294901760
        %v2240 = vsub.f32 %v2238, %v2239
        %v2241 = vand.u32 %v2240, 4294901760
        %2242 = vmatmul.mubr.f32.gmra.mrb[0].mxu0 %v2241
        %v2243 = vpop.f32.mrb[0].mxu0
        %v2244 = vadd.f32 %v1972, %v2243
        %v2245 = vpop.f32.mrb[0].mxu0
        %2246 = vmatprep.mubr.f32.mxu0 0.0
        %v2247 = vand.u32 %v2026, 4294901760
        %v2248 = vsub.f32 %v2026, %v2247
        %v2249 = vand.u32 %v2248, 4294901760
        %v2250 = vsub.f32 %v2248, %v2249
        %v2251 = vand.u32 %v2250, 4294901760
        %2252 = vmatmul.mubr.f32.gmra.mrb[0].mxu0 %v2251
        %v2253 = vpop.f32.mrb[0].mxu0
        %v2254 = vadd.f32 %v1977, %v2253
        %v2255 = vpop.f32.mrb[0].mxu0
        %2256 = vdwg.mxu0
        %2257 = vmatprep.subr.mxu0 0.0
        %v2258 = vand.u32 %v1843, 4294901760
        %v2259 = vsub.f32 %v1843, %v2258
        %v2260 = vand.u32 %v2259, 4294901760
        %v2261 = vsub.f32 %v2259, %v2260
        %v2262 = vand.u32 %v2261, 4294901760
        %2263 = vmatpush1.msra.mxu0 %v2262
        %2264 = vmatprep.subr.mxu0 0.0
        %v2265 = vand.u32 %v1844, 4294901760
        %v2266 = vsub.f32 %v1844, %v2265
        %v2267 = vand.u32 %v2266, 4294901760
        %v2268 = vsub.f32 %v2266, %v2267
        %v2269 = vand.u32 %v2268, 4294901760
        %2270 = vmatpush1.msra.mxu0 %v2269
        %2271 = vmatprep.subr.mxu0 0.0
        %v2272 = vand.u32 %v1865, 4294901760
        %v2273 = vsub.f32 %v1865, %v2272
        %v2274 = vand.u32 %v2273, 4294901760
        %v2275 = vsub.f32 %v2273, %v2274
        %v2276 = vand.u32 %v2275, 4294901760
        %2277 = vmatpush1.msra.mxu0 %v2276
        %2278 = vmatprep.subr.mxu0 0.0
        %v2279 = vand.u32 %v1866, 4294901760
        %v2280 = vsub.f32 %v1866, %v2279
        %v2281 = vand.u32 %v2280, 4294901760
        %v2282 = vsub.f32 %v2280, %v2281
        %v2283 = vand.u32 %v2282, 4294901760
        %2284 = vmatpush1.msra.mxu0 %v2283
        %2285 = vmatprep.subr.mxu0 0.0
        %2286 = vmatpush1.msra.mxu0 0.0
        %2287 = vmatprep.subr.mxu0 0.0
        %2288 = vmatpush1.msra.mxu0 0.0
        %2289 = vmatprep.subr.mxu0 0.0
        %2290 = vmatpush1.msra.mxu0 0.0
        %2291 = vmatprep.subr.mxu0 0.0
        %2292 = vmatpush1.msra.mxu0 0.0
        %2293 = vmatprep.subr.mxu0 0.0
        %2294 = vmatpush1.msra.mxu0 0.0
        %2295 = vmatprep.subr.mxu0 0.0
        %2296 = vmatpush1.msra.mxu0 0.0
        %2297 = vmatprep.subr.mxu0 0.0
        %2298 = vmatpush1.msra.mxu0 0.0
        %2299 = vmatprep.subr.mxu0 0.0
        %2300 = vmatpush1.msra.mxu0 0.0
        %2301 = vmatprep.subr.mxu0 0.0
        %2302 = vmatpush1.msra.mxu0 0.0
        %2303 = vmatprep.subr.mxu0 0.0
        %2304 = vmatpush1.msra.mxu0 0.0
        %2305 = vmatprep.subr.mxu0 0.0
        %2306 = vmatpush1.msra.mxu0 0.0
        %2307 = vmatprep.subr.mxu0 0.0
        %2308 = vmatpush1.msra.mxu0 0.0
        %2309 = vmatprep.subr.mxu0 0.0
        %2310 = vmatpush1.msra.mxu0 0.0
        %2311 = vmatprep.subr.mxu0 0.0
        %2312 = vmatpush1.msra.mxu0 0.0
        %2313 = vmatprep.subr.mxu0 0.0
        %2314 = vmatpush1.msra.mxu0 0.0
        %2315 = vmatprep.subr.mxu0 0.0
        %2316 = vmatpush1.msra.mxu0 0.0
        %2317 = vmatprep.subr.mxu0 0.0
        %2318 = vmatpush1.msra.mxu0 0.0
        %2319 = vmatprep.subr.mxu0 0.0
        %2320 = vmatpush1.msra.mxu0 0.0
        %2321 = vmatprep.subr.mxu0 0.0
        %2322 = vmatpush1.msra.mxu0 0.0
        %2323 = vmatprep.subr.mxu0 0.0
        %2324 = vmatpush1.msra.mxu0 0.0
        %2325 = vmatprep.subr.mxu0 0.0
        %2326 = vmatpush1.msra.mxu0 0.0
        %2327 = vmatprep.subr.mxu0 0.0
        %2328 = vmatpush1.msra.mxu0 0.0
        %2329 = vmatprep.subr.mxu0 0.0
        %2330 = vmatpush1.msra.mxu0 0.0
        %2331 = vmatprep.subr.mxu0 0.0
        %2332 = vmatpush1.msra.mxu0 0.0
        %2333 = vmatprep.subr.mxu0 0.0
        %2334 = vmatpush1.msra.mxu0 0.0
        %2335 = vmatprep.subr.mxu0 0.0
        %2336 = vmatpush1.msra.mxu0 0.0
        %2337 = vmatprep.subr.mxu0 0.0
        %2338 = vmatpush1.msra.mxu0 0.0
        %2339 = vmatprep.subr.mxu0 0.0
        %2340 = vmatpush1.msra.mxu0 0.0
        %2341 = vmatprep.mubr.f32.mxu0 0.0
        %v2342 = vand.u32 %v1981, 4294901760
        %2343 = vmatmul.mubr.f32.gmra.mrb[0].mxu0 %v2342
        %v2344 = vpop.f32.mrb[0].mxu0
        %v2345 = vadd.f32 %v2104, %v2344
        %v2346 = vpop.f32.mrb[0].mxu0
        %2347 = vmatprep.mubr.f32.mxu0 0.0
        %v2348 = vand.u32 %v1984, 4294901760
        %2349 = vmatmul.mubr.f32.gmra.mrb[0].mxu0 %v2348
        %v2350 = vpop.f32.mrb[0].mxu0
        %v2351 = vadd.f32 %v2114, %v2350
        %v2352 = vpop.f32.mrb[0].mxu0
        %2353 = vmatprep.mubr.f32.mxu0 0.0
        %v2354 = vand.u32 %v1987, 4294901760
        %2355 = vmatmul.mubr.f32.gmra.mrb[0].mxu0 %v2354
        %v2356 = vpop.f32.mrb[0].mxu0
        %v2357 = vadd.f32 %v2124, %v2356
        %v2358 = vpop.f32.mrb[0].mxu0
        %2359 = vmatprep.mubr.f32.mxu0 0.0
        %v2360 = vand.u32 %v1990, 4294901760
        %2361 = vmatmul.mubr.f32.gmra.mrb[0].mxu0 %v2360
        %v2362 = vpop.f32.mrb[0].mxu0
        %v2363 = vadd.f32 %v2134, %v2362
        %v2364 = vpop.f32.mrb[0].mxu0
        %2365 = vmatprep.mubr.f32.mxu0 0.0
        %v2366 = vand.u32 %v1993, 4294901760
        %2367 = vmatmul.mubr.f32.gmra.mrb[0].mxu0 %v2366
        %v2368 = vpop.f32.mrb[0].mxu0
        %v2369 = vadd.f32 %v2144, %v2368
        %v2370 = vpop.f32.mrb[0].mxu0
        %2371 = vmatprep.mubr.f32.mxu0 0.0
        %v2372 = vand.u32 %v1996, 4294901760
        %2373 = vmatmul.mubr.f32.gmra.mrb[0].mxu0 %v2372
        %v2374 = vpop.f32.mrb[0].mxu0
        %v2375 = vadd.f32 %v2154, %v2374
        %v2376 = vpop.f32.mrb[0].mxu0
        %2377 = vmatprep.mubr.f32.mxu0 0.0
        %v2378 = vand.u32 %v1999, 4294901760
        %2379 = vmatmul.mubr.f32.gmra.mrb[0].mxu0 %v2378
        %v2380 = vpop.f32.mrb[0].mxu0
        %v2381 = vadd.f32 %v2164, %v2380
        %v2382 = vpop.f32.mrb[0].mxu0
        %2383 = vmatprep.mubr.f32.mxu0 0.0
        %v2384 = vand.u32 %v2002, 4294901760
        %2385 = vmatmul.mubr.f32.gmra.mrb[0].mxu0 %v2384
        %v2386 = vpop.f32.mrb[0].mxu0
        %v2387 = vadd.f32 %v2174, %v2386
        %v2388 = vpop.f32.mrb[0].mxu0
        %2389 = vmatprep.mubr.f32.mxu0 0.0
        %v2390 = vand.u32 %v2005, 4294901760
        %2391 = vmatmul.mubr.f32.gmra.mrb[0].mxu0 %v2390
        %v2392 = vpop.f32.mrb[0].mxu0
        %v2393 = vadd.f32 %v2184, %v2392
        %v2394 = vpop.f32.mrb[0].mxu0
        %2395 = vmatprep.mubr.f32.mxu0 0.0
        %v2396 = vand.u32 %v2008, 4294901760
        %2397 = vmatmul.mubr.f32.gmra.mrb[0].mxu0 %v2396
        %v2398 = vpop.f32.mrb[0].mxu0
        %v2399 = vadd.f32 %v2194, %v2398
        %v2400 = vpop.f32.mrb[0].mxu0
        %2401 = vmatprep.mubr.f32.mxu0 0.0
        %v2402 = vand.u32 %v2011, 4294901760
        %2403 = vmatmul.mubr.f32.gmra.mrb[0].mxu0 %v2402
        %v2404 = vpop.f32.mrb[0].mxu0
        %v2405 = vadd.f32 %v2204, %v2404
        %v2406 = vpop.f32.mrb[0].mxu0
        %2407 = vmatprep.mubr.f32.mxu0 0.0
        %v2408 = vand.u32 %v2014, 4294901760
        %2409 = vmatmul.mubr.f32.gmra.mrb[0].mxu0 %v2408
        %v2410 = vpop.f32.mrb[0].mxu0
        %v2411 = vadd.f32 %v2214, %v2410
        %v2412 = vpop.f32.mrb[0].mxu0
        %2413 = vmatprep.mubr.f32.mxu0 0.0
        %v2414 = vand.u32 %v2017, 4294901760
        %2415 = vmatmul.mubr.f32.gmra.mrb[0].mxu0 %v2414
        %v2416 = vpop.f32.mrb[0].mxu0
        %v2417 = vadd.f32 %v2224, %v2416
        %v2418 = vpop.f32.mrb[0].mxu0
        %2419 = vmatprep.mubr.f32.mxu0 0.0
        %v2420 = vand.u32 %v2020, 4294901760
        %2421 = vmatmul.mubr.f32.gmra.mrb[0].mxu0 %v2420
        %v2422 = vpop.f32.mrb[0].mxu0
        %v2423 = vadd.f32 %v2234, %v2422
        %v2424 = vpop.f32.mrb[0].mxu0
        %2425 = vmatprep.mubr.f32.mxu0 0.0
        %v2426 = vand.u32 %v2023, 4294901760
        %2427 = vmatmul.mubr.f32.gmra.mrb[0].mxu0 %v2426
        %v2428 = vpop.f32.mrb[0].mxu0
        %v2429 = vadd.f32 %v2244, %v2428
        %v2430 = vpop.f32.mrb[0].mxu0
        %2431 = vmatprep.mubr.f32.mxu0 0.0
        %v2432 = vand.u32 %v2026, 4294901760
        %2433 = vmatmul.mubr.f32.gmra.mrb[0].mxu0 %v2432
        %v2434 = vpop.f32.mrb[0].mxu0
        %v2435 = vadd.f32 %v2254, %v2434
        %v2436 = vpop.f32.mrb[0].mxu0
        %2437 = vdwg.mxu0
        %2438 = vmatprep.subr.mxu0 0.0
        %v2439 = vand.u32 %v1843, 4294901760
        %v2440 = vsub.f32 %v1843, %v2439
        %2441 = vmatpush1.msra.mxu0 %v2440
        %2442 = vmatprep.subr.mxu0 0.0
        %v2443 = vand.u32 %v1844, 4294901760
        %v2444 = vsub.f32 %v1844, %v2443
        %2445 = vmatpush1.msra.mxu0 %v2444
        %2446 = vmatprep.subr.mxu0 0.0
        %v2447 = vand.u32 %v1865, 4294901760
        %v2448 = vsub.f32 %v1865, %v2447
        %2449 = vmatpush1.msra.mxu0 %v2448
        %2450 = vmatprep.subr.mxu0 0.0
        %v2451 = vand.u32 %v1866, 4294901760
        %v2452 = vsub.f32 %v1866, %v2451
        %2453 = vmatpush1.msra.mxu0 %v2452
        %2454 = vmatprep.subr.mxu0 0.0
        %2455 = vmatpush1.msra.mxu0 0.0
        %2456 = vmatprep.subr.mxu0 0.0
        %2457 = vmatpush1.msra.mxu0 0.0
        %2458 = vmatprep.subr.mxu0 0.0
        %2459 = vmatpush1.msra.mxu0 0.0
        %2460 = vmatprep.subr.mxu0 0.0
        %2461 = vmatpush1.msra.mxu0 0.0
        %2462 = vmatprep.subr.mxu0 0.0
        %2463 = vmatpush1.msra.mxu0 0.0
        %2464 = vmatprep.subr.mxu0 0.0
        %2465 = vmatpush1.msra.mxu0 0.0
        %2466 = vmatprep.subr.mxu0 0.0
        %2467 = vmatpush1.msra.mxu0 0.0
        %2468 = vmatprep.subr.mxu0 0.0
        %2469 = vmatpush1.msra.mxu0 0.0
        %2470 = vmatprep.subr.mxu0 0.0
        %2471 = vmatpush1.msra.mxu0 0.0
        %2472 = vmatprep.subr.mxu0 0.0
        %2473 = vmatpush1.msra.mxu0 0.0
        %2474 = vmatprep.subr.mxu0 0.0
        %2475 = vmatpush1.msra.mxu0 0.0
        %2476 = vmatprep.subr.mxu0 0.0
        %2477 = vmatpush1.msra.mxu0 0.0
        %2478 = vmatprep.subr.mxu0 0.0
        %2479 = vmatpush1.msra.mxu0 0.0
        %2480 = vmatprep.subr.mxu0 0.0
        %2481 = vmatpush1.msra.mxu0 0.0
        %2482 = vmatprep.subr.mxu0 0.0
        %2483 = vmatpush1.msra.mxu0 0.0
        %2484 = vmatprep.subr.mxu0 0.0
        %2485 = vmatpush1.msra.mxu0 0.0
        %2486 = vmatprep.subr.mxu0 0.0
        %2487 = vmatpush1.msra.mxu0 0.0
        %2488 = vmatprep.subr.mxu0 0.0
        %2489 = vmatpush1.msra.mxu0 0.0
        %2490 = vmatprep.subr.mxu0 0.0
        %2491 = vmatpush1.msra.mxu0 0.0
        %2492 = vmatprep.subr.mxu0 0.0
        %2493 = vmatpush1.msra.mxu0 0.0
        %2494 = vmatprep.subr.mxu0 0.0
        %2495 = vmatpush1.msra.mxu0 0.0
        %2496 = vmatprep.subr.mxu0 0.0
        %2497 = vmatpush1.msra.mxu0 0.0
        %2498 = vmatprep.subr.mxu0 0.0
        %2499 = vmatpush1.msra.mxu0 0.0
        %2500 = vmatprep.subr.mxu0 0.0
        %2501 = vmatpush1.msra.mxu0 0.0
        %2502 = vmatprep.subr.mxu0 0.0
        %2503 = vmatpush1.msra.mxu0 0.0
        %2504 = vmatprep.subr.mxu0 0.0
        %2505 = vmatpush1.msra.mxu0 0.0
        %2506 = vmatprep.subr.mxu0 0.0
        %2507 = vmatpush1.msra.mxu0 0.0
        %2508 = vmatprep.subr.mxu0 0.0
        %2509 = vmatpush1.msra.mxu0 0.0
        %2510 = vmatprep.mubr.f32.mxu0 0.0
        %v2511 = vand.u32 %v1981, 4294901760
        %v2512 = vsub.f32 %v1981, %v2511
        %2513 = vmatmul.mubr.f32.gmra.mrb[0].mxu0 %v2512
        %v2514 = vpop.f32.mrb[0].mxu0
        %v2515 = vadd.f32 %v2345, %v2514
        %v2516 = vpop.f32.mrb[0].mxu0
        %2517 = vmatprep.mubr.f32.mxu0 0.0
        %v2518 = vand.u32 %v1984, 4294901760
        %v2519 = vsub.f32 %v1984, %v2518
        %2520 = vmatmul.mubr.f32.gmra.mrb[0].mxu0 %v2519
        %v2521 = vpop.f32.mrb[0].mxu0
        %v2522 = vadd.f32 %v2351, %v2521
        %v2523 = vpop.f32.mrb[0].mxu0
        %2524 = vmatprep.mubr.f32.mxu0 0.0
        %v2525 = vand.u32 %v1987, 4294901760
        %v2526 = vsub.f32 %v1987, %v2525
        %2527 = vmatmul.mubr.f32.gmra.mrb[0].mxu0 %v2526
        %v2528 = vpop.f32.mrb[0].mxu0
        %v2529 = vadd.f32 %v2357, %v2528
        %v2530 = vpop.f32.mrb[0].mxu0
        %2531 = vmatprep.mubr.f32.mxu0 0.0
        %v2532 = vand.u32 %v1990, 4294901760
        %v2533 = vsub.f32 %v1990, %v2532
        %2534 = vmatmul.mubr.f32.gmra.mrb[0].mxu0 %v2533
        %v2535 = vpop.f32.mrb[0].mxu0
        %v2536 = vadd.f32 %v2363, %v2535
        %v2537 = vpop.f32.mrb[0].mxu0
        %2538 = vmatprep.mubr.f32.mxu0 0.0
        %v2539 = vand.u32 %v1993, 4294901760
        %v2540 = vsub.f32 %v1993, %v2539
        %2541 = vmatmul.mubr.f32.gmra.mrb[0].mxu0 %v2540
        %v2542 = vpop.f32.mrb[0].mxu0
        %v2543 = vadd.f32 %v2369, %v2542
        %v2544 = vpop.f32.mrb[0].mxu0
        %2545 = vmatprep.mubr.f32.mxu0 0.0
        %v2546 = vand.u32 %v1996, 4294901760
        %v2547 = vsub.f32 %v1996, %v2546
        %2548 = vmatmul.mubr.f32.gmra.mrb[0].mxu0 %v2547
        %v2549 = vpop.f32.mrb[0].mxu0
        %v2550 = vadd.f32 %v2375, %v2549
        %v2551 = vpop.f32.mrb[0].mxu0
        %2552 = vmatprep.mubr.f32.mxu0 0.0
        %v2553 = vand.u32 %v1999, 4294901760
        %v2554 = vsub.f32 %v1999, %v2553
        %2555 = vmatmul.mubr.f32.gmra.mrb[0].mxu0 %v2554
        %v2556 = vpop.f32.mrb[0].mxu0
        %v2557 = vadd.f32 %v2381, %v2556
        %v2558 = vpop.f32.mrb[0].mxu0
        %2559 = vmatprep.mubr.f32.mxu0 0.0
        %v2560 = vand.u32 %v2002, 4294901760
        %v2561 = vsub.f32 %v2002, %v2560
        %2562 = vmatmul.mubr.f32.gmra.mrb[0].mxu0 %v2561
        %v2563 = vpop.f32.mrb[0].mxu0
        %v2564 = vadd.f32 %v2387, %v2563
        %v2565 = vpop.f32.mrb[0].mxu0
        %2566 = vmatprep.mubr.f32.mxu0 0.0
        %v2567 = vand.u32 %v2005, 4294901760
        %v2568 = vsub.f32 %v2005, %v2567
        %2569 = vmatmul.mubr.f32.gmra.mrb[0].mxu0 %v2568
        %v2570 = vpop.f32.mrb[0].mxu0
        %v2571 = vadd.f32 %v2393, %v2570
        %v2572 = vpop.f32.mrb[0].mxu0
        %2573 = vmatprep.mubr.f32.mxu0 0.0
        %v2574 = vand.u32 %v2008, 4294901760
        %v2575 = vsub.f32 %v2008, %v2574
        %2576 = vmatmul.mubr.f32.gmra.mrb[0].mxu0 %v2575
        %v2577 = vpop.f32.mrb[0].mxu0
        %v2578 = vadd.f32 %v2399, %v2577
        %v2579 = vpop.f32.mrb[0].mxu0
        %2580 = vmatprep.mubr.f32.mxu0 0.0
        %v2581 = vand.u32 %v2011, 4294901760
        %v2582 = vsub.f32 %v2011, %v2581
        %2583 = vmatmul.mubr.f32.gmra.mrb[0].mxu0 %v2582
        %v2584 = vpop.f32.mrb[0].mxu0
        %v2585 = vadd.f32 %v2405, %v2584
        %v2586 = vpop.f32.mrb[0].mxu0
        %2587 = vmatprep.mubr.f32.mxu0 0.0
        %v2588 = vand.u32 %v2014, 4294901760
        %v2589 = vsub.f32 %v2014, %v2588
        %2590 = vmatmul.mubr.f32.gmra.mrb[0].mxu0 %v2589
        %v2591 = vpop.f32.mrb[0].mxu0
        %v2592 = vadd.f32 %v2411, %v2591
        %v2593 = vpop.f32.mrb[0].mxu0
        %2594 = vmatprep.mubr.f32.mxu0 0.0
        %v2595 = vand.u32 %v2017, 4294901760
        %v2596 = vsub.f32 %v2017, %v2595
        %2597 = vmatmul.mubr.f32.gmra.mrb[0].mxu0 %v2596
        %v2598 = vpop.f32.mrb[0].mxu0
        %v2599 = vadd.f32 %v2417, %v2598
        %v2600 = vpop.f32.mrb[0].mxu0
        %2601 = vmatprep.mubr.f32.mxu0 0.0
        %v2602 = vand.u32 %v2020, 4294901760
        %v2603 = vsub.f32 %v2020, %v2602
        %2604 = vmatmul.mubr.f32.gmra.mrb[0].mxu0 %v2603
        %v2605 = vpop.f32.mrb[0].mxu0
        %v2606 = vadd.f32 %v2423, %v2605
        %v2607 = vpop.f32.mrb[0].mxu0
        %2608 = vmatprep.mubr.f32.mxu0 0.0
        %v2609 = vand.u32 %v2023, 4294901760
        %v2610 = vsub.f32 %v2023, %v2609
        %2611 = vmatmul.mubr.f32.gmra.mrb[0].mxu0 %v2610
        %v2612 = vpop.f32.mrb[0].mxu0
        %v2613 = vadd.f32 %v2429, %v2612
        %v2614 = vpop.f32.mrb[0].mxu0
        %2615 = vmatprep.mubr.f32.mxu0 0.0
        %v2616 = vand.u32 %v2026, 4294901760
        %v2617 = vsub.f32 %v2026, %v2616
        %2618 = vmatmul.mubr.f32.gmra.mrb[0].mxu0 %v2617
        %v2619 = vpop.f32.mrb[0].mxu0
        %v2620 = vadd.f32 %v2435, %v2619
        %v2621 = vpop.f32.mrb[0].mxu0
        %2622 = vdwg.mxu0
        %2623 = vmatprep.subr.mxu0 0.0
        %v2624 = vand.u32 %v1843, 4294901760
        %2625 = vmatpush1.msra.mxu0 %v2624
        %2626 = vmatprep.subr.mxu0 0.0
        %v2627 = vand.u32 %v1844, 4294901760
        %2628 = vmatpush1.msra.mxu0 %v2627
        %2629 = vmatprep.subr.mxu0 0.0
        %v2630 = vand.u32 %v1865, 4294901760
        %2631 = vmatpush1.msra.mxu0 %v2630
        %2632 = vmatprep.subr.mxu0 0.0
        %v2633 = vand.u32 %v1866, 4294901760
        %2634 = vmatpush1.msra.mxu0 %v2633
        %2635 = vmatprep.subr.mxu0 0.0
        %2636 = vmatpush1.msra.mxu0 0.0
        %2637 = vmatprep.subr.mxu0 0.0
        %2638 = vmatpush1.msra.mxu0 0.0
        %2639 = vmatprep.subr.mxu0 0.0
        %2640 = vmatpush1.msra.mxu0 0.0
        %2641 = vmatprep.subr.mxu0 0.0
        %2642 = vmatpush1.msra.mxu0 0.0
        %2643 = vmatprep.subr.mxu0 0.0
        %2644 = vmatpush1.msra.mxu0 0.0
        %2645 = vmatprep.subr.mxu0 0.0
        %2646 = vmatpush1.msra.mxu0 0.0
        %2647 = vmatprep.subr.mxu0 0.0
        %2648 = vmatpush1.msra.mxu0 0.0
        %2649 = vmatprep.subr.mxu0 0.0
        %2650 = vmatpush1.msra.mxu0 0.0
        %2651 = vmatprep.subr.mxu0 0.0
        %2652 = vmatpush1.msra.mxu0 0.0
        %2653 = vmatprep.subr.mxu0 0.0
        %2654 = vmatpush1.msra.mxu0 0.0
        %2655 = vmatprep.subr.mxu0 0.0
        %2656 = vmatpush1.msra.mxu0 0.0
        %2657 = vmatprep.subr.mxu0 0.0
        %2658 = vmatpush1.msra.mxu0 0.0
        %2659 = vmatprep.subr.mxu0 0.0
        %2660 = vmatpush1.msra.mxu0 0.0
        %2661 = vmatprep.subr.mxu0 0.0
        %2662 = vmatpush1.msra.mxu0 0.0
        %2663 = vmatprep.subr.mxu0 0.0
        %2664 = vmatpush1.msra.mxu0 0.0
        %2665 = vmatprep.subr.mxu0 0.0
        %2666 = vmatpush1.msra.mxu0 0.0
        %2667 = vmatprep.subr.mxu0 0.0
        %2668 = vmatpush1.msra.mxu0 0.0
        %2669 = vmatprep.subr.mxu0 0.0
        %2670 = vmatpush1.msra.mxu0 0.0
        %2671 = vmatprep.subr.mxu0 0.0
        %2672 = vmatpush1.msra.mxu0 0.0
        %2673 = vmatprep.subr.mxu0 0.0
        %2674 = vmatpush1.msra.mxu0 0.0
        %2675 = vmatprep.subr.mxu0 0.0
        %2676 = vmatpush1.msra.mxu0 0.0
        %2677 = vmatprep.subr.mxu0 0.0
        %2678 = vmatpush1.msra.mxu0 0.0
        %2679 = vmatprep.subr.mxu0 0.0
        %2680 = vmatpush1.msra.mxu0 0.0
        %2681 = vmatprep.subr.mxu0 0.0
        %2682 = vmatpush1.msra.mxu0 0.0
        %2683 = vmatprep.subr.mxu0 0.0
        %2684 = vmatpush1.msra.mxu0 0.0
        %2685 = vmatprep.subr.mxu0 0.0
        %2686 = vmatpush1.msra.mxu0 0.0
        %2687 = vmatprep.subr.mxu0 0.0
        %2688 = vmatpush1.msra.mxu0 0.0
        %2689 = vmatprep.subr.mxu0 0.0
        %2690 = vmatpush1.msra.mxu0 0.0
        %2691 = vmatprep.mubr.f32.mxu0 0.0
        %v2692 = vand.u32 %v1981, 4294901760
        %v2693 = vsub.f32 %v1981, %v2692
        %v2694 = vand.u32 %v2693, 4294901760
        %2695 = vmatmul.mubr.f32.gmra.mrb[0].mxu0 %v2694
        %v2696 = vpop.f32.mrb[0].mxu0
        %v2697 = vadd.f32 %v2515, %v2696
        %v2698 = vpop.f32.mrb[0].mxu0
        %2699 = vmatprep.mubr.f32.mxu0 0.0
        %v2700 = vand.u32 %v1984, 4294901760
        %v2701 = vsub.f32 %v1984, %v2700
        %v2702 = vand.u32 %v2701, 4294901760
        %2703 = vmatmul.mubr.f32.gmra.mrb[0].mxu0 %v2702
        %v2704 = vpop.f32.mrb[0].mxu0
        %v2705 = vadd.f32 %v2522, %v2704
        %v2706 = vpop.f32.mrb[0].mxu0
        %2707 = vmatprep.mubr.f32.mxu0 0.0
        %v2708 = vand.u32 %v1987, 4294901760
        %v2709 = vsub.f32 %v1987, %v2708
        %v2710 = vand.u32 %v2709, 4294901760
        %2711 = vmatmul.mubr.f32.gmra.mrb[0].mxu0 %v2710
        %v2712 = vpop.f32.mrb[0].mxu0
        %v2713 = vadd.f32 %v2529, %v2712
        %v2714 = vpop.f32.mrb[0].mxu0
        %2715 = vmatprep.mubr.f32.mxu0 0.0
        %v2716 = vand.u32 %v1990, 4294901760
        %v2717 = vsub.f32 %v1990, %v2716
        %v2718 = vand.u32 %v2717, 4294901760
        %2719 = vmatmul.mubr.f32.gmra.mrb[0].mxu0 %v2718
        %v2720 = vpop.f32.mrb[0].mxu0
        %v2721 = vadd.f32 %v2536, %v2720
        %v2722 = vpop.f32.mrb[0].mxu0
        %2723 = vmatprep.mubr.f32.mxu0 0.0
        %v2724 = vand.u32 %v1993, 4294901760
        %v2725 = vsub.f32 %v1993, %v2724
        %v2726 = vand.u32 %v2725, 4294901760
        %2727 = vmatmul.mubr.f32.gmra.mrb[0].mxu0 %v2726
        %v2728 = vpop.f32.mrb[0].mxu0
        %v2729 = vadd.f32 %v2543, %v2728
        %v2730 = vpop.f32.mrb[0].mxu0
        %2731 = vmatprep.mubr.f32.mxu0 0.0
        %v2732 = vand.u32 %v1996, 4294901760
        %v2733 = vsub.f32 %v1996, %v2732
        %v2734 = vand.u32 %v2733, 4294901760
        %2735 = vmatmul.mubr.f32.gmra.mrb[0].mxu0 %v2734
        %v2736 = vpop.f32.mrb[0].mxu0
        %v2737 = vadd.f32 %v2550, %v2736
        %v2738 = vpop.f32.mrb[0].mxu0
        %2739 = vmatprep.mubr.f32.mxu0 0.0
        %v2740 = vand.u32 %v1999, 4294901760
        %v2741 = vsub.f32 %v1999, %v2740
        %v2742 = vand.u32 %v2741, 4294901760
        %2743 = vmatmul.mubr.f32.gmra.mrb[0].mxu0 %v2742
        %v2744 = vpop.f32.mrb[0].mxu0
        %v2745 = vadd.f32 %v2557, %v2744
        %v2746 = vpop.f32.mrb[0].mxu0
        %2747 = vmatprep.mubr.f32.mxu0 0.0
        %v2748 = vand.u32 %v2002, 4294901760
        %v2749 = vsub.f32 %v2002, %v2748
        %v2750 = vand.u32 %v2749, 4294901760
        %2751 = vmatmul.mubr.f32.gmra.mrb[0].mxu0 %v2750
        %v2752 = vpop.f32.mrb[0].mxu0
        %v2753 = vadd.f32 %v2564, %v2752
        %v2754 = vpop.f32.mrb[0].mxu0
        %2755 = vmatprep.mubr.f32.mxu0 0.0
        %v2756 = vand.u32 %v2005, 4294901760
        %v2757 = vsub.f32 %v2005, %v2756
        %v2758 = vand.u32 %v2757, 4294901760
        %2759 = vmatmul.mubr.f32.gmra.mrb[0].mxu0 %v2758
        %v2760 = vpop.f32.mrb[0].mxu0
        %v2761 = vadd.f32 %v2571, %v2760
        %v2762 = vpop.f32.mrb[0].mxu0
        %2763 = vmatprep.mubr.f32.mxu0 0.0
        %v2764 = vand.u32 %v2008, 4294901760
        %v2765 = vsub.f32 %v2008, %v2764
        %v2766 = vand.u32 %v2765, 4294901760
        %2767 = vmatmul.mubr.f32.gmra.mrb[0].mxu0 %v2766
        %v2768 = vpop.f32.mrb[0].mxu0
        %v2769 = vadd.f32 %v2578, %v2768
        %v2770 = vpop.f32.mrb[0].mxu0
        %2771 = vmatprep.mubr.f32.mxu0 0.0
        %v2772 = vand.u32 %v2011, 4294901760
        %v2773 = vsub.f32 %v2011, %v2772
        %v2774 = vand.u32 %v2773, 4294901760
        %2775 = vmatmul.mubr.f32.gmra.mrb[0].mxu0 %v2774
        %v2776 = vpop.f32.mrb[0].mxu0
        %v2777 = vadd.f32 %v2585, %v2776
        %v2778 = vpop.f32.mrb[0].mxu0
        %2779 = vmatprep.mubr.f32.mxu0 0.0
        %v2780 = vand.u32 %v2014, 4294901760
        %v2781 = vsub.f32 %v2014, %v2780
        %v2782 = vand.u32 %v2781, 4294901760
        %2783 = vmatmul.mubr.f32.gmra.mrb[0].mxu0 %v2782
        %v2784 = vpop.f32.mrb[0].mxu0
        %v2785 = vadd.f32 %v2592, %v2784
        %v2786 = vpop.f32.mrb[0].mxu0
        %2787 = vmatprep.mubr.f32.mxu0 0.0
        %v2788 = vand.u32 %v2017, 4294901760
        %v2789 = vsub.f32 %v2017, %v2788
        %v2790 = vand.u32 %v2789, 4294901760
        %2791 = vmatmul.mubr.f32.gmra.mrb[0].mxu0 %v2790
        %v2792 = vpop.f32.mrb[0].mxu0
        %v2793 = vadd.f32 %v2599, %v2792
        %v2794 = vpop.f32.mrb[0].mxu0
        %2795 = vmatprep.mubr.f32.mxu0 0.0
        %v2796 = vand.u32 %v2020, 4294901760
        %v2797 = vsub.f32 %v2020, %v2796
        %v2798 = vand.u32 %v2797, 4294901760
        %2799 = vmatmul.mubr.f32.gmra.mrb[0].mxu0 %v2798
        %v2800 = vpop.f32.mrb[0].mxu0
        %v2801 = vadd.f32 %v2606, %v2800
        %v2802 = vpop.f32.mrb[0].mxu0
        %2803 = vmatprep.mubr.f32.mxu0 0.0
        %v2804 = vand.u32 %v2023, 4294901760
        %v2805 = vsub.f32 %v2023, %v2804
        %v2806 = vand.u32 %v2805, 4294901760
        %2807 = vmatmul.mubr.f32.gmra.mrb[0].mxu0 %v2806
        %v2808 = vpop.f32.mrb[0].mxu0
        %v2809 = vadd.f32 %v2613, %v2808
        %v2810 = vpop.f32.mrb[0].mxu0
        %2811 = vmatprep.mubr.f32.mxu0 0.0
        %v2812 = vand.u32 %v2026, 4294901760
        %v2813 = vsub.f32 %v2026, %v2812
        %v2814 = vand.u32 %v2813, 4294901760
        %2815 = vmatmul.mubr.f32.gmra.mrb[0].mxu0 %v2814
        %v2816 = vpop.f32.mrb[0].mxu0
        %v2817 = vadd.f32 %v2620, %v2816
        %v2818 = vpop.f32.mrb[0].mxu0
        %2819 = vdwg.mxu0
        %2820 = vmatprep.subr.mxu0 0.0
        %v2821 = vand.u32 %v1843, 4294901760
        %v2822 = vsub.f32 %v1843, %v2821
        %v2823 = vand.u32 %v2822, 4294901760
        %2824 = vmatpush1.msra.mxu0 %v2823
        %2825 = vmatprep.subr.mxu0 0.0
        %v2826 = vand.u32 %v1844, 4294901760
        %v2827 = vsub.f32 %v1844, %v2826
        %v2828 = vand.u32 %v2827, 4294901760
        %2829 = vmatpush1.msra.mxu0 %v2828
        %2830 = vmatprep.subr.mxu0 0.0
        %v2831 = vand.u32 %v1865, 4294901760
        %v2832 = vsub.f32 %v1865, %v2831
        %v2833 = vand.u32 %v2832, 4294901760
        %2834 = vmatpush1.msra.mxu0 %v2833
        %2835 = vmatprep.subr.mxu0 0.0
        %v2836 = vand.u32 %v1866, 4294901760
        %v2837 = vsub.f32 %v1866, %v2836
        %v2838 = vand.u32 %v2837, 4294901760
        %2839 = vmatpush1.msra.mxu0 %v2838
        %2840 = vmatprep.subr.mxu0 0.0
        %2841 = vmatpush1.msra.mxu0 0.0
        %2842 = vmatprep.subr.mxu0 0.0
        %2843 = vmatpush1.msra.mxu0 0.0
        %2844 = vmatprep.subr.mxu0 0.0
        %2845 = vmatpush1.msra.mxu0 0.0
        %2846 = vmatprep.subr.mxu0 0.0
        %2847 = vmatpush1.msra.mxu0 0.0
        %2848 = vmatprep.subr.mxu0 0.0
        %2849 = vmatpush1.msra.mxu0 0.0
        %2850 = vmatprep.subr.mxu0 0.0
        %2851 = vmatpush1.msra.mxu0 0.0
        %2852 = vmatprep.subr.mxu0 0.0
        %2853 = vmatpush1.msra.mxu0 0.0
        %2854 = vmatprep.subr.mxu0 0.0
        %2855 = vmatpush1.msra.mxu0 0.0
        %2856 = vmatprep.subr.mxu0 0.0
        %2857 = vmatpush1.msra.mxu0 0.0
        %2858 = vmatprep.subr.mxu0 0.0
        %2859 = vmatpush1.msra.mxu0 0.0
        %2860 = vmatprep.subr.mxu0 0.0
        %2861 = vmatpush1.msra.mxu0 0.0
        %2862 = vmatprep.subr.mxu0 0.0
        %2863 = vmatpush1.msra.mxu0 0.0
        %2864 = vmatprep.subr.mxu0 0.0
        %2865 = vmatpush1.msra.mxu0 0.0
        %2866 = vmatprep.subr.mxu0 0.0
        %2867 = vmatpush1.msra.mxu0 0.0
        %2868 = vmatprep.subr.mxu0 0.0
        %2869 = vmatpush1.msra.mxu0 0.0
        %2870 = vmatprep.subr.mxu0 0.0
        %2871 = vmatpush1.msra.mxu0 0.0
        %2872 = vmatprep.subr.mxu0 0.0
        %2873 = vmatpush1.msra.mxu0 0.0
        %2874 = vmatprep.subr.mxu0 0.0
        %2875 = vmatpush1.msra.mxu0 0.0
        %2876 = vmatprep.subr.mxu0 0.0
        %2877 = vmatpush1.msra.mxu0 0.0
        %2878 = vmatprep.subr.mxu0 0.0
        %2879 = vmatpush1.msra.mxu0 0.0
        %2880 = vmatprep.subr.mxu0 0.0
        %2881 = vmatpush1.msra.mxu0 0.0
        %2882 = vmatprep.subr.mxu0 0.0
        %2883 = vmatpush1.msra.mxu0 0.0
        %2884 = vmatprep.subr.mxu0 0.0
        %2885 = vmatpush1.msra.mxu0 0.0
        %2886 = vmatprep.subr.mxu0 0.0
        %2887 = vmatpush1.msra.mxu0 0.0
        %2888 = vmatprep.subr.mxu0 0.0
        %2889 = vmatpush1.msra.mxu0 0.0
        %2890 = vmatprep.subr.mxu0 0.0
        %2891 = vmatpush1.msra.mxu0 0.0
        %2892 = vmatprep.subr.mxu0 0.0
        %2893 = vmatpush1.msra.mxu0 0.0
        %2894 = vmatprep.subr.mxu0 0.0
        %2895 = vmatpush1.msra.mxu0 0.0
        %2896 = vmatprep.mubr.f32.mxu0 0.0
        %v2897 = vand.u32 %v1981, 4294901760
        %2898 = vmatmul.mubr.f32.gmra.mrb[0].mxu0 %v2897
        %v2899 = vpop.f32.mrb[0].mxu0
        %v2900 = vadd.f32 %v2697, %v2899
        %v2901 = vpop.f32.mrb[0].mxu0
        %2902 = vmatprep.mubr.f32.mxu0 0.0
        %v2903 = vand.u32 %v1984, 4294901760
        %2904 = vmatmul.mubr.f32.gmra.mrb[0].mxu0 %v2903
        %v2905 = vpop.f32.mrb[0].mxu0
        %v2906 = vadd.f32 %v2705, %v2905
        %v2907 = vpop.f32.mrb[0].mxu0
        %2908 = vmatprep.mubr.f32.mxu0 0.0
        %v2909 = vand.u32 %v1987, 4294901760
        %2910 = vmatmul.mubr.f32.gmra.mrb[0].mxu0 %v2909
        %v2911 = vpop.f32.mrb[0].mxu0
        %v2912 = vadd.f32 %v2713, %v2911
        %v2913 = vpop.f32.mrb[0].mxu0
        %2914 = vmatprep.mubr.f32.mxu0 0.0
        %v2915 = vand.u32 %v1990, 4294901760
        %2916 = vmatmul.mubr.f32.gmra.mrb[0].mxu0 %v2915
        %v2917 = vpop.f32.mrb[0].mxu0
        %v2918 = vadd.f32 %v2721, %v2917
        %v2919 = vpop.f32.mrb[0].mxu0
        %2920 = vmatprep.mubr.f32.mxu0 0.0
        %v2921 = vand.u32 %v1993, 4294901760
        %2922 = vmatmul.mubr.f32.gmra.mrb[0].mxu0 %v2921
        %v2923 = vpop.f32.mrb[0].mxu0
        %v2924 = vadd.f32 %v2729, %v2923
        %v2925 = vpop.f32.mrb[0].mxu0
        %2926 = vmatprep.mubr.f32.mxu0 0.0
        %v2927 = vand.u32 %v1996, 4294901760
        %2928 = vmatmul.mubr.f32.gmra.mrb[0].mxu0 %v2927
        %v2929 = vpop.f32.mrb[0].mxu0
        %v2930 = vadd.f32 %v2737, %v2929
        %v2931 = vpop.f32.mrb[0].mxu0
        %2932 = vmatprep.mubr.f32.mxu0 0.0
        %v2933 = vand.u32 %v1999, 4294901760
        %2934 = vmatmul.mubr.f32.gmra.mrb[0].mxu0 %v2933
        %v2935 = vpop.f32.mrb[0].mxu0
        %v2936 = vadd.f32 %v2745, %v2935
        %v2937 = vpop.f32.mrb[0].mxu0
        %2938 = vmatprep.mubr.f32.mxu0 0.0
        %v2939 = vand.u32 %v2002, 4294901760
        %2940 = vmatmul.mubr.f32.gmra.mrb[0].mxu0 %v2939
        %v2941 = vpop.f32.mrb[0].mxu0
        %v2942 = vadd.f32 %v2753, %v2941
        %v2943 = vpop.f32.mrb[0].mxu0
        %2944 = vmatprep.mubr.f32.mxu0 0.0
        %v2945 = vand.u32 %v2005, 4294901760
        %2946 = vmatmul.mubr.f32.gmra.mrb[0].mxu0 %v2945
        %v2947 = vpop.f32.mrb[0].mxu0
        %v2948 = vadd.f32 %v2761, %v2947
        %v2949 = vpop.f32.mrb[0].mxu0
        %2950 = vmatprep.mubr.f32.mxu0 0.0
        %v2951 = vand.u32 %v2008, 4294901760
        %2952 = vmatmul.mubr.f32.gmra.mrb[0].mxu0 %v2951
        %v2953 = vpop.f32.mrb[0].mxu0
        %v2954 = vadd.f32 %v2769, %v2953
        %v2955 = vpop.f32.mrb[0].mxu0
        %2956 = vmatprep.mubr.f32.mxu0 0.0
        %v2957 = vand.u32 %v2011, 4294901760
        %2958 = vmatmul.mubr.f32.gmra.mrb[0].mxu0 %v2957
        %v2959 = vpop.f32.mrb[0].mxu0
        %v2960 = vadd.f32 %v2777, %v2959
        %v2961 = vpop.f32.mrb[0].mxu0
        %2962 = vmatprep.mubr.f32.mxu0 0.0
        %v2963 = vand.u32 %v2014, 4294901760
        %2964 = vmatmul.mubr.f32.gmra.mrb[0].mxu0 %v2963
        %v2965 = vpop.f32.mrb[0].mxu0
        %v2966 = vadd.f32 %v2785, %v2965
        %v2967 = vpop.f32.mrb[0].mxu0
        %2968 = vmatprep.mubr.f32.mxu0 0.0
        %v2969 = vand.u32 %v2017, 4294901760
        %2970 = vmatmul.mubr.f32.gmra.mrb[0].mxu0 %v2969
        %v2971 = vpop.f32.mrb[0].mxu0
        %v2972 = vadd.f32 %v2793, %v2971
        %v2973 = vpop.f32.mrb[0].mxu0
        %2974 = vmatprep.mubr.f32.mxu0 0.0
        %v2975 = vand.u32 %v2020, 4294901760
        %2976 = vmatmul.mubr.f32.gmra.mrb[0].mxu0 %v2975
        %v2977 = vpop.f32.mrb[0].mxu0
        %v2978 = vadd.f32 %v2801, %v2977
        %v2979 = vpop.f32.mrb[0].mxu0
        %2980 = vmatprep.mubr.f32.mxu0 0.0
        %v2981 = vand.u32 %v2023, 4294901760
        %2982 = vmatmul.mubr.f32.gmra.mrb[0].mxu0 %v2981
        %v2983 = vpop.f32.mrb[0].mxu0
        %v2984 = vadd.f32 %v2809, %v2983
        %v2985 = vpop.f32.mrb[0].mxu0
        %2986 = vmatprep.mubr.f32.mxu0 0.0
        %v2987 = vand.u32 %v2026, 4294901760
        %2988 = vmatmul.mubr.f32.gmra.mrb[0].mxu0 %v2987
        %v2989 = vpop.f32.mrb[0].mxu0
        %v2990 = vadd.f32 %v2817, %v2989
        %v2991 = vpop.f32.mrb[0].mxu0
        %2992 = vdwg.mxu0
        %2993 = vmatprep.subr.mxu0 0.0
        %v2994 = vand.u32 %v1843, 4294901760
        %2995 = vmatpush1.msra.mxu0 %v2994
        %2996 = vmatprep.subr.mxu0 0.0
        %v2997 = vand.u32 %v1844, 4294901760
        %2998 = vmatpush1.msra.mxu0 %v2997
        %2999 = vmatprep.subr.mxu0 0.0
        %v3000 = vand.u32 %v1865, 4294901760
        %3001 = vmatpush1.msra.mxu0 %v3000
        %3002 = vmatprep.subr.mxu0 0.0
        %v3003 = vand.u32 %v1866, 4294901760
        %3004 = vmatpush1.msra.mxu0 %v3003
        %3005 = vmatprep.subr.mxu0 0.0
        %3006 = vmatpush1.msra.mxu0 0.0
        %3007 = vmatprep.subr.mxu0 0.0
        %3008 = vmatpush1.msra.mxu0 0.0
        %3009 = vmatprep.subr.mxu0 0.0
        %3010 = vmatpush1.msra.mxu0 0.0
        %3011 = vmatprep.subr.mxu0 0.0
        %3012 = vmatpush1.msra.mxu0 0.0
        %3013 = vmatprep.subr.mxu0 0.0
        %3014 = vmatpush1.msra.mxu0 0.0
        %3015 = vmatprep.subr.mxu0 0.0
        %3016 = vmatpush1.msra.mxu0 0.0
        %3017 = vmatprep.subr.mxu0 0.0
        %3018 = vmatpush1.msra.mxu0 0.0
        %3019 = vmatprep.subr.mxu0 0.0
        %3020 = vmatpush1.msra.mxu0 0.0
        %3021 = vmatprep.subr.mxu0 0.0
        %3022 = vmatpush1.msra.mxu0 0.0
        %3023 = vmatprep.subr.mxu0 0.0
        %3024 = vmatpush1.msra.mxu0 0.0
        %3025 = vmatprep.subr.mxu0 0.0
        %3026 = vmatpush1.msra.mxu0 0.0
        %3027 = vmatprep.subr.mxu0 0.0
        %3028 = vmatpush1.msra.mxu0 0.0
        %3029 = vmatprep.subr.mxu0 0.0
        %3030 = vmatpush1.msra.mxu0 0.0
        %3031 = vmatprep.subr.mxu0 0.0
        %3032 = vmatpush1.msra.mxu0 0.0
        %3033 = vmatprep.subr.mxu0 0.0
        %3034 = vmatpush1.msra.mxu0 0.0
        %3035 = vmatprep.subr.mxu0 0.0
        %3036 = vmatpush1.msra.mxu0 0.0
        %3037 = vmatprep.subr.mxu0 0.0
        %3038 = vmatpush1.msra.mxu0 0.0
        %3039 = vmatprep.subr.mxu0 0.0
        %3040 = vmatpush1.msra.mxu0 0.0
        %3041 = vmatprep.subr.mxu0 0.0
        %3042 = vmatpush1.msra.mxu0 0.0
        %3043 = vmatprep.subr.mxu0 0.0
        %3044 = vmatpush1.msra.mxu0 0.0
        %3045 = vmatprep.subr.mxu0 0.0
        %3046 = vmatpush1.msra.mxu0 0.0
        %3047 = vmatprep.subr.mxu0 0.0
        %3048 = vmatpush1.msra.mxu0 0.0
        %3049 = vmatprep.subr.mxu0 0.0
        %3050 = vmatpush1.msra.mxu0 0.0
        %3051 = vmatprep.subr.mxu0 0.0
        %3052 = vmatpush1.msra.mxu0 0.0
        %3053 = vmatprep.subr.mxu0 0.0
        %3054 = vmatpush1.msra.mxu0 0.0
        %3055 = vmatprep.subr.mxu0 0.0
        %3056 = vmatpush1.msra.mxu0 0.0
        %3057 = vmatprep.subr.mxu0 0.0
        %3058 = vmatpush1.msra.mxu0 0.0
        %3059 = vmatprep.subr.mxu0 0.0
        %3060 = vmatpush1.msra.mxu0 0.0
        %3061 = vmatprep.mubr.f32.mxu0 0.0
        %v3062 = vand.u32 %v1981, 4294901760
        %3063 = vmatmul.mubr.f32.gmra.mrb[0].mxu0 %v3062
        %v3064 = vpop.f32.mrb[0].mxu0
        %v3065 = vadd.f32 %v2900, %v3064
        %v3066 = vpop.f32.mrb[0].mxu0
        %3067 = vmatprep.mubr.f32.mxu0 0.0
        %v3068 = vand.u32 %v1984, 4294901760
        %3069 = vmatmul.mubr.f32.gmra.mrb[0].mxu0 %v3068
        %v3070 = vpop.f32.mrb[0].mxu0
        %v3071 = vadd.f32 %v2906, %v3070
        %v3072 = vpop.f32.mrb[0].mxu0
        %3073 = vmatprep.mubr.f32.mxu0 0.0
        %v3074 = vand.u32 %v1987, 4294901760
        %3075 = vmatmul.mubr.f32.gmra.mrb[0].mxu0 %v3074
        %v3076 = vpop.f32.mrb[0].mxu0
        %v3077 = vadd.f32 %v2912, %v3076
        %v3078 = vpop.f32.mrb[0].mxu0
        %3079 = vmatprep.mubr.f32.mxu0 0.0
        %v3080 = vand.u32 %v1990, 4294901760
        %3081 = vmatmul.mubr.f32.gmra.mrb[0].mxu0 %v3080
        %v3082 = vpop.f32.mrb[0].mxu0
        %v3083 = vadd.f32 %v2918, %v3082
        %v3084 = vpop.f32.mrb[0].mxu0
        %3085 = vmatprep.mubr.f32.mxu0 0.0
        %v3086 = vand.u32 %v1993, 4294901760
        %3087 = vmatmul.mubr.f32.gmra.mrb[0].mxu0 %v3086
        %v3088 = vpop.f32.mrb[0].mxu0
        %v3089 = vadd.f32 %v2924, %v3088
        %v3090 = vpop.f32.mrb[0].mxu0
        %3091 = vmatprep.mubr.f32.mxu0 0.0
        %v3092 = vand.u32 %v1996, 4294901760
        %3093 = vmatmul.mubr.f32.gmra.mrb[0].mxu0 %v3092
        %v3094 = vpop.f32.mrb[0].mxu0
        %v3095 = vadd.f32 %v2930, %v3094
        %v3096 = vpop.f32.mrb[0].mxu0
        %3097 = vmatprep.mubr.f32.mxu0 0.0
        %v3098 = vand.u32 %v1999, 4294901760
        %3099 = vmatmul.mubr.f32.gmra.mrb[0].mxu0 %v3098
        %v3100 = vpop.f32.mrb[0].mxu0
        %v3101 = vadd.f32 %v2936, %v3100
        %v3102 = vpop.f32.mrb[0].mxu0
        %3103 = vmatprep.mubr.f32.mxu0 0.0
        %v3104 = vand.u32 %v2002, 4294901760
        %3105 = vmatmul.mubr.f32.gmra.mrb[0].mxu0 %v3104
        %v3106 = vpop.f32.mrb[0].mxu0
        %v3107 = vadd.f32 %v2942, %v3106
        %v3108 = vpop.f32.mrb[0].mxu0
        %3109 = vmatprep.mubr.f32.mxu0 0.0
        %v3110 = vand.u32 %v2005, 4294901760
        %3111 = vmatmul.mubr.f32.gmra.mrb[0].mxu0 %v3110
        %v3112 = vpop.f32.mrb[0].mxu0
        %v3113 = vadd.f32 %v2948, %v3112
        %v3114 = vpop.f32.mrb[0].mxu0
        %3115 = vmatprep.mubr.f32.mxu0 0.0
        %v3116 = vand.u32 %v2008, 4294901760
        %3117 = vmatmul.mubr.f32.gmra.mrb[0].mxu0 %v3116
        %v3118 = vpop.f32.mrb[0].mxu0
        %v3119 = vadd.f32 %v2954, %v3118
        %v3120 = vpop.f32.mrb[0].mxu0
        %3121 = vmatprep.mubr.f32.mxu0 0.0
        %v3122 = vand.u32 %v2011, 4294901760
        %3123 = vmatmul.mubr.f32.gmra.mrb[0].mxu0 %v3122
        %v3124 = vpop.f32.mrb[0].mxu0
        %v3125 = vadd.f32 %v2960, %v3124
        %v3126 = vpop.f32.mrb[0].mxu0
        %3127 = vmatprep.mubr.f32.mxu0 0.0
        %v3128 = vand.u32 %v2014, 4294901760
        %3129 = vmatmul.mubr.f32.gmra.mrb[0].mxu0 %v3128
        %v3130 = vpop.f32.mrb[0].mxu0
        %v3131 = vadd.f32 %v2966, %v3130
        %v3132 = vpop.f32.mrb[0].mxu0
        %3133 = vmatprep.mubr.f32.mxu0 0.0
        %v3134 = vand.u32 %v2017, 4294901760
        %3135 = vmatmul.mubr.f32.gmra.mrb[0].mxu0 %v3134
        %v3136 = vpop.f32.mrb[0].mxu0
        %v3137 = vadd.f32 %v2972, %v3136
        %v3138 = vpop.f32.mrb[0].mxu0
        %3139 = vmatprep.mubr.f32.mxu0 0.0
        %v3140 = vand.u32 %v2020, 4294901760
        %3141 = vmatmul.mubr.f32.gmra.mrb[0].mxu0 %v3140
        %v3142 = vpop.f32.mrb[0].mxu0
        %v3143 = vadd.f32 %v2978, %v3142
        %v3144 = vpop.f32.mrb[0].mxu0
        %3145 = vmatprep.mubr.f32.mxu0 0.0
        %v3146 = vand.u32 %v2023, 4294901760
        %3147 = vmatmul.mubr.f32.gmra.mrb[0].mxu0 %v3146
        %v3148 = vpop.f32.mrb[0].mxu0
        %v3149 = vadd.f32 %v2984, %v3148
        %v3150 = vpop.f32.mrb[0].mxu0
        %3151 = vmatprep.mubr.f32.mxu0 0.0
        %v3152 = vand.u32 %v2026, 4294901760
        %3153 = vmatmul.mubr.f32.gmra.mrb[0].mxu0 %v3152
        %v3154 = vpop.f32.mrb[0].mxu0
        %v3155 = vadd.f32 %v2990, %v3154
        %v3156 = vpop.f32.mrb[0].mxu0
        %3157 = vdwg.mxu0
        %3158 = vst [vmem:[%s384] sm:$0xff] %v3065
        %3159 = vst [vmem:[%s384 + $0x8] sm:$0xff] %v3071
        %3160 = vst [vmem:[%s384 + $0x10] sm:$0xff] %v3077
        %3161 = vst [vmem:[%s384 + $0x18] sm:$0xff] %v3083
        %3162 = vst [vmem:[%s384 + $0x20] sm:$0xff] %v3089
        %3163 = vst [vmem:[%s384 + $0x28] sm:$0xff] %v3095
        %3164 = vst [vmem:[%s384 + $0x30] sm:$0xff] %v3101
        %3165 = vst [vmem:[%s384 + $0x38] sm:$0xff] %v3107
        %3166 = vst [vmem:[%s384 + $0x40] sm:$0xff] %v3113
        %3167 = vst [vmem:[%s384 + $0x48] sm:$0xff] %v3119
        %3168 = vst [vmem:[%s384 + $0x50] sm:$0xff] %v3125
        %3169 = vst [vmem:[%s384 + $0x58] sm:$0xff] %v3131
        %3170 = vst [vmem:[%s384 + $0x60] sm:$0xff] %v3137
        %3171 = vst [vmem:[%s384 + $0x68] sm:$0xff] %v3143
        %3172 = vst [vmem:[%s384 + $0x70] sm:$0xff] %v3149
        %3173 = vst [vmem:[%s384 + $0x78] sm:$0xff] %v3155
        %s3174 = sand.u32 %s163, 1
        %s3175 = sand.u32 %s163, 1
        %s3176 = smul.addr %s3175, 128
        %s3177 = scalar_lea.vmem [#allocation8], %s3176
        // Predicated region
        $region129: #{_net_forward.1} parent=111 // pred_check
          %p3178 = pneg %p173
        $region130: #{_net_forward.1} parent=111 // pred_check_branch
          %3180 = sbr.rel (%p3178) target = $region132
        $region131: #{_net_forward.1} parent=111 // pred_region
          %s3181 = smul.addr %s19, 8
          %s3182 = scalar_lea.vmem %s6, %s3181
          // Predicated region
          $region133: #{_net_forward.1} parent=131 // pred_check
            _
          $region134: #{_net_forward.1} parent=131 // pred_check_branch
            %3184 = sbr.rel (0) target = $region136
          $region135: #{_net_forward.1} parent=131 // pred_region
            // Predicated region
            $region137: #{_net_forward.1} parent=135 // pred_check
              _
            $region138: #{_net_forward.1} parent=135 // pred_check_branch
              %3186 = sbr.rel (0) target = $region140
            $region139: #{_net_forward.1} parent=135 // pred_region
              // Predicated region
              $region152: #{_net_forward.1} parent=139 // pred_check
                _
              $region153: #{_net_forward.1} parent=139 // pred_check_branch
                %3231 = sbr.rel (0) target = $region155
              $region154: #{_net_forward.1} parent=139 // pred_region
                loop: start=0, step=1, limit=1
                $region156: #{_net_forward.1} parent=154 // loop_pre_header
                  _
                $region157: #{_net_forward.1} parent=154 // loop_header
                  %s3233 = sphi 0, %s3237
                  %p3234 = scmp.ge.s32.totalorder %s3233, 1
                  %s3238 = sphi %s3177, %s3177
                  %s3239 = sphi %s3182, %s3182
                $region158: #{_net_forward.1} parent=154 // loop_header_branch
                  %3236 = sbr.rel (%p3234) target = $region162
                $region159: #{_net_forward.1} parent=154 // loop_body
                  %v3240 = vld [vmem:[%s3238] sm:$0xff]
                  %3241 = vst [vmem:[%s3239] sm:$0xff] %v3240
                  %v3242 = vld [vmem:[%s3238 + $0x8] sm:$0xff]
                  %3243 = vst [vmem:[%s3239 + $0x10] sm:$0xff] %v3242
                  %v3244 = vld [vmem:[%s3238 + $0x10] sm:$0xff]
                  %3245 = vst [vmem:[%s3239 + $0x20] sm:$0xff] %v3244
                  %v3246 = vld [vmem:[%s3238 + $0x18] sm:$0xff]
                  %3247 = vst [vmem:[%s3239 + $0x30] sm:$0xff] %v3246
                  %v3248 = vld [vmem:[%s3238 + $0x20] sm:$0xff]
                  %3249 = vst [vmem:[%s3239 + $0x40] sm:$0xff] %v3248
                  %v3250 = vld [vmem:[%s3238 + $0x28] sm:$0xff]
                  %3251 = vst [vmem:[%s3239 + $0x50] sm:$0xff] %v3250
                  %v3252 = vld [vmem:[%s3238 + $0x30] sm:$0xff]
                  %3253 = vst [vmem:[%s3239 + $0x60] sm:$0xff] %v3252
                  %v3254 = vld [vmem:[%s3238 + $0x38] sm:$0xff]
                  %3255 = vst [vmem:[%s3239 + $0x70] sm:$0xff] %v3254
                  %v3256 = vld [vmem:[%s3238 + $0x40] sm:$0xff]
                  %3257 = vst [vmem:[%s3239 + $0x80] sm:$0xff] %v3256
                  %v3258 = vld [vmem:[%s3238 + $0x48] sm:$0xff]
                  %3259 = vst [vmem:[%s3239 + $0x90] sm:$0xff] %v3258
                  %v3260 = vld [vmem:[%s3238 + $0x50] sm:$0xff]
                  %3261 = vst [vmem:[%s3239 + $0xa0] sm:$0xff] %v3260
                  %v3262 = vld [vmem:[%s3238 + $0x58] sm:$0xff]
                  %3263 = vst [vmem:[%s3239 + $0xb0] sm:$0xff] %v3262
                  %v3264 = vld [vmem:[%s3238 + $0x60] sm:$0xff]
                  %3265 = vst [vmem:[%s3239 + $0xc0] sm:$0xff] %v3264
                  %v3266 = vld [vmem:[%s3238 + $0x68] sm:$0xff]
                  %3267 = vst [vmem:[%s3239 + $0xd0] sm:$0xff] %v3266
                  %v3268 = vld [vmem:[%s3238 + $0x70] sm:$0xff]
                  %3269 = vst [vmem:[%s3239 + $0xe0] sm:$0xff] %v3268
                  %v3270 = vld [vmem:[%s3238 + $0x78] sm:$0xff]
                  %3271 = vst [vmem:[%s3239 + $0xf0] sm:$0xff] %v3270
                $region160: #{_net_forward.1} parent=154 // loop_footer
                  %s3237 = sadd.s32 1, %s3233
                $region161: #{_net_forward.1} parent=154 // loop_footer_branch
                  %3232 = sbr.rel target = $region157
                $region162: #{_net_forward.1} parent=154 // loop_exit
                  _
              $region155: #{_net_forward.1} parent=139 // pred_fallthru
                _
              // Predicated region
              $region163: #{_net_forward.1} parent=139 // pred_check
                _
              $region164: #{_net_forward.1} parent=139 // pred_check_branch
                %3273 = sbr.rel target = $region166
              $region165: #{_net_forward.1} parent=139 // pred_region
                _
              $region166: #{_net_forward.1} parent=139 // pred_fallthru
                _
            $region140: #{_net_forward.1} parent=135 // pred_fallthru
              _
            // Predicated region
            $region141: #{_net_forward.1} parent=135 // pred_check
              _
            $region142: #{_net_forward.1} parent=135 // pred_check_branch
              %3188 = sbr.rel target = $region144
            $region143: #{_net_forward.1} parent=135 // pred_region
              loop: start=0, step=1, limit=1
              $region145: #{_net_forward.1} parent=143 // loop_pre_header
                _
              $region146: #{_net_forward.1} parent=143 // loop_header
                %s3191 = sphi 0, %s3195
                %p3192 = scmp.ge.s32.totalorder %s3191, 1
                %s3196 = sphi %s3177, %s3177
                %s3197 = sphi %s3182, %s3182
              $region147: #{_net_forward.1} parent=143 // loop_header_branch
                %3194 = sbr.rel (%p3192) target = $region151
              $region148: #{_net_forward.1} parent=143 // loop_body
                %v3198 = vld [vmem:[%s3196] sm:$0xff]
                %3199 = vst [vmem:[%s3197] sm:$0xff] %v3198
                %v3200 = vld [vmem:[%s3196 + $0x8] sm:$0xff]
                %3201 = vst [vmem:[%s3197 + $0x10] sm:$0xff] %v3200
                %v3202 = vld [vmem:[%s3196 + $0x10] sm:$0xff]
                %3203 = vst [vmem:[%s3197 + $0x20] sm:$0xff] %v3202
                %v3204 = vld [vmem:[%s3196 + $0x18] sm:$0xff]
                %3205 = vst [vmem:[%s3197 + $0x30] sm:$0xff] %v3204
                %v3206 = vld [vmem:[%s3196 + $0x20] sm:$0xff]
                %3207 = vst [vmem:[%s3197 + $0x40] sm:$0xff] %v3206
                %v3208 = vld [vmem:[%s3196 + $0x28] sm:$0xff]
                %3209 = vst [vmem:[%s3197 + $0x50] sm:$0xff] %v3208
                %v3210 = vld [vmem:[%s3196 + $0x30] sm:$0xff]
                %3211 = vst [vmem:[%s3197 + $0x60] sm:$0xff] %v3210
                %v3212 = vld [vmem:[%s3196 + $0x38] sm:$0xff]
                %3213 = vst [vmem:[%s3197 + $0x70] sm:$0xff] %v3212
                %v3214 = vld [vmem:[%s3196 + $0x40] sm:$0xff]
                %3215 = vst [vmem:[%s3197 + $0x80] sm:$0xff] %v3214
                %v3216 = vld [vmem:[%s3196 + $0x48] sm:$0xff]
                %3217 = vst [vmem:[%s3197 + $0x90] sm:$0xff] %v3216
                %v3218 = vld [vmem:[%s3196 + $0x50] sm:$0xff]
                %3219 = vst [vmem:[%s3197 + $0xa0] sm:$0xff] %v3218
                %v3220 = vld [vmem:[%s3196 + $0x58] sm:$0xff]
                %3221 = vst [vmem:[%s3197 + $0xb0] sm:$0xff] %v3220
                %v3222 = vld [vmem:[%s3196 + $0x60] sm:$0xff]
                %3223 = vst [vmem:[%s3197 + $0xc0] sm:$0xff] %v3222
                %v3224 = vld [vmem:[%s3196 + $0x68] sm:$0xff]
                %3225 = vst [vmem:[%s3197 + $0xd0] sm:$0xff] %v3224
                %v3226 = vld [vmem:[%s3196 + $0x70] sm:$0xff]
                %3227 = vst [vmem:[%s3197 + $0xe0] sm:$0xff] %v3226
                %v3228 = vld [vmem:[%s3196 + $0x78] sm:$0xff]
                %3229 = vst [vmem:[%s3197 + $0xf0] sm:$0xff] %v3228
              $region149: #{_net_forward.1} parent=143 // loop_footer
                %s3195 = sadd.s32 1, %s3191
              $region150: #{_net_forward.1} parent=143 // loop_footer_branch
                %3190 = sbr.rel target = $region146
              $region151: #{_net_forward.1} parent=143 // loop_exit
                _
            $region144: #{_net_forward.1} parent=135 // pred_fallthru
              _
          $region136: #{_net_forward.1} parent=131 // pred_fallthru
            _
          %3274 = vnop
        $region132: #{_net_forward.1} parent=111 // pred_fallthru
          _
      $region112: #{_net_forward.1} parent=5 // pred_fallthru
        _
      %p3275 = scmp.le.s32.totalorder 2, %s14
      // Predicated region
      $region167: #{_net_forward.1} parent=5 // pred_check
        %p3276 = pneg %p3275
      $region168: #{_net_forward.1} parent=5 // pred_check_branch
        %3278 = sbr.rel (%p3276) target = $region170
      $region169: #{_net_forward.1} parent=5 // pred_region
        %s3279 = ssub.s32 %s14, 2
        // Predicated region
        $region171: #{_net_forward.1} parent=169 // pred_check
          %p3280 = pneg %p179
        $region172: #{_net_forward.1} parent=169 // pred_check_branch
          %3282 = sbr.rel (%p3280) target = $region174
        $region173: #{_net_forward.1} parent=169 // pred_region
          %s3283 = sand.u32 %s164, 1
          %s3284 = sand.u32 %s164, 1
          %s3285 = smul.addr %s3284, 128
          %s3286 = scalar_lea.vmem [#allocation8], %s3285
        $region174: #{_net_forward.1} parent=169 // pred_fallthru
          _
      $region170: #{_net_forward.1} parent=5 // pred_fallthru
        _
    $region6: #{_net_forward.1} parent=1 // loop_footer
      %s18 = sadd.s32 1, %s14
    $region7: #{_net_forward.1} parent=1 // loop_footer_branch
      %13 = sbr.rel target = $region3
    $region8: #{_net_forward.1} parent=1 // loop_exit
      _
    %3287 = vsyncpa [#allocation5], 1
    %s3288 = scalar_lea.sflag [#allocation5], 1
    %3289 = vsyncpa %s3288, 1
    %3290 = vsyncpa [#allocation7], 1

</llo_original>
